<compile_context>
chip_gen: v7x
topology: tpu7x:2x2x1
jax: 0.10.0
libtpu: 0.0.40
codegen_flags: <defaults>
</compile_context>

<pallas_src>
import functools
import math

import jax
import jax.numpy as jnp
from jax.experimental import pallas as pl
from jax.experimental.pallas import tpu as pltpu


# ----------------------------------------------------------------------------
# generation-aware sizing helpers
# ----------------------------------------------------------------------------
@functools.lru_cache(maxsize=1)
def _vmem_capacity_bytes():
    try:
        return int(pltpu.get_tpu_info().vmem_capacity_bytes)
    except Exception:
        return 64 << 20   # conservative fallback (v7x per-core VMEM)


def _vmem_limit(estimate_bytes):
    """Scoped-VMEM request: 2x the per-step buffer estimate + headroom,
    floored at 32 MiB, capped per generation (40 MiB on 64 MiB parts such as
    v7x, 96 MiB on 128 MiB parts such as v5e/v6e)."""
    phys = _vmem_capacity_bytes()
    cap = (40 << 20) if phys <= (64 << 20) else (96 << 20)
    return int(min(max(2 * estimate_bytes + (4 << 20), 32 << 20), cap))


def _default_linear_tiles():
    if _vmem_capacity_bytes() > (96 << 20):   # 128 MiB VMEM (v5e / v6e)
        return 512, 512, 1024                 # tm, tn, tk
    return 256, 256, 512                       # 64 MiB VMEM (v7x)


def _default_seq_tile():
    return 512 if _vmem_capacity_bytes() > (96 << 20) else 256


# ----------------------------------------------------------------------------
# tiling / padding helpers
# ----------------------------------------------------------------------------
def _round_up(x, m):
    return -(-x // m) * m


def _tile_and_pad(dim, target, align):
    """Block size <= target for `dim`, plus the (possibly padded) extent.
    Prefers (a) the full dim if it fits, (b) the largest aligned divisor,
    (c) an aligned tile with zero padding up to a multiple of it."""
    if dim <= target:
        return dim, dim                       # single full block: always legal
    t = (target // align) * align
    while t >= align:
        if dim % t == 0:
            return t, dim
        t -= align
    tile = max(align, (target // align) * align)
    return tile, _round_up(dim, tile)


def _pad_axis(a, axis, new_size):
    old = a.shape[axis]
    if old == new_size:
        return a
    pads = [(0, 0)] * a.ndim
    pads[axis] = (0, new_size - old)
    return jnp.pad(a, pads)


# ----------------------------------------------------------------------------
# Linear kernel: y = x @ W + b, K-tiled with an f32 accumulator
# ----------------------------------------------------------------------------
def _linear_kernel(x_ref, w_ref, b_ref, o_ref, acc_ref):
    k = pl.program_id(2)

    @pl.when(k == 0)
    def _():
        acc_ref[...] = jnp.zeros_like(acc_ref)

    a = x_ref[...]
    w_tile = w_ref[...]
    if a.dtype != w_tile.dtype:               # tile-wise cast (no extra HBM pass)
        a = a.astype(w_tile.dtype)
    acc_ref[...] += jnp.dot(a, w_tile, preferred_element_type=jnp.float32)

    @pl.when(k == pl.num_programs(2) - 1)
    def _():
        o_ref[...] = (acc_ref[...] + b_ref[...]).astype(o_ref.dtype)


def pallas_linear(x, w, b, *, out_dtype=None, tm=None, tn=None, tk=None):
    """x: (M, K), w: (K, N), b: (N,) -> (M, N).  MXU operands run in w.dtype
    (x tiles are cast in-kernel); accumulation is f32."""
    M, K = x.shape
    K2, N = w.shape
    assert K == K2 and b.shape == (N,)
    if out_dtype is None:
        out_dtype = x.dtype
    dtm, dtn, dtk = _default_linear_tiles()
    tm = tm or dtm
    tn = tn or dtn
    tk = tk or dtk

    tm, Mp = _tile_and_pad(M, tm, 128)
    tn, Np = _tile_and_pad(N, tn, 128)
    tk, Kp = _tile_and_pad(K, tk, 128)

    xp = _pad_axis(_pad_axis(x, 0, Mp), 1, Kp)
    wp = _pad_axis(_pad_axis(w, 0, Kp), 1, Np)
    bp = _pad_axis(b.astype(jnp.float32), 0, Np).reshape(1, Np)

    grid = (Mp // tm, Np // tn, Kp // tk)
    est = (2 * tm * tk * x.dtype.itemsize          # double-buffered x tiles
           + 2 * tk * tn * w.dtype.itemsize        # double-buffered w tiles
           + 2 * tn * 4                            # bias
           + 2 * tm * tn * jnp.dtype(out_dtype).itemsize
           + tm * tn * 4)                          # f32 accumulator

    out = pl.pallas_call(
        _linear_kernel,
        out_shape=jax.ShapeDtypeStruct((Mp, Np), out_dtype),
        grid=grid,
        in_specs=[
            pl.BlockSpec((tm, tk), lambda i, j, k: (i, k)),
            pl.BlockSpec((tk, tn), lambda i, j, k: (k, j)),
            pl.BlockSpec((1, tn), lambda i, j, k: (0, j)),
        ],
        out_specs=pl.BlockSpec((tm, tn), lambda i, j, k: (i, j)),
        scratch_shapes=[pltpu.VMEM((tm, tn), jnp.float32)],
        compiler_params=pltpu.CompilerParams(
            dimension_semantics=("parallel", "parallel", "arbitrary"),
            vmem_limit_bytes=_vmem_limit(est),
        ),
    )(xp, wp, bp)
    if (Mp, Np) != (M, N):
        out = out[:M, :N]
    return out


# ----------------------------------------------------------------------------
# Flash-style causal attention over fused, head-packed qkv.
#   qkv: (B, T, 3C) = [q | k | v], heads packed along C, 1/sqrt(dh) already
#   folded into q (see prepare_params).  out: (B, T, C), same head packing.
# ----------------------------------------------------------------------------
def _flash_attention_kernel(q_ref, k_ref, v_ref, o_ref, m_sc, l_sc, acc_sc,
                            *, n_head, dh, approx_recip):
    qi = pl.program_id(1)
    ki = pl.program_id(2)

    @pl.when(ki == 0)
    def _init():
        m_sc[...] = jnp.full_like(m_sc, -jnp.inf)
        l_sc[...] = jnp.zeros_like(l_sc)
        acc_sc[...] = jnp.zeros_like(acc_sc)

    def process(masked):
        tq = q_ref.shape[1]
        tkv = k_ref.shape[1]
        # Dense, lane-aligned loads of the full head-packed tiles (avoids
        # per-head masked VMEM accesses at sub-128-lane offsets).
        q_all = q_ref[0]                 # (tq, C); scale folded into q
        k_all = k_ref[0]                 # (tkv, C)
        v_all = v_ref[0]                 # (tkv, C)
        m_prev = m_sc[...]               # (tq, n_head) f32
        l_prev = l_sc[...]
        acc_prev = acc_sc[...]           # (tq, C) f32

        if masked:                       # only the diagonal block (tq == tkv)
            row = jax.lax.broadcasted_iota(jnp.int32, (tq, tkv), 0)
            col = jax.lax.broadcasted_iota(jnp.int32, (tq, tkv), 1)
            causal = col <= row

        acc_cols = []
        # NOTE: static loop over heads; for very large n_head a fori_loop with
        # pl.ds head slices would bound live ranges further.
        for h in range(n_head):
            sl = slice(h * dh, (h + 1) * dh)
            # q @ k^T with the transpose fused into the contraction
            s = jax.lax.dot_general(
                q_all[:, sl], k_all[:, sl], (((1,), (1,)), ((), ())),
                preferred_element_type=jnp.float32)          # (tq, tkv) f32
            if masked:
                s = jnp.where(causal, s, -jnp.inf)
            m_prev_h = m_prev[:, h:h + 1]
            m_new_h = jnp.maximum(m_prev_h, jnp.max(s, axis=-1, keepdims=True))
            alpha_h = jnp.exp(m_prev_h - m_new_h)
            p = jnp.exp(s - m_new_h)
            l_new_h = alpha_h * l_prev[:, h:h + 1] + jnp.sum(
                p, axis=-1, keepdims=True)
            pv_h = jnp.dot(p.astype(v_all.dtype), v_all[:, sl],
                           preferred_element_type=jnp.float32)  # (tq, dh)
            acc_cols.append(alpha_h * acc_prev[:, sl] + pv_h)
            m_sc[:, h:h + 1] = m_new_h
            l_sc[:, h:h + 1] = l_new_h
        # One lane-dense store of the full-C f32 accumulator.
        acc_sc[...] = jnp.concatenate(acc_cols, axis=1)

    @pl.when(ki < qi)   # strictly below the diagonal: no mask needed
    def _interior():
        process(masked=False)

    @pl.when(ki == qi)  # diagonal block: causal mask via iota compare
    def _diag():
        process(masked=True)

    # kv blocks with ki > qi are fully masked: no compute; their kv index_map
    # is clamped to the diagonal block, so no new DMA either.

    @pl.when(ki == pl.num_programs(2) - 1)
    def _finalize():
        acc = acc_sc[...]
        l = l_sc[...]
        cols = []
        for h in range(n_head):
            inv = pl.reciprocal(l[:, h:h + 1], approx=approx_recip)
            cols.append(acc[:, h * dh:(h + 1) * dh] * inv)
        # single lane-dense (tq, C) output store
        o_ref[0] = jnp.concatenate(cols, axis=1).astype(o_ref.dtype)


def pallas_flash_attention(qkv, n_head, *, out_dtype=None, seq_tile=None):
    B, T, C3 = qkv.shape
    assert C3 % 3 == 0
    C = C3 // 3
    assert C % n_head == 0
    dh = C // n_head
    if out_dtype is None:
        out_dtype = qkv.dtype
    if seq_tile is None:
        seq_tile = _default_seq_tile()

    tq, Tp = _tile_and_pad(T, seq_tile, 128)
    tkv = tq
    if Tp != T:
        # Zero-padded rows: padded kv columns are always above the causal
        # diagonal for real query rows, padded query rows are sliced off.
        qkv = _pad_axis(qkv, 1, Tp)
    nq = Tp // tq
    nk = Tp // tkv

    approx = jnp.dtype(qkv.dtype) == jnp.dtype(jnp.bfloat16)
    kernel = functools.partial(_flash_attention_kernel, n_head=n_head, dh=dh,
                               approx_recip=approx)

    if C % 128 == 0:
        # Consume the fused qkv directly: three views of the SAME HBM array,
        # selected via the last-dim block index (no jnp.split copies).
        q_arr = k_arr = v_arr = qkv
        q_blk, k_blk, v_blk = 0, 1, 2
    else:
        # NOTE: lane-misaligned C (<128-multiple) falls back to a split,
        # costing ~2 extra HBM passes over the qkv activation.
        q_arr, k_arr, v_arr = jnp.split(qkv, 3, axis=-1)
        q_blk = k_blk = v_blk = 0

    q_spec = pl.BlockSpec((1, tq, C), lambda b, qi, ki: (b, qi, q_blk))
    # Clamp fully-masked kv blocks to the diagonal block -> no new DMA.
    k_spec = pl.BlockSpec((1, tkv, C),
                          lambda b, qi, ki: (b, jnp.minimum(ki, qi), k_blk))
    v_spec = pl.BlockSpec((1, tkv, C),
                          lambda b, qi, ki: (b, jnp.minimum(ki, qi), v_blk))
    o_spec = pl.BlockSpec((1, tq, C), lambda b, qi, ki: (b, qi, 0))

    in_item = jnp.dtype(qkv.dtype).itemsize
    est = (2 * 3 * tq * C * in_item                       # q, k, v tiles (2x buf)
           + 2 * tq * C * jnp.dtype(out_dtype).itemsize   # output tile (2x buf)
           + tq * C * 4                                   # f32 accumulator
           + 2 * tq * max(n_head, 128) * 4                # m, l scratch
           + 6 * tq * tkv * 4)                            # s/p temporaries

    out = pl.pallas_call(
        kernel,
        out_shape=jax.ShapeDtypeStruct((B, Tp, C), out_dtype),
        grid=(B, nq, nk),
        in_specs=[q_spec, k_spec, v_spec],
        out_specs=o_spec,
        scratch_shapes=[
            pltpu.VMEM((tq, n_head), jnp.float32),   # running row max per head
            pltpu.VMEM((tq, n_head), jnp.float32),   # running denominator
            pltpu.VMEM((tq, C), jnp.float32),        # f32 output accumulator
        ],
        compiler_params=pltpu.CompilerParams(
            # Batch leads the parallel axes (best megacore balance on v7x:
            # the causal qi axis is work-skewed, the batch axis is not).
            dimension_semantics=("parallel", "parallel", "arbitrary"),
            vmem_limit_bytes=_vmem_limit(est),
        ),
    )(q_arr, k_arr, v_arr)
    if Tp != T:
        out = out[:, :T, :]
    return out


# ----------------------------------------------------------------------------
# Module forward + one-time parameter preparation
# ----------------------------------------------------------------------------
def prepare_params(params, n_head, compute_dtype=jnp.bfloat16):
    """One-time transform (keep OUT of the per-step path):
      * fold 1/sqrt(head_dim) into the q columns of c_attn (weight + bias),
      * cast weights to the MXU compute dtype once,
      * keep biases in f32 (added to the f32 accumulator)."""
    C = params["w_proj"].shape[0]
    assert C % n_head == 0
    scale = 1.0 / math.sqrt(C // n_head)
    col_scale = jnp.concatenate(
        [jnp.full((C,), scale, jnp.float32), jnp.ones((2 * C,), jnp.float32)])
    w_attn = params["w_attn"].astype(jnp.float32) * col_scale[None, :]
    b_attn = params["b_attn"].astype(jnp.float32) * col_scale
    return {
        "w_attn": w_attn.astype(compute_dtype),
        "b_attn": b_attn,
        "w_proj": params["w_proj"].astype(compute_dtype),
        "b_proj": params["b_proj"].astype(jnp.float32),
    }


def causal_self_attention(x, params, n_head):
    """x: (B, T, C) -> (B, T, C).  `params` must come from prepare_params
    (weights pre-cast, attention scale folded into the q columns)."""
    B, T, C = x.shape
    # c_attn (fused qkv projection)
    qkv = pallas_linear(x.reshape(B * T, C), params["w_attn"], params["b_attn"],
                        out_dtype=params["w_attn"].dtype)
    qkv = qkv.reshape(B, T, 3 * C)
    # causal flash attention directly on the fused, head-packed qkv
    y = pallas_flash_attention(qkv, n_head)            # (B, T, C)
    # c_proj
    out = pallas_linear(y.reshape(B * T, C), params["w_proj"], params["b_proj"],
                        out_dtype=x.dtype)
    return out.reshape(B, T, C)


def init_params(key, n_embd):
    """Deterministic init; nn.Linear-shaped weights stored pre-transposed."""
    k1, k2, k3, k4 = jax.random.split(key, 4)
    bound = 1.0 / math.sqrt(n_embd)
    return {
        "w_attn": jax.random.uniform(k1, (n_embd, 3 * n_embd), jnp.float32, -bound, bound),
        "b_attn": jax.random.uniform(k2, (3 * n_embd,), jnp.float32, -bound, bound),
        "w_proj": jax.random.uniform(k3, (n_embd, n_embd), jnp.float32, -bound, bound),
        "b_proj": jax.random.uniform(k4, (n_embd,), jnp.float32, -bound, bound),
    }


def reference_forward(x, params, n_head):
    """Pure-JAX reference (raw, unscaled params) for correctness checking."""
    B, T, C = x.shape
    Dh = C // n_head
    qkv = x @ params["w_attn"] + params["b_attn"]
    q, k, v = jnp.split(qkv, 3, axis=-1)
    q = q.reshape(B, T, n_head, Dh).transpose(0, 2, 1, 3)
    k = k.reshape(B, T, n_head, Dh).transpose(0, 2, 1, 3)
    v = v.reshape(B, T, n_head, Dh).transpose(0, 2, 1, 3)
    s = jnp.einsum("bhqd,bhkd->bhqk", q, k) / math.sqrt(Dh)
    mask = jnp.tril(jnp.ones((T, T), dtype=bool))
    s = jnp.where(mask, s, -jnp.inf)
    p = jax.nn.softmax(s, axis=-1)
    y = jnp.einsum("bhqk,bhkd->bhqd", p, v)
    y = y.transpose(0, 2, 1, 3).reshape(B, T, C)
    return y @ params["w_proj"] + params["b_proj"]


if __name__ == "__main__":
    # Small GPT-style config.  C=128 keeps the fused-qkv path lane-aligned.
    B, T, C, n_head = 2, 16, 128, 4

    key = jax.random.PRNGKey(0)
    kx, kp = jax.random.split(key)
    x = jax.random.normal(kx, (B, T, C), dtype=jnp.float32)
    raw = init_params(kp, C)

    fwd = jax.jit(causal_self_attention, static_argnames=("n_head",))
    ref = reference_forward(x, raw, n_head)

    # f32 path: tight check
    p32 = prepare_params(raw, n_head, compute_dtype=jnp.float32)
    out_f32 = jax.block_until_ready(fwd(x, p32, n_head=n_head))
    assert out_f32.shape == (B, T, C)
    assert jnp.allclose(out_f32, ref, atol=2e-2, rtol=2e-2), "f32 mismatch vs reference"

    # bf16 fast path (MXU-native weights, f32 accumulation): loose sanity check
    pbf = prepare_params(raw, n_head, compute_dtype=jnp.bfloat16)
    out_bf16 = jax.block_until_ready(fwd(x, pbf, n_head=n_head))
    assert out_bf16.shape == (B, T, C)
    err = float(jnp.max(jnp.abs(out_bf16.astype(jnp.float32) - ref)))
    assert err < 0.25, f"bf16 mismatch vs reference: {err}"

    print("KERNEL_OK")
</pallas_src>

<mosaic_0001>
module attributes {stable_mosaic.version = 11 : i64} {
  func.func @_linear_kernel(%arg0: i32, %arg1: i32, %arg2: i32, %arg3: memref<32x128xf32, #tpu.memory_space<vmem>>, %arg4: memref<128x128xf32, #tpu.memory_space<vmem>>, %arg5: memref<1x128xf32, #tpu.memory_space<vmem>>, %arg6: memref<32x128xf32, #tpu.memory_space<vmem>>, %arg7: memref<32x128xf32, #tpu.memory_space<vmem>>) attributes {dimension_semantics = [#tpu.dimension_semantics<parallel>, #tpu.dimension_semantics<parallel>, #tpu.dimension_semantics<arbitrary>], iteration_bounds = array<i64: 1, 1, 1>, scalar_prefetch = 0 : i64, scratch_operands = 1 : i64, tpu.core_type = #tpu.core_type<tc>, window_params = [{transform_indices = @transform_0, window_bounds = array<i64: 32, 128>}, {transform_indices = @transform_1, window_bounds = array<i64: 128, 128>}, {transform_indices = @transform_2, window_bounds = array<i64: 1, 128>}, {transform_indices = @transform_3, window_bounds = array<i64: 32, 128>}]} {
    %c0_i32 = arith.constant 0 : i32
    %0 = arith.cmpi eq, %arg2, %c0_i32 : i32
    %1 = arith.extui %0 : i1 to i32
    %c0_i32_0 = arith.constant 0 : i32
    %2 = arith.cmpi ne, %1, %c0_i32_0 : i32
    scf.if %2 {
      %cst_10 = arith.constant 0.000000e+00 : f32
      %12 = vector.broadcast %cst_10 : f32 to vector<32x128xf32>
      %c0_11 = arith.constant 0 : index
      %c0_12 = arith.constant 0 : index
      %13 = vector.load %arg7[%c0_11, %c0_12] : memref<32x128xf32, #tpu.memory_space<vmem>>, vector<32x128xf32>
      tpu.vector_store %arg7[%c0_11, %c0_12], %12 {strides = array<i32>} : memref<32x128xf32, #tpu.memory_space<vmem>>, vector<32x128xf32>,
    } else {
    }
    %c0 = arith.constant 0 : index
    %c0_1 = arith.constant 0 : index
    %3 = vector.load %arg3[%c0, %c0_1] : memref<32x128xf32, #tpu.memory_space<vmem>>, vector<32x128xf32>
    %c0_2 = arith.constant 0 : index
    %c0_3 = arith.constant 0 : index
    %4 = vector.load %arg4[%c0_2, %c0_3] : memref<128x128xf32, #tpu.memory_space<vmem>>, vector<128x128xf32>
    %c0_4 = arith.constant 0 : index
    %c0_5 = arith.constant 0 : index
    %5 = vector.load %arg7[%c0_4, %c0_5] : memref<32x128xf32, #tpu.memory_space<vmem>>, vector<32x128xf32>
    %cst = arith.constant dense<0.000000e+00> : vector<32x128xf32>
    %6 = tpu.matmul %3, %4, %cst {dimension_numbers = #tpu.dot_dimension_numbers<[1], [0], [0], [1], [0, 0, 1, 1], [], []>} : vector<32x128xf32>, vector<128x128xf32>, vector<32x128xf32> -> vector<32x128xf32>
    %7 = arith.addf %5, %6 : vector<32x128xf32>
    %c0_6 = arith.constant 0 : index
    %c0_7 = arith.constant 0 : index
    %8 = vector.load %arg7[%c0_6, %c0_7] : memref<32x128xf32, #tpu.memory_space<vmem>>, vector<32x128xf32>
    tpu.vector_store %arg7[%c0_6, %c0_7], %7 {strides = array<i32>} : memref<32x128xf32, #tpu.memory_space<vmem>>, vector<32x128xf32>,
    %c0_i32_8 = arith.constant 0 : i32
    %9 = arith.cmpi eq, %arg2, %c0_i32_8 : i32
    %10 = arith.extui %9 : i1 to i32
    %c0_i32_9 = arith.constant 0 : i32
    %11 = arith.cmpi ne, %10, %c0_i32_9 : i32
    scf.if %11 {
      %c0_10 = arith.constant 0 : index
      %c0_11 = arith.constant 0 : index
      %12 = vector.load %arg7[%c0_10, %c0_11] : memref<32x128xf32, #tpu.memory_space<vmem>>, vector<32x128xf32>
      %c0_12 = arith.constant 0 : index
      %c0_13 = arith.constant 0 : index
      %13 = vector.load %arg5[%c0_12, %c0_13] : memref<1x128xf32, #tpu.memory_space<vmem>>, vector<1x128xf32>
      %14 = vector.broadcast %13 : vector<1x128xf32> to vector<32x128xf32>
      %15 = arith.addf %12, %14 : vector<32x128xf32>
      %c0_14 = arith.constant 0 : index
      %c0_15 = arith.constant 0 : index
      %16 = vector.load %arg6[%c0_14, %c0_15] : memref<32x128xf32, #tpu.memory_space<vmem>>, vector<32x128xf32>
      tpu.vector_store %arg6[%c0_14, %c0_15], %15 {strides = array<i32>} : memref<32x128xf32, #tpu.memory_space<vmem>>, vector<32x128xf32>,
    } else {
    }
    return
  }
  func.func @transform_0(%arg0: i32, %arg1: i32, %arg2: i32) -> (i32, i32) {
    %c0_i32 = arith.constant 0 : i32
    return %arg0, %arg2 : i32, i32
  }
  func.func @transform_1(%arg0: i32, %arg1: i32, %arg2: i32) -> (i32, i32) {
    %c0_i32 = arith.constant 0 : i32
    return %arg2, %arg1 : i32, i32
  }
  func.func @transform_2(%arg0: i32, %arg1: i32, %arg2: i32) -> (i32, i32) {
    %c0_i32 = arith.constant 0 : i32
    %c0_i32_0 = arith.constant 0 : i32
    return %c0_i32, %arg1 : i32, i32
  }
  func.func @transform_3(%arg0: i32, %arg1: i32, %arg2: i32) -> (i32, i32) {
    %c0_i32 = arith.constant 0 : i32
    return %arg0, %arg1 : i32, i32
  }
}

module attributes {stable_mosaic.version = 11 : i64} {
  func.func @_linear_kernel(%arg0: i32, %arg1: i32, %arg2: i32, %arg3: memref<32x128xf32, #tpu.memory_space<vmem>>, %arg4: memref<128x128xf32, #tpu.memory_space<vmem>>, %arg5: memref<1x128xf32, #tpu.memory_space<vmem>>, %arg6: memref<32x128xf32, #tpu.memory_space<vmem>>, %arg7: memref<32x128xf32, #tpu.memory_space<vmem>>) attributes {dimension_semantics = [#tpu.dimension_semantics<parallel>, #tpu.dimension_semantics<parallel>, #tpu.dimension_semantics<arbitrary>], iteration_bounds = array<i64: 1, 3, 1>, scalar_prefetch = 0 : i64, scratch_operands = 1 : i64, tpu.core_type = #tpu.core_type<tc>, window_params = [{transform_indices = @transform_0, window_bounds = array<i64: 32, 128>}, {transform_indices = @transform_1, window_bounds = array<i64: 128, 128>}, {transform_indices = @transform_2, window_bounds = array<i64: 1, 128>}, {transform_indices = @transform_3, window_bounds = array<i64: 32, 128>}]} {
    %c0_i32 = arith.constant 0 : i32
    %0 = arith.cmpi eq, %arg2, %c0_i32 : i32
    %1 = arith.extui %0 : i1 to i32
    %c0_i32_0 = arith.constant 0 : i32
    %2 = arith.cmpi ne, %1, %c0_i32_0 : i32
    scf.if %2 {
      %cst_10 = arith.constant 0.000000e+00 : f32
      %12 = vector.broadcast %cst_10 : f32 to vector<32x128xf32>
      %c0_11 = arith.constant 0 : index
      %c0_12 = arith.constant 0 : index
      %13 = vector.load %arg7[%c0_11, %c0_12] : memref<32x128xf32, #tpu.memory_space<vmem>>, vector<32x128xf32>
      tpu.vector_store %arg7[%c0_11, %c0_12], %12 {strides = array<i32>} : memref<32x128xf32, #tpu.memory_space<vmem>>, vector<32x128xf32>,
    } else {
    }
    %c0 = arith.constant 0 : index
    %c0_1 = arith.constant 0 : index
    %3 = vector.load %arg3[%c0, %c0_1] : memref<32x128xf32, #tpu.memory_space<vmem>>, vector<32x128xf32>
    %c0_2 = arith.constant 0 : index
    %c0_3 = arith.constant 0 : index
    %4 = vector.load %arg4[%c0_2, %c0_3] : memref<128x128xf32, #tpu.memory_space<vmem>>, vector<128x128xf32>
    %c0_4 = arith.constant 0 : index
    %c0_5 = arith.constant 0 : index
    %5 = vector.load %arg7[%c0_4, %c0_5] : memref<32x128xf32, #tpu.memory_space<vmem>>, vector<32x128xf32>
    %cst = arith.constant dense<0.000000e+00> : vector<32x128xf32>
    %6 = tpu.matmul %3, %4, %cst {dimension_numbers = #tpu.dot_dimension_numbers<[1], [0], [0], [1], [0, 0, 1, 1], [], []>} : vector<32x128xf32>, vector<128x128xf32>, vector<32x128xf32> -> vector<32x128xf32>
    %7 = arith.addf %5, %6 : vector<32x128xf32>
    %c0_6 = arith.constant 0 : index
    %c0_7 = arith.constant 0 : index
    %8 = vector.load %arg7[%c0_6, %c0_7] : memref<32x128xf32, #tpu.memory_space<vmem>>, vector<32x128xf32>
    tpu.vector_store %arg7[%c0_6, %c0_7], %7 {strides = array<i32>} : memref<32x128xf32, #tpu.memory_space<vmem>>, vector<32x128xf32>,
    %c0_i32_8 = arith.constant 0 : i32
    %9 = arith.cmpi eq, %arg2, %c0_i32_8 : i32
    %10 = arith.extui %9 : i1 to i32
    %c0_i32_9 = arith.constant 0 : i32
    %11 = arith.cmpi ne, %10, %c0_i32_9 : i32
    scf.if %11 {
      %c0_10 = arith.constant 0 : index
      %c0_11 = arith.constant 0 : index
      %12 = vector.load %arg7[%c0_10, %c0_11] : memref<32x128xf32, #tpu.memory_space<vmem>>, vector<32x128xf32>
      %c0_12 = arith.constant 0 : index
      %c0_13 = arith.constant 0 : index
      %13 = vector.load %arg5[%c0_12, %c0_13] : memref<1x128xf32, #tpu.memory_space<vmem>>, vector<1x128xf32>
      %14 = vector.broadcast %13 : vector<1x128xf32> to vector<32x128xf32>
      %15 = arith.addf %12, %14 : vector<32x128xf32>
      %c0_14 = arith.constant 0 : index
      %c0_15 = arith.constant 0 : index
      %16 = vector.load %arg6[%c0_14, %c0_15] : memref<32x128xf32, #tpu.memory_space<vmem>>, vector<32x128xf32>
      tpu.vector_store %arg6[%c0_14, %c0_15], %15 {strides = array<i32>} : memref<32x128xf32, #tpu.memory_space<vmem>>, vector<32x128xf32>,
    } else {
    }
    return
  }
  func.func @transform_0(%arg0: i32, %arg1: i32, %arg2: i32) -> (i32, i32) {
    %c0_i32 = arith.constant 0 : i32
    return %arg0, %arg2 : i32, i32
  }
  func.func @transform_1(%arg0: i32, %arg1: i32, %arg2: i32) -> (i32, i32) {
    %c0_i32 = arith.constant 0 : i32
    return %arg2, %arg1 : i32, i32
  }
  func.func @transform_2(%arg0: i32, %arg1: i32, %arg2: i32) -> (i32, i32) {
    %c0_i32 = arith.constant 0 : i32
    %c0_i32_0 = arith.constant 0 : i32
    return %c0_i32, %arg1 : i32, i32
  }
  func.func @transform_3(%arg0: i32, %arg1: i32, %arg2: i32) -> (i32, i32) {
    %c0_i32 = arith.constant 0 : i32
    return %arg0, %arg1 : i32, i32
  }
}

module attributes {stable_mosaic.version = 11 : i64} {
  func.func @_flash_attention_kernel(%arg0: i32, %arg1: i32, %arg2: i32, %arg3: memref<1x16x128xf32, #tpu.memory_space<vmem>>, %arg4: memref<1x16x128xf32, #tpu.memory_space<vmem>>, %arg5: memref<1x16x128xf32, #tpu.memory_space<vmem>>, %arg6: memref<1x16x128xf32, #tpu.memory_space<vmem>>, %arg7: memref<16x4xf32, #tpu.memory_space<vmem>>, %arg8: memref<16x4xf32, #tpu.memory_space<vmem>>, %arg9: memref<16x128xf32, #tpu.memory_space<vmem>>) attributes {dimension_semantics = [#tpu.dimension_semantics<parallel>, #tpu.dimension_semantics<parallel>, #tpu.dimension_semantics<arbitrary>], iteration_bounds = array<i64: 2, 1, 1>, scalar_prefetch = 0 : i64, scratch_operands = 3 : i64, tpu.core_type = #tpu.core_type<tc>, window_params = [{transform_indices = @transform_0, window_bounds = array<i64: 1, 16, 128>}, {transform_indices = @transform_1, window_bounds = array<i64: 1, 16, 128>}, {transform_indices = @transform_2, window_bounds = array<i64: 1, 16, 128>}, {transform_indices = @transform_3, window_bounds = array<i64: 1, 16, 128>}]} {
    %c0_i32 = arith.constant 0 : i32
    %0 = arith.cmpi eq, %arg2, %c0_i32 : i32
    %1 = arith.extui %0 : i1 to i32
    %c0_i32_0 = arith.constant 0 : i32
    %2 = arith.cmpi ne, %1, %c0_i32_0 : i32
    scf.if %2 {
      %cst = arith.constant 0xFF800000 : f32
      %12 = vector.broadcast %cst : f32 to vector<16x4xf32>
      %c0 = arith.constant 0 : index
      %c0_5 = arith.constant 0 : index
      %13 = vector.load %arg7[%c0, %c0_5] : memref<16x4xf32, #tpu.memory_space<vmem>>, vector<16x4xf32>
      tpu.vector_store %arg7[%c0, %c0_5], %12 {strides = array<i32>} : memref<16x4xf32, #tpu.memory_space<vmem>>, vector<16x4xf32>,
      %cst_6 = arith.constant 0.000000e+00 : f32
      %14 = vector.broadcast %cst_6 : f32 to vector<16x4xf32>
      %c0_7 = arith.constant 0 : index
      %c0_8 = arith.constant 0 : index
      %15 = vector.load %arg8[%c0_7, %c0_8] : memref<16x4xf32, #tpu.memory_space<vmem>>, vector<16x4xf32>
      tpu.vector_store %arg8[%c0_7, %c0_8], %14 {strides = array<i32>} : memref<16x4xf32, #tpu.memory_space<vmem>>, vector<16x4xf32>,
      %cst_9 = arith.constant 0.000000e+00 : f32
      %16 = vector.broadcast %cst_9 : f32 to vector<16x128xf32>
      %c0_10 = arith.constant 0 : index
      %c0_11 = arith.constant 0 : index
      %17 = vector.load %arg9[%c0_10, %c0_11] : memref<16x128xf32, #tpu.memory_space<vmem>>, vector<16x128xf32>
      tpu.vector_store %arg9[%c0_10, %c0_11], %16 {strides = array<i32>} : memref<16x128xf32, #tpu.memory_space<vmem>>, vector<16x128xf32>,
    } else {
    }
    %3 = arith.cmpi slt, %arg2, %arg1 : i32
    %4 = arith.extui %3 : i1 to i32
    %c0_i32_1 = arith.constant 0 : i32
    %5 = arith.cmpi ne, %4, %c0_i32_1 : i32
    scf.if %5 {
      %c0 = arith.constant 0 : index
      %c0_5 = arith.constant 0 : index
      %c0_6 = arith.constant 0 : index
      %12 = vector.load %arg3[%c0, %c0_5, %c0_6] : memref<1x16x128xf32, #tpu.memory_space<vmem>>, vector<1x16x128xf32>
      %13 = vector.shape_cast %12 : vector<1x16x128xf32> to vector<16x128xf32>
      %c0_7 = arith.constant 0 : index
      %c0_8 = arith.constant 0 : index
      %c0_9 = arith.constant 0 : index
      %14 = vector.load %arg4[%c0_7, %c0_8, %c0_9] : memref<1x16x128xf32, #tpu.memory_space<vmem>>, vector<1x16x128xf32>
      %15 = vector.shape_cast %14 : vector<1x16x128xf32> to vector<16x128xf32>
      %c0_10 = arith.constant 0 : index
      %c0_11 = arith.constant 0 : index
      %c0_12 = arith.constant 0 : index
      %16 = vector.load %arg5[%c0_10, %c0_11, %c0_12] : memref<1x16x128xf32, #tpu.memory_space<vmem>>, vector<1x16x128xf32>
      %17 = vector.shape_cast %16 : vector<1x16x128xf32> to vector<16x128xf32>
      %c0_13 = arith.constant 0 : index
      %c0_14 = arith.constant 0 : index
      %18 = vector.load %arg7[%c0_13, %c0_14] : memref<16x4xf32, #tpu.memory_space<vmem>>, vector<16x4xf32>
      %c0_15 = arith.constant 0 : index
      %c0_16 = arith.constant 0 : index
      %19 = vector.load %arg8[%c0_15, %c0_16] : memref<16x4xf32, #tpu.memory_space<vmem>>, vector<16x4xf32>
      %c0_17 = arith.constant 0 : index
      %c0_18 = arith.constant 0 : index
      %20 = vector.load %arg9[%c0_17, %c0_18] : memref<16x128xf32, #tpu.memory_space<vmem>>, vector<16x128xf32>
      %21 = vector.extract_strided_slice %13 {offsets = [0, 0], sizes = [16, 32], strides = [1, 1]} : vector<16x128xf32> to vector<16x32xf32>
      %22 = vector.extract_strided_slice %15 {offsets = [0, 0], sizes = [16, 32], strides = [1, 1]} : vector<16x128xf32> to vector<16x32xf32>
      %cst = arith.constant dense<0.000000e+00> : vector<16x16xf32>
      %23 = tpu.matmul %21, %22, %cst {dimension_numbers = #tpu.dot_dimension_numbers<[1], [1], [0], [0], [0, 0, 1, 0], [], []>} : vector<16x32xf32>, vector<16x32xf32>, vector<16x16xf32> -> vector<16x16xf32>
      %24 = vector.extract_strided_slice %18 {offsets = [0, 0], sizes = [16, 1], strides = [1, 1]} : vector<16x4xf32> to vector<16x1xf32>
      %cst_19 = arith.constant dense<0xFF800000> : vector<16xf32>
      %25 = vector.multi_reduction <maximumf>, %23, %cst_19 [1] : vector<16x16xf32> to vector<16xf32>
      %26 = vector.shape_cast %25 : vector<16xf32> to vector<16x1xf32>
      %27 = arith.maximumf %24, %26 : vector<16x1xf32>
      %28 = arith.subf %24, %27 : vector<16x1xf32>
      %29 = math.exp %28 : vector<16x1xf32>
      %30 = vector.broadcast %27 : vector<16x1xf32> to vector<16x16xf32>
      %31 = arith.subf %23, %30 : vector<16x16xf32>
      %32 = math.exp %31 : vector<16x16xf32>
      %33 = vector.extract_strided_slice %19 {offsets = [0, 0], sizes = [16, 1], strides = [1, 1]} : vector<16x4xf32> to vector<16x1xf32>
      %34 = arith.mulf %29, %33 : vector<16x1xf32>
      %cst_20 = arith.constant dense<0.000000e+00> : vector<16xf32>
      %35 = vector.multi_reduction <add>, %32, %cst_20 [1] : vector<16x16xf32> to vector<16xf32>
      %36 = vector.shape_cast %35 : vector<16xf32> to vector<16x1xf32>
      %37 = arith.addf %34, %36 : vector<16x1xf32>
      %38 = vector.extract_strided_slice %17 {offsets = [0, 0], sizes = [16, 32], strides = [1, 1]} : vector<16x128xf32> to vector<16x32xf32>
      %cst_21 = arith.constant dense<0.000000e+00> : vector<16x32xf32>
      %39 = tpu.matmul %32, %38, %cst_21 {dimension_numbers = #tpu.dot_dimension_numbers<[1], [0], [0], [1], [0, 0, 1, 1], [], []>} : vector<16x16xf32>, vector<16x32xf32>, vector<16x32xf32> -> vector<16x32xf32>
      %40 = vector.extract_strided_slice %20 {offsets = [0, 0], sizes = [16, 32], strides = [1, 1]} : vector<16x128xf32> to vector<16x32xf32>
      %41 = vector.broadcast %29 : vector<16x1xf32> to vector<16x32xf32>
      %42 = arith.mulf %41, %40 : vector<16x32xf32>
      %43 = arith.addf %42, %39 : vector<16x32xf32>
      %c0_22 = arith.constant 0 : index
      %c0_23 = arith.constant 0 : index
      %44 = vector.load %arg7[%c0_22, %c0_23] : memref<16x4xf32, #tpu.memory_space<vmem>>, vector<16x1xf32>
      tpu.vector_store %arg7[%c0_22, %c0_23], %27 {strides = array<i32>} : memref<16x4xf32, #tpu.memory_space<vmem>>, vector<16x1xf32>,
      %c0_24 = arith.constant 0 : index
      %c0_25 = arith.constant 0 : index
      %45 = vector.load %arg8[%c0_24, %c0_25] : memref<16x4xf32, #tpu.memory_space<vmem>>, vector<16x1xf32>
      tpu.vector_store %arg8[%c0_24, %c0_25], %37 {strides = array<i32>} : memref<16x4xf32, #tpu.memory_space<vmem>>, vector<16x1xf32>,
      %46 = vector.extract_strided_slice %13 {offsets = [0, 32], sizes = [16, 32], strides = [1, 1]} : vector<16x128xf32> to vector<16x32xf32>
      %47 = vector.extract_strided_slice %15 {offsets = [0, 32], sizes = [16, 32], strides = [1, 1]} : vector<16x128xf32> to vector<16x32xf32>
      %cst_26 = arith.constant dense<0.000000e+00> : vector<16x16xf32>
      %48 = tpu.matmul %46, %47, %cst_26 {dimension_numbers = #tpu.dot_dimension_numbers<[1], [1], [0], [0], [0, 0, 1, 0], [], []>} : vector<16x32xf32>, vector<16x32xf32>, vector<16x16xf32> -> vector<16x16xf32>
      %49 = vector.extract_strided_slice %18 {offsets = [0, 1], sizes = [16, 1], strides = [1, 1]} : vector<16x4xf32> to vector<16x1xf32>
      %cst_27 = arith.constant dense<0xFF800000> : vector<16xf32>
      %50 = vector.multi_reduction <maximumf>, %48, %cst_27 [1] : vector<16x16xf32> to vector<16xf32>
      %51 = vector.shape_cast %50 : vector<16xf32> to vector<16x1xf32>
      %52 = arith.maximumf %49, %51 : vector<16x1xf32>
      %53 = arith.subf %49, %52 : vector<16x1xf32>
      %54 = math.exp %53 : vector<16x1xf32>
      %55 = vector.broadcast %52 : vector<16x1xf32> to vector<16x16xf32>
      %56 = arith.subf %48, %55 : vector<16x16xf32>
      %57 = math.exp %56 : vector<16x16xf32>
      %58 = vector.extract_strided_slice %19 {offsets = [0, 1], sizes = [16, 1], strides = [1, 1]} : vector<16x4xf32> to vector<16x1xf32>
      %59 = arith.mulf %54, %58 : vector<16x1xf32>
      %cst_28 = arith.constant dense<0.000000e+00> : vector<16xf32>
      %60 = vector.multi_reduction <add>, %57, %cst_28 [1] : vector<16x16xf32> to vector<16xf32>
      %61 = vector.shape_cast %60 : vector<16xf32> to vector<16x1xf32>
      %62 = arith.addf %59, %61 : vector<16x1xf32>
      %63 = vector.extract_strided_slice %17 {offsets = [0, 32], sizes = [16, 32], strides = [1, 1]} : vector<16x128xf32> to vector<16x32xf32>
      %cst_29 = arith.constant dense<0.000000e+00> : vector<16x32xf32>
      %64 = tpu.matmul %57, %63, %cst_29 {dimension_numbers = #tpu.dot_dimension_numbers<[1], [0], [0], [1], [0, 0, 1, 1], [], []>} : vector<16x16xf32>, vector<16x32xf32>, vector<16x32xf32> -> vector<16x32xf32>
      %65 = vector.extract_strided_slice %20 {offsets = [0, 32], sizes = [16, 32], strides = [1, 1]} : vector<16x128xf32> to vector<16x32xf32>
      %66 = vector.broadcast %54 : vector<16x1xf32> to vector<16x32xf32>
      %67 = arith.mulf %66, %65 : vector<16x32xf32>
      %68 = arith.addf %67, %64 : vector<16x32xf32>
      %c0_30 = arith.constant 0 : index
      %c1 = arith.constant 1 : index
      %69 = vector.load %arg7[%c0_30, %c1] : memref<16x4xf32, #tpu.memory_space<vmem>>, vector<16x1xf32>
      tpu.vector_store %arg7[%c0_30, %c1], %52 {strides = array<i32>} : memref<16x4xf32, #tpu.memory_space<vmem>>, vector<16x1xf32>,
      %c0_31 = arith.constant 0 : index
      %c1_32 = arith.constant 1 : index
      %70 = vector.load %arg8[%c0_31, %c1_32] : memref<16x4xf32, #tpu.memory_space<vmem>>, vector<16x1xf32>
      tpu.vector_store %arg8[%c0_31, %c1_32], %62 {strides = array<i32>} : memref<16x4xf32, #tpu.memory_space<vmem>>, vector<16x1xf32>,
      %71 = vector.extract_strided_slice %13 {offsets = [0, 64], sizes = [16, 32], strides = [1, 1]} : vector<16x128xf32> to vector<16x32xf32>
      %72 = vector.extract_strided_slice %15 {offsets = [0, 64], sizes = [16, 32], strides = [1, 1]} : vector<16x128xf32> to vector<16x32xf32>
      %cst_33 = arith.constant dense<0.000000e+00> : vector<16x16xf32>
      %73 = tpu.matmul %71, %72, %cst_33 {dimension_numbers = #tpu.dot_dimension_numbers<[1], [1], [0], [0], [0, 0, 1, 0], [], []>} : vector<16x32xf32>, vector<16x32xf32>, vector<16x16xf32> -> vector<16x16xf32>
      %74 = vector.extract_strided_slice %18 {offsets = [0, 2], sizes = [16, 1], strides = [1, 1]} : vector<16x4xf32> to vector<16x1xf32>
      %cst_34 = arith.constant dense<0xFF800000> : vector<16xf32>
      %75 = vector.multi_reduction <maximumf>, %73, %cst_34 [1] : vector<16x16xf32> to vector<16xf32>
      %76 = vector.shape_cast %75 : vector<16xf32> to vector<16x1xf32>
      %77 = arith.maximumf %74, %76 : vector<16x1xf32>
      %78 = arith.subf %74, %77 : vector<16x1xf32>
      %79 = math.exp %78 : vector<16x1xf32>
      %80 = vector.broadcast %77 : vector<16x1xf32> to vector<16x16xf32>
      %81 = arith.subf %73, %80 : vector<16x16xf32>
      %82 = math.exp %81 : vector<16x16xf32>
      %83 = vector.extract_strided_slice %19 {offsets = [0, 2], sizes = [16, 1], strides = [1, 1]} : vector<16x4xf32> to vector<16x1xf32>
      %84 = arith.mulf %79, %83 : vector<16x1xf32>
      %cst_35 = arith.constant dense<0.000000e+00> : vector<16xf32>
      %85 = vector.multi_reduction <add>, %82, %cst_35 [1] : vector<16x16xf32> to vector<16xf32>
      %86 = vector.shape_cast %85 : vector<16xf32> to vector<16x1xf32>
      %87 = arith.addf %84, %86 : vector<16x1xf32>
      %88 = vector.extract_strided_slice %17 {offsets = [0, 64], sizes = [16, 32], strides = [1, 1]} : vector<16x128xf32> to vector<16x32xf32>
      %cst_36 = arith.constant dense<0.000000e+00> : vector<16x32xf32>
      %89 = tpu.matmul %82, %88, %cst_36 {dimension_numbers = #tpu.dot_dimension_numbers<[1], [0], [0], [1], [0, 0, 1, 1], [], []>} : vector<16x16xf32>, vector<16x32xf32>, vector<16x32xf32> -> vector<16x32xf32>
      %90 = vector.extract_strided_slice %20 {offsets = [0, 64], sizes = [16, 32], strides = [1, 1]} : vector<16x128xf32> to vector<16x32xf32>
      %91 = vector.broadcast %79 : vector<16x1xf32> to vector<16x32xf32>
      %92 = arith.mulf %91, %90 : vector<16x32xf32>
      %93 = arith.addf %92, %89 : vector<16x32xf32>
      %c0_37 = arith.constant 0 : index
      %c2 = arith.constant 2 : index
      %94 = vector.load %arg7[%c0_37, %c2] : memref<16x4xf32, #tpu.memory_space<vmem>>, vector<16x1xf32>
      tpu.vector_store %arg7[%c0_37, %c2], %77 {strides = array<i32>} : memref<16x4xf32, #tpu.memory_space<vmem>>, vector<16x1xf32>,
      %c0_38 = arith.constant 0 : index
      %c2_39 = arith.constant 2 : index
      %95 = vector.load %arg8[%c0_38, %c2_39] : memref<16x4xf32, #tpu.memory_space<vmem>>, vector<16x1xf32>
      tpu.vector_store %arg8[%c0_38, %c2_39], %87 {strides = array<i32>} : memref<16x4xf32, #tpu.memory_space<vmem>>, vector<16x1xf32>,
      %96 = vector.extract_strided_slice %13 {offsets = [0, 96], sizes = [16, 32], strides = [1, 1]} : vector<16x128xf32> to vector<16x32xf32>
      %97 = vector.extract_strided_slice %15 {offsets = [0, 96], sizes = [16, 32], strides = [1, 1]} : vector<16x128xf32> to vector<16x32xf32>
      %cst_40 = arith.constant dense<0.000000e+00> : vector<16x16xf32>
      %98 = tpu.matmul %96, %97, %cst_40 {dimension_numbers = #tpu.dot_dimension_numbers<[1], [1], [0], [0], [0, 0, 1, 0], [], []>} : vector<16x32xf32>, vector<16x32xf32>, vector<16x16xf32> -> vector<16x16xf32>
      %99 = vector.extract_strided_slice %18 {offsets = [0, 3], sizes = [16, 1], strides = [1, 1]} : vector<16x4xf32> to vector<16x1xf32>
      %cst_41 = arith.constant dense<0xFF800000> : vector<16xf32>
      %100 = vector.multi_reduction <maximumf>, %98, %cst_41 [1] : vector<16x16xf32> to vector<16xf32>
      %101 = vector.shape_cast %100 : vector<16xf32> to vector<16x1xf32>
      %102 = arith.maximumf %99, %101 : vector<16x1xf32>
      %103 = arith.subf %99, %102 : vector<16x1xf32>
      %104 = math.exp %103 : vector<16x1xf32>
      %105 = vector.broadcast %102 : vector<16x1xf32> to vector<16x16xf32>
      %106 = arith.subf %98, %105 : vector<16x16xf32>
      %107 = math.exp %106 : vector<16x16xf32>
      %108 = vector.extract_strided_slice %19 {offsets = [0, 3], sizes = [16, 1], strides = [1, 1]} : vector<16x4xf32> to vector<16x1xf32>
      %109 = arith.mulf %104, %108 : vector<16x1xf32>
      %cst_42 = arith.constant dense<0.000000e+00> : vector<16xf32>
      %110 = vector.multi_reduction <add>, %107, %cst_42 [1] : vector<16x16xf32> to vector<16xf32>
      %111 = vector.shape_cast %110 : vector<16xf32> to vector<16x1xf32>
      %112 = arith.addf %109, %111 : vector<16x1xf32>
      %113 = vector.extract_strided_slice %17 {offsets = [0, 96], sizes = [16, 32], strides = [1, 1]} : vector<16x128xf32> to vector<16x32xf32>
      %cst_43 = arith.constant dense<0.000000e+00> : vector<16x32xf32>
      %114 = tpu.matmul %107, %113, %cst_43 {dimension_numbers = #tpu.dot_dimension_numbers<[1], [0], [0], [1], [0, 0, 1, 1], [], []>} : vector<16x16xf32>, vector<16x32xf32>, vector<16x32xf32> -> vector<16x32xf32>
      %115 = vector.extract_strided_slice %20 {offsets = [0, 96], sizes = [16, 32], strides = [1, 1]} : vector<16x128xf32> to vector<16x32xf32>
      %116 = vector.broadcast %104 : vector<16x1xf32> to vector<16x32xf32>
      %117 = arith.mulf %116, %115 : vector<16x32xf32>
      %118 = arith.addf %117, %114 : vector<16x32xf32>
      %c0_44 = arith.constant 0 : index
      %c3 = arith.constant 3 : index
      %119 = vector.load %arg7[%c0_44, %c3] : memref<16x4xf32, #tpu.memory_space<vmem>>, vector<16x1xf32>
      tpu.vector_store %arg7[%c0_44, %c3], %102 {strides = array<i32>} : memref<16x4xf32, #tpu.memory_space<vmem>>, vector<16x1xf32>,
      %c0_45 = arith.constant 0 : index
      %c3_46 = arith.constant 3 : index
      %120 = vector.load %arg8[%c0_45, %c3_46] : memref<16x4xf32, #tpu.memory_space<vmem>>, vector<16x1xf32>
      tpu.vector_store %arg8[%c0_45, %c3_46], %112 {strides = array<i32>} : memref<16x4xf32, #tpu.memory_space<vmem>>, vector<16x1xf32>,
      %121 = tpu.concatenate %43, %68, %93, %118 in 1 : vector<16x32xf32>, vector<16x32xf32>, vector<16x32xf32>, vector<16x32xf32> -> vector<16x128xf32>
      %c0_47 = arith.constant 0 : index
      %c0_48 = arith.constant 0 : index
      %122 = vector.load %arg9[%c0_47, %c0_48] : memref<16x128xf32, #tpu.memory_space<vmem>>, vector<16x128xf32>
      tpu.vector_store %arg9[%c0_47, %c0_48], %121 {strides = array<i32>} : memref<16x128xf32, #tpu.memory_space<vmem>>, vector<16x128xf32>,
    } else {
    }
    %6 = arith.cmpi eq, %arg2, %arg1 : i32
    %7 = arith.extui %6 : i1 to i32
    %c0_i32_2 = arith.constant 0 : i32
    %8 = arith.cmpi ne, %7, %c0_i32_2 : i32
    scf.if %8 {
      %c0 = arith.constant 0 : index
      %c0_5 = arith.constant 0 : index
      %c0_6 = arith.constant 0 : index
      %12 = vector.load %arg3[%c0, %c0_5, %c0_6] : memref<1x16x128xf32, #tpu.memory_space<vmem>>, vector<1x16x128xf32>
      %13 = vector.shape_cast %12 : vector<1x16x128xf32> to vector<16x128xf32>
      %c0_7 = arith.constant 0 : index
      %c0_8 = arith.constant 0 : index
      %c0_9 = arith.constant 0 : index
      %14 = vector.load %arg4[%c0_7, %c0_8, %c0_9] : memref<1x16x128xf32, #tpu.memory_space<vmem>>, vector<1x16x128xf32>
      %15 = vector.shape_cast %14 : vector<1x16x128xf32> to vector<16x128xf32>
      %c0_10 = arith.constant 0 : index
      %c0_11 = arith.constant 0 : index
      %c0_12 = arith.constant 0 : index
      %16 = vector.load %arg5[%c0_10, %c0_11, %c0_12] : memref<1x16x128xf32, #tpu.memory_space<vmem>>, vector<1x16x128xf32>
      %17 = vector.shape_cast %16 : vector<1x16x128xf32> to vector<16x128xf32>
      %c0_13 = arith.constant 0 : index
      %c0_14 = arith.constant 0 : index
      %18 = vector.load %arg7[%c0_13, %c0_14] : memref<16x4xf32, #tpu.memory_space<vmem>>, vector<16x4xf32>
      %c0_15 = arith.constant 0 : index
      %c0_16 = arith.constant 0 : index
      %19 = vector.load %arg8[%c0_15, %c0_16] : memref<16x4xf32, #tpu.memory_space<vmem>>, vector<16x4xf32>
      %c0_17 = arith.constant 0 : index
      %c0_18 = arith.constant 0 : index
      %20 = vector.load %arg9[%c0_17, %c0_18] : memref<16x128xf32, #tpu.memory_space<vmem>>, vector<16x128xf32>
      %21 = tpu.iota {dimensions = array<i32: 0>} : vector<16x16xi32>
      %22 = tpu.iota {dimensions = array<i32: 1>} : vector<16x16xi32>
      %23 = arith.cmpi sle, %22, %21 : vector<16x16xi32>
      %24 = vector.extract_strided_slice %13 {offsets = [0, 0], sizes = [16, 32], strides = [1, 1]} : vector<16x128xf32> to vector<16x32xf32>
      %25 = vector.extract_strided_slice %15 {offsets = [0, 0], sizes = [16, 32], strides = [1, 1]} : vector<16x128xf32> to vector<16x32xf32>
      %cst = arith.constant dense<0.000000e+00> : vector<16x16xf32>
      %26 = tpu.matmul %24, %25, %cst {dimension_numbers = #tpu.dot_dimension_numbers<[1], [1], [0], [0], [0, 0, 1, 0], [], []>} : vector<16x32xf32>, vector<16x32xf32>, vector<16x16xf32> -> vector<16x16xf32>
      %cst_19 = arith.constant 0xFF800000 : f32
      %27 = vector.broadcast %cst_19 : f32 to vector<16x16xf32>
      %28 = arith.select %23, %26, %27 : vector<16x16xi1>, vector<16x16xf32>
      %29 = vector.extract_strided_slice %18 {offsets = [0, 0], sizes = [16, 1], strides = [1, 1]} : vector<16x4xf32> to vector<16x1xf32>
      %cst_20 = arith.constant dense<0xFF800000> : vector<16xf32>
      %30 = vector.multi_reduction <maximumf>, %28, %cst_20 [1] : vector<16x16xf32> to vector<16xf32>
      %31 = vector.shape_cast %30 : vector<16xf32> to vector<16x1xf32>
      %32 = arith.maximumf %29, %31 : vector<16x1xf32>
      %33 = arith.subf %29, %32 : vector<16x1xf32>
      %34 = math.exp %33 : vector<16x1xf32>
      %35 = vector.broadcast %32 : vector<16x1xf32> to vector<16x16xf32>
      %36 = arith.subf %28, %35 : vector<16x16xf32>
      %37 = math.exp %36 : vector<16x16xf32>
      %38 = vector.extract_strided_slice %19 {offsets = [0, 0], sizes = [16, 1], strides = [1, 1]} : vector<16x4xf32> to vector<16x1xf32>
      %39 = arith.mulf %34, %38 : vector<16x1xf32>
      %cst_21 = arith.constant dense<0.000000e+00> : vector<16xf32>
      %40 = vector.multi_reduction <add>, %37, %cst_21 [1] : vector<16x16xf32> to vector<16xf32>
      %41 = vector.shape_cast %40 : vector<16xf32> to vector<16x1xf32>
      %42 = arith.addf %39, %41 : vector<16x1xf32>
      %43 = vector.extract_strided_slice %17 {offsets = [0, 0], sizes = [16, 32], strides = [1, 1]} : vector<16x128xf32> to vector<16x32xf32>
      %cst_22 = arith.constant dense<0.000000e+00> : vector<16x32xf32>
      %44 = tpu.matmul %37, %43, %cst_22 {dimension_numbers = #tpu.dot_dimension_numbers<[1], [0], [0], [1], [0, 0, 1, 1], [], []>} : vector<16x16xf32>, vector<16x32xf32>, vector<16x32xf32> -> vector<16x32xf32>
      %45 = vector.extract_strided_slice %20 {offsets = [0, 0], sizes = [16, 32], strides = [1, 1]} : vector<16x128xf32> to vector<16x32xf32>
      %46 = vector.broadcast %34 : vector<16x1xf32> to vector<16x32xf32>
      %47 = arith.mulf %46, %45 : vector<16x32xf32>
      %48 = arith.addf %47, %44 : vector<16x32xf32>
      %c0_23 = arith.constant 0 : index
      %c0_24 = arith.constant 0 : index
      %49 = vector.load %arg7[%c0_23, %c0_24] : memref<16x4xf32, #tpu.memory_space<vmem>>, vector<16x1xf32>
      tpu.vector_store %arg7[%c0_23, %c0_24], %32 {strides = array<i32>} : memref<16x4xf32, #tpu.memory_space<vmem>>, vector<16x1xf32>,
      %c0_25 = arith.constant 0 : index
      %c0_26 = arith.constant 0 : index
      %50 = vector.load %arg8[%c0_25, %c0_26] : memref<16x4xf32, #tpu.memory_space<vmem>>, vector<16x1xf32>
      tpu.vector_store %arg8[%c0_25, %c0_26], %42 {strides = array<i32>} : memref<16x4xf32, #tpu.memory_space<vmem>>, vector<16x1xf32>,
      %51 = vector.extract_strided_slice %13 {offsets = [0, 32], sizes = [16, 32], strides = [1, 1]} : vector<16x128xf32> to vector<16x32xf32>
      %52 = vector.extract_strided_slice %15 {offsets = [0, 32], sizes = [16, 32], strides = [1, 1]} : vector<16x128xf32> to vector<16x32xf32>
      %cst_27 = arith.constant dense<0.000000e+00> : vector<16x16xf32>
      %53 = tpu.matmul %51, %52, %cst_27 {dimension_numbers = #tpu.dot_dimension_numbers<[1], [1], [0], [0], [0, 0, 1, 0], [], []>} : vector<16x32xf32>, vector<16x32xf32>, vector<16x16xf32> -> vector<16x16xf32>
      %cst_28 = arith.constant 0xFF800000 : f32
      %54 = vector.broadcast %cst_28 : f32 to vector<16x16xf32>
      %55 = arith.select %23, %53, %54 : vector<16x16xi1>, vector<16x16xf32>
      %56 = vector.extract_strided_slice %18 {offsets = [0, 1], sizes = [16, 1], strides = [1, 1]} : vector<16x4xf32> to vector<16x1xf32>
      %cst_29 = arith.constant dense<0xFF800000> : vector<16xf32>
      %57 = vector.multi_reduction <maximumf>, %55, %cst_29 [1] : vector<16x16xf32> to vector<16xf32>
      %58 = vector.shape_cast %57 : vector<16xf32> to vector<16x1xf32>
      %59 = arith.maximumf %56, %58 : vector<16x1xf32>
      %60 = arith.subf %56, %59 : vector<16x1xf32>
      %61 = math.exp %60 : vector<16x1xf32>
      %62 = vector.broadcast %59 : vector<16x1xf32> to vector<16x16xf32>
      %63 = arith.subf %55, %62 : vector<16x16xf32>
      %64 = math.exp %63 : vector<16x16xf32>
      %65 = vector.extract_strided_slice %19 {offsets = [0, 1], sizes = [16, 1], strides = [1, 1]} : vector<16x4xf32> to vector<16x1xf32>
      %66 = arith.mulf %61, %65 : vector<16x1xf32>
      %cst_30 = arith.constant dense<0.000000e+00> : vector<16xf32>
      %67 = vector.multi_reduction <add>, %64, %cst_30 [1] : vector<16x16xf32> to vector<16xf32>
      %68 = vector.shape_cast %67 : vector<16xf32> to vector<16x1xf32>
      %69 = arith.addf %66, %68 : vector<16x1xf32>
      %70 = vector.extract_strided_slice %17 {offsets = [0, 32], sizes = [16, 32], strides = [1, 1]} : vector<16x128xf32> to vector<16x32xf32>
      %cst_31 = arith.constant dense<0.000000e+00> : vector<16x32xf32>
      %71 = tpu.matmul %64, %70, %cst_31 {dimension_numbers = #tpu.dot_dimension_numbers<[1], [0], [0], [1], [0, 0, 1, 1], [], []>} : vector<16x16xf32>, vector<16x32xf32>, vector<16x32xf32> -> vector<16x32xf32>
      %72 = vector.extract_strided_slice %20 {offsets = [0, 32], sizes = [16, 32], strides = [1, 1]} : vector<16x128xf32> to vector<16x32xf32>
      %73 = vector.broadcast %61 : vector<16x1xf32> to vector<16x32xf32>
      %74 = arith.mulf %73, %72 : vector<16x32xf32>
      %75 = arith.addf %74, %71 : vector<16x32xf32>
      %c0_32 = arith.constant 0 : index
      %c1 = arith.constant 1 : index
      %76 = vector.load %arg7[%c0_32, %c1] : memref<16x4xf32, #tpu.memory_space<vmem>>, vector<16x1xf32>
      tpu.vector_store %arg7[%c0_32, %c1], %59 {strides = array<i32>} : memref<16x4xf32, #tpu.memory_space<vmem>>, vector<16x1xf32>,
      %c0_33 = arith.constant 0 : index
      %c1_34 = arith.constant 1 : index
      %77 = vector.load %arg8[%c0_33, %c1_34] : memref<16x4xf32, #tpu.memory_space<vmem>>, vector<16x1xf32>
      tpu.vector_store %arg8[%c0_33, %c1_34], %69 {strides = array<i32>} : memref<16x4xf32, #tpu.memory_space<vmem>>, vector<16x1xf32>,
      %78 = vector.extract_strided_slice %13 {offsets = [0, 64], sizes = [16, 32], strides = [1, 1]} : vector<16x128xf32> to vector<16x32xf32>
      %79 = vector.extract_strided_slice %15 {offsets = [0, 64], sizes = [16, 32], strides = [1, 1]} : vector<16x128xf32> to vector<16x32xf32>
      %cst_35 = arith.constant dense<0.000000e+00> : vector<16x16xf32>
      %80 = tpu.matmul %78, %79, %cst_35 {dimension_numbers = #tpu.dot_dimension_numbers<[1], [1], [0], [0], [0, 0, 1, 0], [], []>} : vector<16x32xf32>, vector<16x32xf32>, vector<16x16xf32> -> vector<16x16xf32>
      %cst_36 = arith.constant 0xFF800000 : f32
      %81 = vector.broadcast %cst_36 : f32 to vector<16x16xf32>
      %82 = arith.select %23, %80, %81 : vector<16x16xi1>, vector<16x16xf32>
      %83 = vector.extract_strided_slice %18 {offsets = [0, 2], sizes = [16, 1], strides = [1, 1]} : vector<16x4xf32> to vector<16x1xf32>
      %cst_37 = arith.constant dense<0xFF800000> : vector<16xf32>
      %84 = vector.multi_reduction <maximumf>, %82, %cst_37 [1] : vector<16x16xf32> to vector<16xf32>
      %85 = vector.shape_cast %84 : vector<16xf32> to vector<16x1xf32>
      %86 = arith.maximumf %83, %85 : vector<16x1xf32>
      %87 = arith.subf %83, %86 : vector<16x1xf32>
      %88 = math.exp %87 : vector<16x1xf32>
      %89 = vector.broadcast %86 : vector<16x1xf32> to vector<16x16xf32>
      %90 = arith.subf %82, %89 : vector<16x16xf32>
      %91 = math.exp %90 : vector<16x16xf32>
      %92 = vector.extract_strided_slice %19 {offsets = [0, 2], sizes = [16, 1], strides = [1, 1]} : vector<16x4xf32> to vector<16x1xf32>
      %93 = arith.mulf %88, %92 : vector<16x1xf32>
      %cst_38 = arith.constant dense<0.000000e+00> : vector<16xf32>
      %94 = vector.multi_reduction <add>, %91, %cst_38 [1] : vector<16x16xf32> to vector<16xf32>
      %95 = vector.shape_cast %94 : vector<16xf32> to vector<16x1xf32>
      %96 = arith.addf %93, %95 : vector<16x1xf32>
      %97 = vector.extract_strided_slice %17 {offsets = [0, 64], sizes = [16, 32], strides = [1, 1]} : vector<16x128xf32> to vector<16x32xf32>
      %cst_39 = arith.constant dense<0.000000e+00> : vector<16x32xf32>
      %98 = tpu.matmul %91, %97, %cst_39 {dimension_numbers = #tpu.dot_dimension_numbers<[1], [0], [0], [1], [0, 0, 1, 1], [], []>} : vector<16x16xf32>, vector<16x32xf32>, vector<16x32xf32> -> vector<16x32xf32>
      %99 = vector.extract_strided_slice %20 {offsets = [0, 64], sizes = [16, 32], strides = [1, 1]} : vector<16x128xf32> to vector<16x32xf32>
      %100 = vector.broadcast %88 : vector<16x1xf32> to vector<16x32xf32>
      %101 = arith.mulf %100, %99 : vector<16x32xf32>
      %102 = arith.addf %101, %98 : vector<16x32xf32>
      %c0_40 = arith.constant 0 : index
      %c2 = arith.constant 2 : index
      %103 = vector.load %arg7[%c0_40, %c2] : memref<16x4xf32, #tpu.memory_space<vmem>>, vector<16x1xf32>
      tpu.vector_store %arg7[%c0_40, %c2], %86 {strides = array<i32>} : memref<16x4xf32, #tpu.memory_space<vmem>>, vector<16x1xf32>,
      %c0_41 = arith.constant 0 : index
      %c2_42 = arith.constant 2 : index
      %104 = vector.load %arg8[%c0_41, %c2_42] : memref<16x4xf32, #tpu.memory_space<vmem>>, vector<16x1xf32>
      tpu.vector_store %arg8[%c0_41, %c2_42], %96 {strides = array<i32>} : memref<16x4xf32, #tpu.memory_space<vmem>>, vector<16x1xf32>,
      %105 = vector.extract_strided_slice %13 {offsets = [0, 96], sizes = [16, 32], strides = [1, 1]} : vector<16x128xf32> to vector<16x32xf32>
      %106 = vector.extract_strided_slice %15 {offsets = [0, 96], sizes = [16, 32], strides = [1, 1]} : vector<16x128xf32> to vector<16x32xf32>
      %cst_43 = arith.constant dense<0.000000e+00> : vector<16x16xf32>
      %107 = tpu.matmul %105, %106, %cst_43 {dimension_numbers = #tpu.dot_dimension_numbers<[1], [1], [0], [0], [0, 0, 1, 0], [], []>} : vector<16x32xf32>, vector<16x32xf32>, vector<16x16xf32> -> vector<16x16xf32>
      %cst_44 = arith.constant 0xFF800000 : f32
      %108 = vector.broadcast %cst_44 : f32 to vector<16x16xf32>
      %109 = arith.select %23, %107, %108 : vector<16x16xi1>, vector<16x16xf32>
      %110 = vector.extract_strided_slice %18 {offsets = [0, 3], sizes = [16, 1], strides = [1, 1]} : vector<16x4xf32> to vector<16x1xf32>
      %cst_45 = arith.constant dense<0xFF800000> : vector<16xf32>
      %111 = vector.multi_reduction <maximumf>, %109, %cst_45 [1] : vector<16x16xf32> to vector<16xf32>
      %112 = vector.shape_cast %111 : vector<16xf32> to vector<16x1xf32>
      %113 = arith.maximumf %110, %112 : vector<16x1xf32>
      %114 = arith.subf %110, %113 : vector<16x1xf32>
      %115 = math.exp %114 : vector<16x1xf32>
      %116 = vector.broadcast %113 : vector<16x1xf32> to vector<16x16xf32>
      %117 = arith.subf %109, %116 : vector<16x16xf32>
      %118 = math.exp %117 : vector<16x16xf32>
      %119 = vector.extract_strided_slice %19 {offsets = [0, 3], sizes = [16, 1], strides = [1, 1]} : vector<16x4xf32> to vector<16x1xf32>
      %120 = arith.mulf %115, %119 : vector<16x1xf32>
      %cst_46 = arith.constant dense<0.000000e+00> : vector<16xf32>
      %121 = vector.multi_reduction <add>, %118, %cst_46 [1] : vector<16x16xf32> to vector<16xf32>
      %122 = vector.shape_cast %121 : vector<16xf32> to vector<16x1xf32>
      %123 = arith.addf %120, %122 : vector<16x1xf32>
      %124 = vector.extract_strided_slice %17 {offsets = [0, 96], sizes = [16, 32], strides = [1, 1]} : vector<16x128xf32> to vector<16x32xf32>
      %cst_47 = arith.constant dense<0.000000e+00> : vector<16x32xf32>
      %125 = tpu.matmul %118, %124, %cst_47 {dimension_numbers = #tpu.dot_dimension_numbers<[1], [0], [0], [1], [0, 0, 1, 1], [], []>} : vector<16x16xf32>, vector<16x32xf32>, vector<16x32xf32> -> vector<16x32xf32>
      %126 = vector.extract_strided_slice %20 {offsets = [0, 96], sizes = [16, 32], strides = [1, 1]} : vector<16x128xf32> to vector<16x32xf32>
      %127 = vector.broadcast %115 : vector<16x1xf32> to vector<16x32xf32>
      %128 = arith.mulf %127, %126 : vector<16x32xf32>
      %129 = arith.addf %128, %125 : vector<16x32xf32>
      %c0_48 = arith.constant 0 : index
      %c3 = arith.constant 3 : index
      %130 = vector.load %arg7[%c0_48, %c3] : memref<16x4xf32, #tpu.memory_space<vmem>>, vector<16x1xf32>
      tpu.vector_store %arg7[%c0_48, %c3], %113 {strides = array<i32>} : memref<16x4xf32, #tpu.memory_space<vmem>>, vector<16x1xf32>,
      %c0_49 = arith.constant 0 : index
      %c3_50 = arith.constant 3 : index
      %131 = vector.load %arg8[%c0_49, %c3_50] : memref<16x4xf32, #tpu.memory_space<vmem>>, vector<16x1xf32>
      tpu.vector_store %arg8[%c0_49, %c3_50], %123 {strides = array<i32>} : memref<16x4xf32, #tpu.memory_space<vmem>>, vector<16x1xf32>,
      %132 = tpu.concatenate %48, %75, %102, %129 in 1 : vector<16x32xf32>, vector<16x32xf32>, vector<16x32xf32>, vector<16x32xf32> -> vector<16x128xf32>
      %c0_51 = arith.constant 0 : index
      %c0_52 = arith.constant 0 : index
      %133 = vector.load %arg9[%c0_51, %c0_52] : memref<16x128xf32, #tpu.memory_space<vmem>>, vector<16x128xf32>
      tpu.vector_store %arg9[%c0_51, %c0_52], %132 {strides = array<i32>} : memref<16x128xf32, #tpu.memory_space<vmem>>, vector<16x128xf32>,
    } else {
    }
    %c0_i32_3 = arith.constant 0 : i32
    %9 = arith.cmpi eq, %arg2, %c0_i32_3 : i32
    %10 = arith.extui %9 : i1 to i32
    %c0_i32_4 = arith.constant 0 : i32
    %11 = arith.cmpi ne, %10, %c0_i32_4 : i32
    scf.if %11 {
      %c0 = arith.constant 0 : index
      %c0_5 = arith.constant 0 : index
      %12 = vector.load %arg9[%c0, %c0_5] : memref<16x128xf32, #tpu.memory_space<vmem>>, vector<16x128xf32>
      %c0_6 = arith.constant 0 : index
      %c0_7 = arith.constant 0 : index
      %13 = vector.load %arg8[%c0_6, %c0_7] : memref<16x4xf32, #tpu.memory_space<vmem>>, vector<16x4xf32>
      %14 = vector.extract_strided_slice %13 {offsets = [0, 0], sizes = [16, 1], strides = [1, 1]} : vector<16x4xf32> to vector<16x1xf32>
      %15 = tpu.reciprocal %14 : vector<16x1xf32> -> vector<16x1xf32>
      %16 = vector.extract_strided_slice %12 {offsets = [0, 0], sizes = [16, 32], strides = [1, 1]} : vector<16x128xf32> to vector<16x32xf32>
      %17 = vector.broadcast %15 : vector<16x1xf32> to vector<16x32xf32>
      %18 = arith.mulf %16, %17 : vector<16x32xf32>
      %19 = vector.extract_strided_slice %13 {offsets = [0, 1], sizes = [16, 1], strides = [1, 1]} : vector<16x4xf32> to vector<16x1xf32>
      %20 = tpu.reciprocal %19 : vector<16x1xf32> -> vector<16x1xf32>
      %21 = vector.extract_strided_slice %12 {offsets = [0, 32], sizes = [16, 32], strides = [1, 1]} : vector<16x128xf32> to vector<16x32xf32>
      %22 = vector.broadcast %20 : vector<16x1xf32> to vector<16x32xf32>
      %23 = arith.mulf %21, %22 : vector<16x32xf32>
      %24 = vector.extract_strided_slice %13 {offsets = [0, 2], sizes = [16, 1], strides = [1, 1]} : vector<16x4xf32> to vector<16x1xf32>
      %25 = tpu.reciprocal %24 : vector<16x1xf32> -> vector<16x1xf32>
      %26 = vector.extract_strided_slice %12 {offsets = [0, 64], sizes = [16, 32], strides = [1, 1]} : vector<16x128xf32> to vector<16x32xf32>
      %27 = vector.broadcast %25 : vector<16x1xf32> to vector<16x32xf32>
      %28 = arith.mulf %26, %27 : vector<16x32xf32>
      %29 = vector.extract_strided_slice %13 {offsets = [0, 3], sizes = [16, 1], strides = [1, 1]} : vector<16x4xf32> to vector<16x1xf32>
      %30 = tpu.reciprocal %29 : vector<16x1xf32> -> vector<16x1xf32>
      %31 = vector.extract_strided_slice %12 {offsets = [0, 96], sizes = [16, 32], strides = [1, 1]} : vector<16x128xf32> to vector<16x32xf32>
      %32 = vector.broadcast %30 : vector<16x1xf32> to vector<16x32xf32>
      %33 = arith.mulf %31, %32 : vector<16x32xf32>
      %34 = tpu.concatenate %18, %23, %28, %33 in 1 : vector<16x32xf32>, vector<16x32xf32>, vector<16x32xf32>, vector<16x32xf32> -> vector<16x128xf32>
      %c0_8 = arith.constant 0 : index
      %c0_9 = arith.constant 0 : index
      %c0_10 = arith.constant 0 : index
      %35 = vector.load %arg6[%c0_8, %c0_9, %c0_10] : memref<1x16x128xf32, #tpu.memory_space<vmem>>, vector<1x16x128xf32>
      %36 = vector.shape_cast %35 : vector<1x16x128xf32> to vector<16x128xf32>
      %37 = vector.shape_cast %34 : vector<16x128xf32> to vector<1x16x128xf32>
      tpu.vector_store %arg6[%c0_8, %c0_9, %c0_10], %37 {strides = array<i32>} : memref<1x16x128xf32, #tpu.memory_space<vmem>>, vector<1x16x128xf32>,
    } else {
    }
    return
  }
  func.func @transform_0(%arg0: i32, %arg1: i32, %arg2: i32) -> (i32, i32, i32) {
    %c0_i32 = arith.constant 0 : i32
    %c0_i32_0 = arith.constant 0 : i32
    return %arg0, %arg1, %c0_i32 : i32, i32, i32
  }
  func.func @transform_1(%arg0: i32, %arg1: i32, %arg2: i32) -> (i32, i32, i32) {
    %0 = arith.minsi %arg2, %arg1 : i32
    %c1_i32 = arith.constant 1 : i32
    %c0_i32 = arith.constant 0 : i32
    return %arg0, %0, %c1_i32 : i32, i32, i32
  }
  func.func @transform_2(%arg0: i32, %arg1: i32, %arg2: i32) -> (i32, i32, i32) {
    %0 = arith.minsi %arg2, %arg1 : i32
    %c2_i32 = arith.constant 2 : i32
    %c0_i32 = arith.constant 0 : i32
    return %arg0, %0, %c2_i32 : i32, i32, i32
  }
  func.func @transform_3(%arg0: i32, %arg1: i32, %arg2: i32) -> (i32, i32, i32) {
    %c0_i32 = arith.constant 0 : i32
    %c0_i32_0 = arith.constant 0 : i32
    return %arg0, %arg1, %c0_i32 : i32, i32, i32
  }
}

</mosaic_0001>

<llo_original>
// kernel: causal_self_attention.5
$region0: #{causal_self_attention.5}
  #allocation0 [shape = 'u32[]', space=smem, size = 0x4, offset = 0x4, fixed_abs, tag = 'smem constant byte address 0x4 - core index']
  #allocation1 [shape = 'u32[144,128]{1,0:T(1,128)}', space=vmem, size = 0x12000, scoped, tag = 'internal scratch']
  #allocation2 [shape = 'f32[32,128]{1,0:T(8,128)}', space=vmem, size = 0x4000, scoped, tag = 'scratch operand']
  %s0 = inlined_call_operand.vmem [shape: f32[32,128], index: 0, kind: input, shape index: {}]
  %s1 = inlined_call_operand.vmem [shape: f32[128,128], index: 1, kind: input, shape index: {}]
  %s2 = inlined_call_operand.vmem [shape: f32[1,128], index: 2, kind: input, shape index: {}]
  %s3 = inlined_call_operand.hbm [shape: f32[32,128], index: 3, kind: output, shape index: {}]
  %s4 = sld [smem:[#allocation0]]
  $region30: #{causal_self_attention.5} parent=0
    _
  %s6 = ssub.s32 1, %s4
  %s7 = scalar_select 0, %s6, %s4
  $region1: #{causal_self_attention.5} parent=0
    #allocation3 [shape = 'u8[16384]{0}', space=vmem, size = 0x4000, scoped, tag = 'output window, operand 0, single buffered']
    #allocation4 [shape = 's32[1]{0}', space=sflag, size = 0x4, scoped, tag = 'scoped memory for causal_self_attention.5']
    %8 = vsyncpa [#allocation4], 0
    // Predicated region
    $region2: #{causal_self_attention.5} parent=1 // pred_check
      _
    $region3: #{causal_self_attention.5} parent=1 // pred_check_branch
      %10 = sbr.rel (0) target = $region5
    $region4: #{causal_self_attention.5} parent=1 // pred_region
      _
    $region5: #{causal_self_attention.5} parent=1 // pred_fallthru
      _
    // Predicated region
    $region6: #{causal_self_attention.5} parent=1 // pred_check
      _
    $region7: #{causal_self_attention.5} parent=1 // pred_check_branch
      %12 = sbr.rel (0) target = $region9
    $region8: #{causal_self_attention.5} parent=1 // pred_region
      _
    $region9: #{causal_self_attention.5} parent=1 // pred_fallthru
      _
    // Predicated region
    $region10: #{causal_self_attention.5} parent=1 // pred_check
      _
    $region11: #{causal_self_attention.5} parent=1 // pred_check_branch
      %14 = sbr.rel (0) target = $region13
    $region12: #{causal_self_attention.5} parent=1 // pred_region
      _
    $region13: #{causal_self_attention.5} parent=1 // pred_fallthru
      _
    %p15 = scmp.eq.s32.totalorder 0, 0
    // Predicated region
    $region14: #{causal_self_attention.5} parent=1 // pred_check
      %p16 = pneg %p15
    $region15: #{causal_self_attention.5} parent=1 // pred_check_branch
      %18 = sbr.rel (%p16) target = $region17
    $region16: #{causal_self_attention.5} parent=1 // pred_region
      %19 = vst [vmem:[#allocation2] sm:$0xff] 0.0
      %20 = vst [vmem:[#allocation2 + $0x8] sm:$0xff] 0.0
      %21 = vst [vmem:[#allocation2 + $0x10] sm:$0xff] 0.0
      %22 = vst [vmem:[#allocation2 + $0x18] sm:$0xff] 0.0
    $region17: #{causal_self_attention.5} parent=1 // pred_fallthru
      _
    %v23 = vld [vmem:[%s0] sm:$0xff]
    %v24 = vld [vmem:[%s0 + $0x8] sm:$0xff]
    %v25 = vld [vmem:[%s0 + $0x10] sm:$0xff]
    %v26 = vld [vmem:[%s0 + $0x18] sm:$0xff]
    %v27 = vld [vmem:[%s1] sm:$0xff]
    %v28 = vld [vmem:[%s1 + $0x8] sm:$0xff]
    %v29 = vld [vmem:[%s1 + $0x10] sm:$0xff]
    %v30 = vld [vmem:[%s1 + $0x18] sm:$0xff]
    %v31 = vld [vmem:[%s1 + $0x20] sm:$0xff]
    %v32 = vld [vmem:[%s1 + $0x28] sm:$0xff]
    %v33 = vld [vmem:[%s1 + $0x30] sm:$0xff]
    %v34 = vld [vmem:[%s1 + $0x38] sm:$0xff]
    %v35 = vld [vmem:[%s1 + $0x40] sm:$0xff]
    %v36 = vld [vmem:[%s1 + $0x48] sm:$0xff]
    %v37 = vld [vmem:[%s1 + $0x50] sm:$0xff]
    %v38 = vld [vmem:[%s1 + $0x58] sm:$0xff]
    %v39 = vld [vmem:[%s1 + $0x60] sm:$0xff]
    %v40 = vld [vmem:[%s1 + $0x68] sm:$0xff]
    %v41 = vld [vmem:[%s1 + $0x70] sm:$0xff]
    %v42 = vld [vmem:[%s1 + $0x78] sm:$0xff]
    %v43 = vld [vmem:[#allocation2] sm:$0xff]
    %v44 = vld [vmem:[#allocation2 + $0x8] sm:$0xff]
    %v45 = vld [vmem:[#allocation2 + $0x10] sm:$0xff]
    %v46 = vld [vmem:[#allocation2 + $0x18] sm:$0xff]
    %47 = vmatprep.subr.mxu0 0.0
    %48 = vmatpush1.msra.mxu0 %v27
    %49 = vmatprep.subr.mxu0 0.0
    %50 = vmatpush1.msra.mxu0 %v28
    %51 = vmatprep.subr.mxu0 0.0
    %52 = vmatpush1.msra.mxu0 %v29
    %53 = vmatprep.subr.mxu0 0.0
    %54 = vmatpush1.msra.mxu0 %v30
    %55 = vmatprep.subr.mxu0 0.0
    %56 = vmatpush1.msra.mxu0 %v31
    %57 = vmatprep.subr.mxu0 0.0
    %58 = vmatpush1.msra.mxu0 %v32
    %59 = vmatprep.subr.mxu0 0.0
    %60 = vmatpush1.msra.mxu0 %v33
    %61 = vmatprep.subr.mxu0 0.0
    %62 = vmatpush1.msra.mxu0 %v34
    %63 = vmatprep.subr.mxu0 0.0
    %64 = vmatpush1.msra.mxu0 %v35
    %65 = vmatprep.subr.mxu0 0.0
    %66 = vmatpush1.msra.mxu0 %v36
    %67 = vmatprep.subr.mxu0 0.0
    %68 = vmatpush1.msra.mxu0 %v37
    %69 = vmatprep.subr.mxu0 0.0
    %70 = vmatpush1.msra.mxu0 %v38
    %71 = vmatprep.subr.mxu0 0.0
    %72 = vmatpush1.msra.mxu0 %v39
    %73 = vmatprep.subr.mxu0 0.0
    %74 = vmatpush1.msra.mxu0 %v40
    %75 = vmatprep.subr.mxu0 0.0
    %76 = vmatpush1.msra.mxu0 %v41
    %77 = vmatprep.subr.mxu0 0.0
    %78 = vmatpush1.msra.mxu0 %v42
    %79 = vmatprep.subr.mxu0 0.0
    %80 = vmatpush1.msra.mxu0 0.0
    %81 = vmatprep.subr.mxu0 0.0
    %82 = vmatpush1.msra.mxu0 0.0
    %83 = vmatprep.subr.mxu0 0.0
    %84 = vmatpush1.msra.mxu0 0.0
    %85 = vmatprep.subr.mxu0 0.0
    %86 = vmatpush1.msra.mxu0 0.0
    %87 = vmatprep.subr.mxu0 0.0
    %88 = vmatpush1.msra.mxu0 0.0
    %89 = vmatprep.subr.mxu0 0.0
    %90 = vmatpush1.msra.mxu0 0.0
    %91 = vmatprep.subr.mxu0 0.0
    %92 = vmatpush1.msra.mxu0 0.0
    %93 = vmatprep.subr.mxu0 0.0
    %94 = vmatpush1.msra.mxu0 0.0
    %95 = vmatprep.subr.mxu0 0.0
    %96 = vmatpush1.msra.mxu0 0.0
    %97 = vmatprep.subr.mxu0 0.0
    %98 = vmatpush1.msra.mxu0 0.0
    %99 = vmatprep.subr.mxu0 0.0
    %100 = vmatpush1.msra.mxu0 0.0
    %101 = vmatprep.subr.mxu0 0.0
    %102 = vmatpush1.msra.mxu0 0.0
    %103 = vmatprep.subr.mxu0 0.0
    %104 = vmatpush1.msra.mxu0 0.0
    %105 = vmatprep.subr.mxu0 0.0
    %106 = vmatpush1.msra.mxu0 0.0
    %107 = vmatprep.subr.mxu0 0.0
    %108 = vmatpush1.msra.mxu0 0.0
    %109 = vmatprep.subr.mxu0 0.0
    %110 = vmatpush1.msra.mxu0 0.0
    %111 = vmatprep.mubr.f32.mxu0 0.0
    %112 = vmatmul.mubr.f32.gmra.mrb[0].mxu0 %v23
    %v113 = vpop.f32.mrb[0].mxu0
    %v114 = vadd.f32 0.0, %v113
    %v115 = vpop.f32.mrb[0].mxu0
    %116 = vmatprep.mubr.f32.mxu0 0.0
    %117 = vmatmul.mubr.f32.gmra.mrb[0].mxu0 %v24
    %v118 = vpop.f32.mrb[0].mxu0
    %v119 = vadd.f32 0.0, %v118
    %v120 = vpop.f32.mrb[0].mxu0
    %121 = vmatprep.mubr.f32.mxu0 0.0
    %122 = vmatmul.mubr.f32.gmra.mrb[0].mxu0 %v25
    %v123 = vpop.f32.mrb[0].mxu0
    %v124 = vadd.f32 0.0, %v123
    %v125 = vpop.f32.mrb[0].mxu0
    %126 = vmatprep.mubr.f32.mxu0 0.0
    %127 = vmatmul.mubr.f32.gmra.mrb[0].mxu0 %v26
    %v128 = vpop.f32.mrb[0].mxu0
    %v129 = vadd.f32 0.0, %v128
    %v130 = vpop.f32.mrb[0].mxu0
    %131 = vdwg.mxu0
    %v132 = vadd.f32 %v43, %v114
    %v133 = vadd.f32 %v44, %v119
    %v134 = vadd.f32 %v45, %v124
    %v135 = vadd.f32 %v46, %v129
    %136 = vst [vmem:[#allocation2] sm:$0xff] %v132
    %137 = vst [vmem:[#allocation2 + $0x8] sm:$0xff] %v133
    %138 = vst [vmem:[#allocation2 + $0x10] sm:$0xff] %v134
    %139 = vst [vmem:[#allocation2 + $0x18] sm:$0xff] %v135
    // Predicated region
    $region18: #{causal_self_attention.5} parent=1 // pred_check
      %p140 = pneg %p15
    $region19: #{causal_self_attention.5} parent=1 // pred_check_branch
      %142 = sbr.rel (%p140) target = $region21
    $region20: #{causal_self_attention.5} parent=1 // pred_region
      %v143 = vld [vmem:[#allocation2] sm:$0xff]
      %v144 = vld [vmem:[#allocation2 + $0x8] sm:$0xff]
      %v145 = vld [vmem:[#allocation2 + $0x10] sm:$0xff]
      %v146 = vld [vmem:[#allocation2 + $0x18] sm:$0xff]
      %v147 = vld [vmem:[%s2] sm:$0x1]
      %v149 = vlaneseq
      %v150 = vshrl.u32 %v149, 7
      %v151 = vsub.s32 0, %v150
      %v152 = vrot.slane %v147, %v151
      %v154 = vadd.f32 %v143, %v152
      %v155 = vadd.f32 %v144, %v152
      %v156 = vadd.f32 %v145, %v152
      %v157 = vadd.f32 %v146, %v152
      %158 = vst [vmem:[#allocation3] sm:$0xff] %v154
      %159 = vst [vmem:[#allocation3 + $0x8] sm:$0xff] %v155
      %160 = vst [vmem:[#allocation3 + $0x10] sm:$0xff] %v156
      %161 = vst [vmem:[#allocation3 + $0x18] sm:$0xff] %v157
    $region21: #{causal_self_attention.5} parent=1 // pred_fallthru
      _
    // Predicated region
    $region22: #{causal_self_attention.5} parent=1 // pred_check
      _
    $region23: #{causal_self_attention.5} parent=1 // pred_check_branch
      %163 = sbr.rel (0) target = $region25
    $region24: #{causal_self_attention.5} parent=1 // pred_region
      %s165 = ssub.s32 512, 512
      %166 = vsyncadd [#allocation4], %s165
      %s167 = sshll.u32 [#allocation3], 4
      %s168 = int_to_ptr.vmem [resolvable:$true] %s167
      %173 = dma.vmem_to_hbm [thread:$0]  %s168, 512, %s3, [#allocation4], 128, 128, 8
    $region25: #{causal_self_attention.5} parent=1 // pred_fallthru
      _
    // Predicated region
    $region26: #{causal_self_attention.5} parent=1 // pred_check
      _
    $region27: #{causal_self_attention.5} parent=1 // pred_check_branch
      %175 = sbr.rel (0) target = $region29
    $region28: #{causal_self_attention.5} parent=1 // pred_region
      %176 = dma.done [#allocation4], 512
    $region29: #{causal_self_attention.5} parent=1 // pred_fallthru
      _
    %177 = vsyncpa [#allocation4], 1

// kernel: causal_self_attention.3
$region0: #{causal_self_attention.3}
  #allocation0 [shape = 'u32[]', space=smem, size = 0x4, offset = 0x4, fixed_abs, tag = 'smem constant byte address 0x4 - core index']
  #allocation1 [shape = 'u32[144,128]{1,0:T(1,128)}', space=vmem, size = 0x12000, scoped, tag = 'internal scratch']
  #allocation2 [shape = 'f32[32,128]{1,0:T(8,128)}', space=vmem, size = 0x4000, scoped, tag = 'scratch operand']
  %s0 = inlined_call_operand.hbm [shape: f32[32,128], index: 0, kind: input, shape index: {}]
  %s1 = inlined_call_operand.hbm [shape: f32[128,384], index: 1, kind: input, shape index: {}]
  %s2 = inlined_call_operand.vmem [shape: f32[1,384], index: 2, kind: input, shape index: {}]
  %s3 = inlined_call_operand.vmem [shape: f32[32,384], index: 3, kind: output, shape index: {}]
  %s4 = sld [smem:[#allocation0]]
  $region95: #{causal_self_attention.3} parent=0
    _
  %s6 = ssub.s32 1, %s4
  %s7 = scalar_select 0, %s6, %s4
  $region1: #{causal_self_attention.3} parent=0
    #allocation3 [shape = 'u8[16384]{0}', space=vmem, size = 0x4000, scoped, tag = 'input window, operand 0, single buffered']
    #allocation4 [shape = 's32[2]{0}', space=sflag, size = 0x8, scoped, tag = 'scoped memory for causal_self_attention.3']
    #allocation5 [shape = 'u8[131072]{0}', space=vmem, size = 0x20000, scoped, tag = 'input window, operand 1']
    #allocation6 [shape = 's32[2]{0}', space=sflag, size = 0x8, scoped, tag = 'scoped memory for causal_self_attention.3']
    #allocation7 [shape = 'u8[32768]{0}', space=vmem, size = 0x8000, scoped, tag = 'output window, operand 0']
    %8 = vsyncpa [#allocation4], 0
    %9 = vsyncpa [#allocation6], 0
    %s10 = scalar_lea.sflag [#allocation6], 1
    %11 = vsyncpa %s10, 0
    loop: start=0, step=1, limit=5
    $region2: #{causal_self_attention.3} parent=1 // loop_pre_header
      _
    $region3: #{causal_self_attention.3} parent=1 // loop_header
      %s13 = sphi 0, %s17
      %p14 = scmp.ge.s32.totalorder %s13, 5
      %s20 = sphi 0, %s39
      %s21 = sphi 0, %s35
      %s22 = sphi 0, %s31
      %s23 = sphi 0, %s20
      %s24 = sphi 0, %s21
      %s25 = sphi 0, %s22
      %s26 = sphi 0, %s23
      %s27 = sphi 0, %s24
      %s28 = sphi 0, %s25
      %s44 = sphi 0, %s46
      %s47 = sphi 0, %s44
      %s48 = sphi 0, %s47
      %s64 = sphi 0, %s48
      %s72 = sphi 0, %s74
      %s75 = sphi 0, %s72
      %s76 = sphi 0, %s75
      %s92 = sphi 0, %s76
      %s98 = sphi 0, %s100
      %s101 = sphi 0, %s98
      %s102 = sphi 0, %s101
      %s118 = sphi 0, %s102
      %s126 = sphi 0, %s128
      %s129 = sphi 0, %s126
      %s130 = sphi 0, %s129
      %s146 = sphi 0, %s130
    $region4: #{causal_self_attention.3} parent=1 // loop_header_branch
      %16 = sbr.rel (%p14) target = $region8
    $region5: #{causal_self_attention.3} parent=1 // loop_body
      %s18 = ssub.s32 %s13, 1
      %s19 = ssub.s32 %s13, 2
      %s29 = sadd.s32 1, %s22
      %p30 = scmp.ge.s32.totalorder %s29, 1
      %s31 = scalar_select %p30, 0, %s29
      %s32 = sadd.s32 1, %s21
      %s33 = scalar_select %p30, %s32, %s21
      %p34 = scmp.ge.s32.totalorder %s33, 3
      %s35 = scalar_select %p34, 0, %s33
      %s36 = sadd.s32 1, %s20
      %s37 = scalar_select %p34, %s36, %s20
      %p38 = scmp.ge.s32.totalorder %s37, 1
      %s39 = scalar_select %p38, 0, %s37
      %s40 = ssub.s32 %s20, %s39
      %s41 = ssub.s32 %s22, %s31
      %s42 = sor.u32 %s40, %s41
      %p43 = scmp.eq.s32.totalorder %s42, 0
      %s45 = sadd.s32 %s44, 1
      %s46 = scalar_select %p43, %s44, %s45
      %p49 = pneg %p43
      %p50 = scmp.eq.s32.totalorder %s13, 2
      %p51 = por %p49, %p50
      %p52 = scmp.ne.s32.totalorder %s44, %s47
      %p53 = scmp.eq.s32.totalorder %s13, 0
      %p54 = por %p52, %p53
      %p55 = scmp.ne.s32.totalorder %s44, %s47
      %p56 = scmp.eq.s32.totalorder %s18, 2
      %p57 = por %p55, %p56
      %p58 = scmp.ne.s32.totalorder %s47, %s48
      %p59 = scmp.eq.s32.totalorder %s18, 0
      %p60 = por %p58, %p59
      %p61 = scmp.ne.s32.totalorder %s47, %s48
      %p62 = scmp.eq.s32.totalorder %s19, 2
      %p63 = por %p61, %p62
      %p65 = scmp.ne.s32.totalorder %s48, %s64
      %p66 = scmp.eq.s32.totalorder %s19, 0
      %p67 = por %p65, %p66
      %s68 = ssub.s32 %s22, %s31
      %s69 = ssub.s32 %s21, %s35
      %s70 = sor.u32 %s68, %s69
      %p71 = scmp.eq.s32.totalorder %s70, 0
      %s73 = sadd.s32 %s72, 1
      %s74 = scalar_select %p71, %s72, %s73
      %p77 = pneg %p71
      %p78 = scmp.eq.s32.totalorder %s13, 2
      %p79 = por %p77, %p78
      %p80 = scmp.ne.s32.totalorder %s72, %s75
      %p81 = scmp.eq.s32.totalorder %s13, 0
      %p82 = por %p80, %p81
      %p83 = scmp.ne.s32.totalorder %s72, %s75
      %p84 = scmp.eq.s32.totalorder %s18, 2
      %p85 = por %p83, %p84
      %p86 = scmp.ne.s32.totalorder %s75, %s76
      %p87 = scmp.eq.s32.totalorder %s18, 0
      %p88 = por %p86, %p87
      %p89 = scmp.ne.s32.totalorder %s75, %s76
      %p90 = scmp.eq.s32.totalorder %s19, 2
      %p91 = por %p89, %p90
      %p93 = scmp.ne.s32.totalorder %s76, %s92
      %p94 = scmp.eq.s32.totalorder %s19, 0
      %p95 = por %p93, %p94
      %s96 = ssub.s32 %s21, %s35
      %p97 = scmp.eq.s32.totalorder %s96, 0
      %s99 = sadd.s32 %s98, 1
      %s100 = scalar_select %p97, %s98, %s99
      %p103 = pneg %p97
      %p104 = scmp.eq.s32.totalorder %s13, 2
      %p105 = por %p103, %p104
      %p106 = scmp.ne.s32.totalorder %s98, %s101
      %p107 = scmp.eq.s32.totalorder %s13, 0
      %p108 = por %p106, %p107
      %p109 = scmp.ne.s32.totalorder %s98, %s101
      %p110 = scmp.eq.s32.totalorder %s18, 2
      %p111 = por %p109, %p110
      %p112 = scmp.ne.s32.totalorder %s101, %s102
      %p113 = scmp.eq.s32.totalorder %s18, 0
      %p114 = por %p112, %p113
      %p115 = scmp.ne.s32.totalorder %s101, %s102
      %p116 = scmp.eq.s32.totalorder %s19, 2
      %p117 = por %p115, %p116
      %p119 = scmp.ne.s32.totalorder %s102, %s118
      %p120 = scmp.eq.s32.totalorder %s19, 0
      %p121 = por %p119, %p120
      %s122 = ssub.s32 %s20, %s39
      %s123 = ssub.s32 %s21, %s35
      %s124 = sor.u32 %s122, %s123
      %p125 = scmp.eq.s32.totalorder %s124, 0
      %s127 = sadd.s32 %s126, 1
      %s128 = scalar_select %p125, %s126, %s127
      %p131 = pneg %p125
      %p132 = scmp.eq.s32.totalorder %s13, 2
      %p133 = por %p131, %p132
      %p134 = scmp.ne.s32.totalorder %s126, %s129
      %p135 = scmp.eq.s32.totalorder %s13, 0
      %p136 = por %p134, %p135
      %p137 = scmp.ne.s32.totalorder %s126, %s129
      %p138 = scmp.eq.s32.totalorder %s18, 2
      %p139 = por %p137, %p138
      %p140 = scmp.ne.s32.totalorder %s129, %s130
      %p141 = scmp.eq.s32.totalorder %s18, 0
      %p142 = por %p140, %p141
      %p143 = scmp.ne.s32.totalorder %s129, %s130
      %p144 = scmp.eq.s32.totalorder %s19, 2
      %p145 = por %p143, %p144
      %p147 = scmp.ne.s32.totalorder %s130, %s146
      %p148 = scmp.eq.s32.totalorder %s19, 0
      %p149 = por %p147, %p148
      %p150 = scmp.le.s32.totalorder 1, %s13
      %p151 = scmp.lt.s32.totalorder %s13, 4
      %p152 = pnand %p150, %p151
      %p153 = pneg %p152
      // Predicated region
      $region9: #{causal_self_attention.3} parent=5 // pred_check
        _
      $region10: #{causal_self_attention.3} parent=5 // pred_check_branch
        %155 = sbr.rel (%p152) target = $region12
      $region11: #{causal_self_attention.3} parent=5 // pred_region
        %s156 = ssub.s32 %s13, 1
        // Predicated region
        $region13: #{causal_self_attention.3} parent=11 // pred_check
          %p157 = pneg %p60
        $region14: #{causal_self_attention.3} parent=11 // pred_check_branch
          %159 = sbr.rel (%p157) target = $region16
        $region15: #{causal_self_attention.3} parent=11 // pred_region
          %s160 = smul.u32 4, %s23
          %s162 = ssub.s32 512, 512
          %163 = vsyncadd [#allocation4], %s162
          %s164 = sadd.s32 %s25, %s160
          %s165 = smul.addr %s164, 128
          %s166 = scalar_lea.hbm %s0, %s165
          %s167 = sshll.u32 [#allocation3], 4
          %s168 = int_to_ptr.vmem [resolvable:$true] %s167
          %173 = dma.hbm_to_vmem [thread:$0]  %s166, 512, %s168, [#allocation4], 128, 128, 8
        $region16: #{causal_self_attention.3} parent=11 // pred_fallthru
          _
      $region12: #{causal_self_attention.3} parent=5 // pred_fallthru
        _
      %p174 = scmp.lt.s32.totalorder %s13, 3
      // Predicated region
      $region17: #{causal_self_attention.3} parent=5 // pred_check
        %p175 = pneg %p174
      $region18: #{causal_self_attention.3} parent=5 // pred_check_branch
        %177 = sbr.rel (%p175) target = $region20
      $region19: #{causal_self_attention.3} parent=5 // pred_region
        // Predicated region
        $region21: #{causal_self_attention.3} parent=19 // pred_check
          %p178 = pneg %p82
        $region22: #{causal_self_attention.3} parent=19 // pred_check_branch
          %180 = sbr.rel (%p178) target = $region24
        $region23: #{causal_self_attention.3} parent=19 // pred_region
          %s181 = sand.u32 %s72, 1
          %s182 = scalar_lea.sflag [#allocation6], %s181
          %s183 = sand.u32 %s72, 1
          %s184 = smul.addr %s183, 128
          %s185 = scalar_lea.vmem [#allocation5], %s184
          %s186 = smul.u32 16, %s22
          %s188 = ssub.s32 2048, 2048
          %189 = vsyncadd %s182, %s188
          %s190 = smul.addr %s186, 3
          %s191 = sadd.s32 %s21, %s190
          %s192 = smul.addr %s191, 128
          %s193 = scalar_lea.hbm %s1, %s192
          %s194 = sshll.u32 %s185, 4
          %s195 = int_to_ptr.vmem [resolvable:$true] %s194
          %200 = dma.hbm_to_vmem [thread:$0]  %s193, 2048, %s195, %s182, 384, 128, 8
        $region24: #{causal_self_attention.3} parent=19 // pred_fallthru
          _
        // Predicated region
        $region25: #{causal_self_attention.3} parent=19 // pred_check
          %p201 = pneg %p108
        $region26: #{causal_self_attention.3} parent=19 // pred_check_branch
          %203 = sbr.rel (%p201) target = $region28
        $region27: #{causal_self_attention.3} parent=19 // pred_region
          %p204 = scmp.lt.s32.totalorder %s21, 2
          %s205 = scalar_select %p204, %s21, 2
          %s206 = scalar_lea.vmem %s2, %s205
        $region28: #{causal_self_attention.3} parent=19 // pred_fallthru
          _
      $region20: #{causal_self_attention.3} parent=5 // pred_fallthru
        _
      %p207 = scmp.le.s32.totalorder 1, %s13
      %p208 = scmp.lt.s32.totalorder %s13, 4
      %p209 = pnand %p207, %p208
      %p210 = pneg %p209
      // Predicated region
      $region29: #{causal_self_attention.3} parent=5 // pred_check
        _
      $region30: #{causal_self_attention.3} parent=5 // pred_check_branch
        %212 = sbr.rel (%p209) target = $region32
      $region31: #{causal_self_attention.3} parent=5 // pred_region
        %s213 = ssub.s32 %s13, 1
        // Predicated region
        $region33: #{causal_self_attention.3} parent=31 // pred_check
          %p214 = pneg %p60
        $region34: #{causal_self_attention.3} parent=31 // pred_check_branch
          %216 = sbr.rel (%p214) target = $region36
        $region35: #{causal_self_attention.3} parent=31 // pred_region
          %217 = dma.done [#allocation4], 512
        $region36: #{causal_self_attention.3} parent=31 // pred_fallthru
          _
        %s218 = sand.u32 %s75, 1
        %s219 = scalar_lea.sflag [#allocation6], %s218
        %s220 = sand.u32 %s75, 1
        %s221 = smul.addr %s220, 128
        %s222 = scalar_lea.vmem [#allocation5], %s221
        // Predicated region
        $region37: #{causal_self_attention.3} parent=31 // pred_check
          %p223 = pneg %p88
        $region38: #{causal_self_attention.3} parent=31 // pred_check_branch
          %225 = sbr.rel (%p223) target = $region40
        $region39: #{causal_self_attention.3} parent=31 // pred_region
          %226 = dma.done %s219, 2048
        $region40: #{causal_self_attention.3} parent=31 // pred_fallthru
          _
        %p227 = pneg %p60
        %p228 = pneg %p57
        %s229 = sand.u32 %s75, 1
        %s230 = scalar_lea.sflag [#allocation6], %s229
        %s231 = sand.u32 %s75, 1
        %s232 = smul.addr %s231, 128
        %s233 = scalar_lea.vmem [#allocation5], %s232
        %p234 = pneg %p88
        %p235 = pneg %p85
        %p236 = scmp.lt.s32.totalorder %s24, 2
        %s237 = scalar_select %p236, %s24, 2
        %s238 = scalar_lea.vmem %s2, %s237
        %p239 = pneg %p114
        %p240 = pneg %p111
        %p241 = pneg %p142
        %p242 = pneg %p139
        %s243 = sand.u32 %s129, 1
        %s244 = sand.u32 %s129, 1
        %s245 = smul.addr %s244, 32
        %s246 = scalar_lea.vmem [#allocation7], %s245
        %s247 = smul.u32 4, %s23
        %s248 = smul.u32 16, %s25
        %p249 = scmp.lt.s32.totalorder %s24, 2
        %s250 = scalar_select %p249, %s24, 2
        %s251 = scalar_lea.vmem %s2, %s250
        %s252 = smul.u32 4, %s23
        %p253 = scmp.eq.s32.totalorder %s25, 0
        // Predicated region
        $region41: #{causal_self_attention.3} parent=31 // pred_check
          %p254 = pneg %p253
        $region42: #{causal_self_attention.3} parent=31 // pred_check_branch
          %256 = sbr.rel (%p254) target = $region44
        $region43: #{causal_self_attention.3} parent=31 // pred_region
          %257 = vst [vmem:[#allocation2] sm:$0xff] 0.0
          %258 = vst [vmem:[#allocation2 + $0x8] sm:$0xff] 0.0
          %259 = vst [vmem:[#allocation2 + $0x10] sm:$0xff] 0.0
          %260 = vst [vmem:[#allocation2 + $0x18] sm:$0xff] 0.0
        $region44: #{causal_self_attention.3} parent=31 // pred_fallthru
          _
        %v261 = vld [vmem:[#allocation3] sm:$0xff]
        %v262 = vld [vmem:[#allocation3 + $0x8] sm:$0xff]
        %v263 = vld [vmem:[#allocation3 + $0x10] sm:$0xff]
        %v264 = vld [vmem:[#allocation3 + $0x18] sm:$0xff]
        %v265 = vld [vmem:[%s222] sm:$0xff]
        %v266 = vld [vmem:[%s222 + $0x8] sm:$0xff]
        %v267 = vld [vmem:[%s222 + $0x10] sm:$0xff]
        %v268 = vld [vmem:[%s222 + $0x18] sm:$0xff]
        %v269 = vld [vmem:[%s222 + $0x20] sm:$0xff]
        %v270 = vld [vmem:[%s222 + $0x28] sm:$0xff]
        %v271 = vld [vmem:[%s222 + $0x30] sm:$0xff]
        %v272 = vld [vmem:[%s222 + $0x38] sm:$0xff]
        %v273 = vld [vmem:[%s222 + $0x40] sm:$0xff]
        %v274 = vld [vmem:[%s222 + $0x48] sm:$0xff]
        %v275 = vld [vmem:[%s222 + $0x50] sm:$0xff]
        %v276 = vld [vmem:[%s222 + $0x58] sm:$0xff]
        %v277 = vld [vmem:[%s222 + $0x60] sm:$0xff]
        %v278 = vld [vmem:[%s222 + $0x68] sm:$0xff]
        %v279 = vld [vmem:[%s222 + $0x70] sm:$0xff]
        %v280 = vld [vmem:[%s222 + $0x78] sm:$0xff]
        %v281 = vld [vmem:[#allocation2] sm:$0xff]
        %v282 = vld [vmem:[#allocation2 + $0x8] sm:$0xff]
        %v283 = vld [vmem:[#allocation2 + $0x10] sm:$0xff]
        %v284 = vld [vmem:[#allocation2 + $0x18] sm:$0xff]
        %285 = vmatprep.subr.mxu0 0.0
        %286 = vmatpush1.msra.mxu0 %v265
        %287 = vmatprep.subr.mxu0 0.0
        %288 = vmatpush1.msra.mxu0 %v266
        %289 = vmatprep.subr.mxu0 0.0
        %290 = vmatpush1.msra.mxu0 %v267
        %291 = vmatprep.subr.mxu0 0.0
        %292 = vmatpush1.msra.mxu0 %v268
        %293 = vmatprep.subr.mxu0 0.0
        %294 = vmatpush1.msra.mxu0 %v269
        %295 = vmatprep.subr.mxu0 0.0
        %296 = vmatpush1.msra.mxu0 %v270
        %297 = vmatprep.subr.mxu0 0.0
        %298 = vmatpush1.msra.mxu0 %v271
        %299 = vmatprep.subr.mxu0 0.0
        %300 = vmatpush1.msra.mxu0 %v272
        %301 = vmatprep.subr.mxu0 0.0
        %302 = vmatpush1.msra.mxu0 %v273
        %303 = vmatprep.subr.mxu0 0.0
        %304 = vmatpush1.msra.mxu0 %v274
        %305 = vmatprep.subr.mxu0 0.0
        %306 = vmatpush1.msra.mxu0 %v275
        %307 = vmatprep.subr.mxu0 0.0
        %308 = vmatpush1.msra.mxu0 %v276
        %309 = vmatprep.subr.mxu0 0.0
        %310 = vmatpush1.msra.mxu0 %v277
        %311 = vmatprep.subr.mxu0 0.0
        %312 = vmatpush1.msra.mxu0 %v278
        %313 = vmatprep.subr.mxu0 0.0
        %314 = vmatpush1.msra.mxu0 %v279
        %315 = vmatprep.subr.mxu0 0.0
        %316 = vmatpush1.msra.mxu0 %v280
        %317 = vmatprep.subr.mxu0 0.0
        %318 = vmatpush1.msra.mxu0 0.0
        %319 = vmatprep.subr.mxu0 0.0
        %320 = vmatpush1.msra.mxu0 0.0
        %321 = vmatprep.subr.mxu0 0.0
        %322 = vmatpush1.msra.mxu0 0.0
        %323 = vmatprep.subr.mxu0 0.0
        %324 = vmatpush1.msra.mxu0 0.0
        %325 = vmatprep.subr.mxu0 0.0
        %326 = vmatpush1.msra.mxu0 0.0
        %327 = vmatprep.subr.mxu0 0.0
        %328 = vmatpush1.msra.mxu0 0.0
        %329 = vmatprep.subr.mxu0 0.0
        %330 = vmatpush1.msra.mxu0 0.0
        %331 = vmatprep.subr.mxu0 0.0
        %332 = vmatpush1.msra.mxu0 0.0
        %333 = vmatprep.subr.mxu0 0.0
        %334 = vmatpush1.msra.mxu0 0.0
        %335 = vmatprep.subr.mxu0 0.0
        %336 = vmatpush1.msra.mxu0 0.0
        %337 = vmatprep.subr.mxu0 0.0
        %338 = vmatpush1.msra.mxu0 0.0
        %339 = vmatprep.subr.mxu0 0.0
        %340 = vmatpush1.msra.mxu0 0.0
        %341 = vmatprep.subr.mxu0 0.0
        %342 = vmatpush1.msra.mxu0 0.0
        %343 = vmatprep.subr.mxu0 0.0
        %344 = vmatpush1.msra.mxu0 0.0
        %345 = vmatprep.subr.mxu0 0.0
        %346 = vmatpush1.msra.mxu0 0.0
        %347 = vmatprep.subr.mxu0 0.0
        %348 = vmatpush1.msra.mxu0 0.0
        %349 = vmatprep.mubr.f32.mxu0 0.0
        %350 = vmatmul.mubr.f32.gmra.mrb[0].mxu0 %v261
        %v351 = vpop.f32.mrb[0].mxu0
        %v352 = vadd.f32 0.0, %v351
        %v353 = vpop.f32.mrb[0].mxu0
        %354 = vmatprep.mubr.f32.mxu0 0.0
        %355 = vmatmul.mubr.f32.gmra.mrb[0].mxu0 %v262
        %v356 = vpop.f32.mrb[0].mxu0
        %v357 = vadd.f32 0.0, %v356
        %v358 = vpop.f32.mrb[0].mxu0
        %359 = vmatprep.mubr.f32.mxu0 0.0
        %360 = vmatmul.mubr.f32.gmra.mrb[0].mxu0 %v263
        %v361 = vpop.f32.mrb[0].mxu0
        %v362 = vadd.f32 0.0, %v361
        %v363 = vpop.f32.mrb[0].mxu0
        %364 = vmatprep.mubr.f32.mxu0 0.0
        %365 = vmatmul.mubr.f32.gmra.mrb[0].mxu0 %v264
        %v366 = vpop.f32.mrb[0].mxu0
        %v367 = vadd.f32 0.0, %v366
        %v368 = vpop.f32.mrb[0].mxu0
        %369 = vdwg.mxu0
        %v370 = vadd.f32 %v281, %v352
        %v371 = vadd.f32 %v282, %v357
        %v372 = vadd.f32 %v283, %v362
        %v373 = vadd.f32 %v284, %v367
        %374 = vst [vmem:[#allocation2] sm:$0xff] %v370
        %375 = vst [vmem:[#allocation2 + $0x8] sm:$0xff] %v371
        %376 = vst [vmem:[#allocation2 + $0x10] sm:$0xff] %v372
        %377 = vst [vmem:[#allocation2 + $0x18] sm:$0xff] %v373
        // Predicated region
        $region45: #{causal_self_attention.3} parent=31 // pred_check
          %p378 = pneg %p253
        $region46: #{causal_self_attention.3} parent=31 // pred_check_branch
          %380 = sbr.rel (%p378) target = $region48
        $region47: #{causal_self_attention.3} parent=31 // pred_region
          %v381 = vld [vmem:[#allocation2] sm:$0xff]
          %v382 = vld [vmem:[#allocation2 + $0x8] sm:$0xff]
          %v383 = vld [vmem:[#allocation2 + $0x10] sm:$0xff]
          %v384 = vld [vmem:[#allocation2 + $0x18] sm:$0xff]
          %v385 = vld [vmem:[%s251] sm:$0x1]
          %v387 = vlaneseq
          %v388 = vshrl.u32 %v387, 7
          %v389 = vsub.s32 0, %v388
          %v390 = vrot.slane %v385, %v389
          %v392 = vadd.f32 %v381, %v390
          %v393 = vadd.f32 %v382, %v390
          %v394 = vadd.f32 %v383, %v390
          %v395 = vadd.f32 %v384, %v390
          %396 = vst [vmem:[%s246] sm:$0xff] %v392
          %397 = vst [vmem:[%s246 + $0x8] sm:$0xff] %v393
          %398 = vst [vmem:[%s246 + $0x10] sm:$0xff] %v394
          %399 = vst [vmem:[%s246 + $0x18] sm:$0xff] %v395
        $region48: #{causal_self_attention.3} parent=31 // pred_fallthru
          _
        %s400 = sand.u32 %s129, 1
        %s401 = sand.u32 %s129, 1
        %s402 = smul.addr %s401, 32
        %s403 = scalar_lea.vmem [#allocation7], %s402
        // Predicated region
        $region49: #{causal_self_attention.3} parent=31 // pred_check
          %p404 = pneg %p139
        $region50: #{causal_self_attention.3} parent=31 // pred_check_branch
          %406 = sbr.rel (%p404) target = $region52
        $region51: #{causal_self_attention.3} parent=31 // pred_region
          %s407 = smul.u32 4, %s23
          %s408 = smul.addr %s407, 3
          %s409 = sadd.s32 %s24, %s408
          %s410 = smul.addr %s409, 8
          %s411 = scalar_lea.vmem %s3, %s410
          // Predicated region
          $region53: #{causal_self_attention.3} parent=51 // pred_check
            _
          $region54: #{causal_self_attention.3} parent=51 // pred_check_branch
            %413 = sbr.rel (0) target = $region56
          $region55: #{causal_self_attention.3} parent=51 // pred_region
            // Predicated region
            $region57: #{causal_self_attention.3} parent=55 // pred_check
              _
            $region58: #{causal_self_attention.3} parent=55 // pred_check_branch
              %415 = sbr.rel (0) target = $region60
            $region59: #{causal_self_attention.3} parent=55 // pred_region
              // Predicated region
              $region72: #{causal_self_attention.3} parent=59 // pred_check
                _
              $region73: #{causal_self_attention.3} parent=59 // pred_check_branch
                %436 = sbr.rel (0) target = $region75
              $region74: #{causal_self_attention.3} parent=59 // pred_region
                loop: start=0, step=1, limit=1
                $region76: #{causal_self_attention.3} parent=74 // loop_pre_header
                  _
                $region77: #{causal_self_attention.3} parent=74 // loop_header
                  %s438 = sphi 0, %s442
                  %p439 = scmp.ge.s32.totalorder %s438, 1
                  %s443 = sphi %s403, %s403
                  %s444 = sphi %s411, %s411
                $region78: #{causal_self_attention.3} parent=74 // loop_header_branch
                  %441 = sbr.rel (%p439) target = $region82
                $region79: #{causal_self_attention.3} parent=74 // loop_body
                  %v445 = vld [vmem:[%s443] sm:$0xff]
                  %446 = vst [vmem:[%s444] sm:$0xff] %v445
                  %v447 = vld [vmem:[%s443 + $0x8] sm:$0xff]
                  %448 = vst [vmem:[%s444 + $0x18] sm:$0xff] %v447
                  %v449 = vld [vmem:[%s443 + $0x10] sm:$0xff]
                  %450 = vst [vmem:[%s444 + $0x30] sm:$0xff] %v449
                  %v451 = vld [vmem:[%s443 + $0x18] sm:$0xff]
                  %452 = vst [vmem:[%s444 + $0x48] sm:$0xff] %v451
                $region80: #{causal_self_attention.3} parent=74 // loop_footer
                  %s442 = sadd.s32 1, %s438
                $region81: #{causal_self_attention.3} parent=74 // loop_footer_branch
                  %437 = sbr.rel target = $region77
                $region82: #{causal_self_attention.3} parent=74 // loop_exit
                  _
              $region75: #{causal_self_attention.3} parent=59 // pred_fallthru
                _
              // Predicated region
              $region83: #{causal_self_attention.3} parent=59 // pred_check
                _
              $region84: #{causal_self_attention.3} parent=59 // pred_check_branch
                %454 = sbr.rel target = $region86
              $region85: #{causal_self_attention.3} parent=59 // pred_region
                _
              $region86: #{causal_self_attention.3} parent=59 // pred_fallthru
                _
            $region60: #{causal_self_attention.3} parent=55 // pred_fallthru
              _
            // Predicated region
            $region61: #{causal_self_attention.3} parent=55 // pred_check
              _
            $region62: #{causal_self_attention.3} parent=55 // pred_check_branch
              %417 = sbr.rel target = $region64
            $region63: #{causal_self_attention.3} parent=55 // pred_region
              loop: start=0, step=1, limit=1
              $region65: #{causal_self_attention.3} parent=63 // loop_pre_header
                _
              $region66: #{causal_self_attention.3} parent=63 // loop_header
                %s420 = sphi 0, %s424
                %p421 = scmp.ge.s32.totalorder %s420, 1
                %s425 = sphi %s403, %s403
                %s426 = sphi %s411, %s411
              $region67: #{causal_self_attention.3} parent=63 // loop_header_branch
                %423 = sbr.rel (%p421) target = $region71
              $region68: #{causal_self_attention.3} parent=63 // loop_body
                %v427 = vld [vmem:[%s425] sm:$0xff]
                %428 = vst [vmem:[%s426] sm:$0xff] %v427
                %v429 = vld [vmem:[%s425 + $0x8] sm:$0xff]
                %430 = vst [vmem:[%s426 + $0x18] sm:$0xff] %v429
                %v431 = vld [vmem:[%s425 + $0x10] sm:$0xff]
                %432 = vst [vmem:[%s426 + $0x30] sm:$0xff] %v431
                %v433 = vld [vmem:[%s425 + $0x18] sm:$0xff]
                %434 = vst [vmem:[%s426 + $0x48] sm:$0xff] %v433
              $region69: #{causal_self_attention.3} parent=63 // loop_footer
                %s424 = sadd.s32 1, %s420
              $region70: #{causal_self_attention.3} parent=63 // loop_footer_branch
                %419 = sbr.rel target = $region66
              $region71: #{causal_self_attention.3} parent=63 // loop_exit
                _
            $region64: #{causal_self_attention.3} parent=55 // pred_fallthru
              _
          $region56: #{causal_self_attention.3} parent=51 // pred_fallthru
            _
          %455 = vnop
        $region52: #{causal_self_attention.3} parent=31 // pred_fallthru
          _
      $region32: #{causal_self_attention.3} parent=5 // pred_fallthru
        _
      %p456 = scmp.le.s32.totalorder 2, %s13
      // Predicated region
      $region87: #{causal_self_attention.3} parent=5 // pred_check
        %p457 = pneg %p456
      $region88: #{causal_self_attention.3} parent=5 // pred_check_branch
        %459 = sbr.rel (%p457) target = $region90
      $region89: #{causal_self_attention.3} parent=5 // pred_region
        %s460 = ssub.s32 %s13, 2
        // Predicated region
        $region91: #{causal_self_attention.3} parent=89 // pred_check
          %p461 = pneg %p145
        $region92: #{causal_self_attention.3} parent=89 // pred_check_branch
          %463 = sbr.rel (%p461) target = $region94
        $region93: #{causal_self_attention.3} parent=89 // pred_region
          %s464 = sand.u32 %s130, 1
          %s465 = sand.u32 %s130, 1
          %s466 = smul.addr %s465, 32
          %s467 = scalar_lea.vmem [#allocation7], %s466
        $region94: #{causal_self_attention.3} parent=89 // pred_fallthru
          _
      $region90: #{causal_self_attention.3} parent=5 // pred_fallthru
        _
    $region6: #{causal_self_attention.3} parent=1 // loop_footer
      %s17 = sadd.s32 1, %s13
    $region7: #{causal_self_attention.3} parent=1 // loop_footer_branch
      %12 = sbr.rel target = $region3
    $region8: #{causal_self_attention.3} parent=1 // loop_exit
      _
    %468 = vsyncpa [#allocation4], 1
    %s469 = scalar_lea.sflag [#allocation4], 1
    %470 = vsyncpa %s469, 1
    %471 = vsyncpa [#allocation6], 1
    %s472 = scalar_lea.sflag [#allocation6], 1
    %473 = vsyncpa %s472, 1

// kernel: causal_self_attention.4
$region0: #{causal_self_attention.4}
  #allocation0 [shape = 'u32[]', space=smem, size = 0x4, offset = 0x4, fixed_abs, tag = 'smem constant byte address 0x4 - core index']
  #allocation1 [shape = 'u32[144,128]{1,0:T(1,128)}', space=vmem, size = 0x12000, scoped, tag = 'internal scratch']
  #allocation2 [shape = 'f32[16,4]{1,0:T(8,128)}', space=vmem, size = 0x2000, scoped, tag = 'scratch operand']
  #allocation3 [shape = 'f32[16,4]{1,0:T(8,128)}', space=vmem, size = 0x2000, scoped, tag = 'scratch operand']
  #allocation4 [shape = 'f32[16,128]{1,0:T(8,128)}', space=vmem, size = 0x2000, scoped, tag = 'scratch operand']
  %s0 = inlined_call_operand.vmem [shape: f32[2,16,384], index: 0, kind: input, shape index: {}, may-alias: {0,1,2}]
  %s1 = inlined_call_operand.vmem [shape: f32[2,16,384], index: 1, kind: input, shape index: {}, may-alias: {0,1,2}]
  %s2 = inlined_call_operand.vmem [shape: f32[2,16,384], index: 2, kind: input, shape index: {}, may-alias: {0,1,2}]
  %s3 = inlined_call_operand.vmem [shape: f32[2,16,128], index: 3, kind: output, shape index: {}]
  %s4 = sld [smem:[#allocation0]]
  $region175: #{causal_self_attention.4} parent=0
    _
  %s6 = ssub.s32 1, %s4
  %s7 = scalar_select 0, %s6, %s4
  $region1: #{causal_self_attention.4} parent=0
    #allocation5 [shape = 'u8[16384]{0}', space=vmem, size = 0x4000, scoped, tag = 'input window, operand 0']
    #allocation6 [shape = 'u8[16384]{0}', space=vmem, size = 0x4000, scoped, tag = 'input window, operand 1']
    #allocation7 [shape = 'u8[16384]{0}', space=vmem, size = 0x4000, scoped, tag = 'input window, operand 2']
    loop: start=0, step=1, limit=4
    $region2: #{causal_self_attention.4} parent=1 // loop_pre_header
      _
    $region3: #{causal_self_attention.4} parent=1 // loop_header
      %s9 = sphi 0, %s13
      %p10 = scmp.ge.s32.totalorder %s9, 4
      %s16 = sphi 0, %s35
      %s17 = sphi 0, %s31
      %s18 = sphi 0, %s27
      %s19 = sphi 0, %s16
      %s20 = sphi 0, %s17
      %s21 = sphi 0, %s18
      %s22 = sphi 0, %s19
      %s23 = sphi 0, %s20
      %s24 = sphi 0, %s21
      %s40 = sphi 0, %s42
      %s43 = sphi 0, %s40
      %s44 = sphi 0, %s43
      %s60 = sphi 0, %s44
      %s72 = sphi 0, %s74
      %s75 = sphi 0, %s72
      %s76 = sphi 0, %s75
      %s92 = sphi 0, %s76
      %s104 = sphi 0, %s106
      %s107 = sphi 0, %s104
      %s108 = sphi 0, %s107
      %s124 = sphi 0, %s108
      %s132 = sphi 0, %s134
      %s135 = sphi 0, %s132
      %s136 = sphi 0, %s135
      %s152 = sphi 0, %s136
    $region4: #{causal_self_attention.4} parent=1 // loop_header_branch
      %12 = sbr.rel (%p10) target = $region8
    $region5: #{causal_self_attention.4} parent=1 // loop_body
      %s14 = ssub.s32 %s9, 1
      %s15 = ssub.s32 %s9, 2
      %s25 = sadd.s32 1, %s18
      %p26 = scmp.ge.s32.totalorder %s25, 1
      %s27 = scalar_select %p26, 0, %s25
      %s28 = sadd.s32 1, %s17
      %s29 = scalar_select %p26, %s28, %s17
      %p30 = scmp.ge.s32.totalorder %s29, 1
      %s31 = scalar_select %p30, 0, %s29
      %s32 = sadd.s32 1, %s16
      %s33 = scalar_select %p30, %s32, %s16
      %p34 = scmp.ge.s32.totalorder %s33, 2
      %s35 = scalar_select %p34, 0, %s33
      %s36 = ssub.s32 %s16, %s35
      %s37 = ssub.s32 %s17, %s31
      %s38 = sor.u32 %s36, %s37
      %p39 = scmp.eq.s32.totalorder %s38, 0
      %s41 = sadd.s32 %s40, 1
      %s42 = scalar_select %p39, %s40, %s41
      %p45 = pneg %p39
      %p46 = scmp.eq.s32.totalorder %s9, 1
      %p47 = por %p45, %p46
      %p48 = scmp.ne.s32.totalorder %s40, %s43
      %p49 = scmp.eq.s32.totalorder %s9, 0
      %p50 = por %p48, %p49
      %p51 = scmp.ne.s32.totalorder %s40, %s43
      %p52 = scmp.eq.s32.totalorder %s14, 1
      %p53 = por %p51, %p52
      %p54 = scmp.ne.s32.totalorder %s43, %s44
      %p55 = scmp.eq.s32.totalorder %s14, 0
      %p56 = por %p54, %p55
      %p57 = scmp.ne.s32.totalorder %s43, %s44
      %p58 = scmp.eq.s32.totalorder %s15, 1
      %p59 = por %p57, %p58
      %p61 = scmp.ne.s32.totalorder %s44, %s60
      %p62 = scmp.eq.s32.totalorder %s15, 0
      %p63 = por %p61, %p62
      %p64 = scmp.lt.s32.totalorder %s18, %s17
      %s65 = scalar_select %p64, %s18, %s17
      %p66 = scmp.lt.s32.totalorder %s27, %s31
      %s67 = scalar_select %p66, %s27, %s31
      %s68 = ssub.s32 %s16, %s35
      %s69 = ssub.s32 %s65, %s67
      %s70 = sor.u32 %s68, %s69
      %p71 = scmp.eq.s32.totalorder %s70, 0
      %s73 = sadd.s32 %s72, 1
      %s74 = scalar_select %p71, %s72, %s73
      %p77 = pneg %p71
      %p78 = scmp.eq.s32.totalorder %s9, 1
      %p79 = por %p77, %p78
      %p80 = scmp.ne.s32.totalorder %s72, %s75
      %p81 = scmp.eq.s32.totalorder %s9, 0
      %p82 = por %p80, %p81
      %p83 = scmp.ne.s32.totalorder %s72, %s75
      %p84 = scmp.eq.s32.totalorder %s14, 1
      %p85 = por %p83, %p84
      %p86 = scmp.ne.s32.totalorder %s75, %s76
      %p87 = scmp.eq.s32.totalorder %s14, 0
      %p88 = por %p86, %p87
      %p89 = scmp.ne.s32.totalorder %s75, %s76
      %p90 = scmp.eq.s32.totalorder %s15, 1
      %p91 = por %p89, %p90
      %p93 = scmp.ne.s32.totalorder %s76, %s92
      %p94 = scmp.eq.s32.totalorder %s15, 0
      %p95 = por %p93, %p94
      %p96 = scmp.lt.s32.totalorder %s18, %s17
      %s97 = scalar_select %p96, %s18, %s17
      %p98 = scmp.lt.s32.totalorder %s27, %s31
      %s99 = scalar_select %p98, %s27, %s31
      %s100 = ssub.s32 %s16, %s35
      %s101 = ssub.s32 %s97, %s99
      %s102 = sor.u32 %s100, %s101
      %p103 = scmp.eq.s32.totalorder %s102, 0
      %s105 = sadd.s32 %s104, 1
      %s106 = scalar_select %p103, %s104, %s105
      %p109 = pneg %p103
      %p110 = scmp.eq.s32.totalorder %s9, 1
      %p111 = por %p109, %p110
      %p112 = scmp.ne.s32.totalorder %s104, %s107
      %p113 = scmp.eq.s32.totalorder %s9, 0
      %p114 = por %p112, %p113
      %p115 = scmp.ne.s32.totalorder %s104, %s107
      %p116 = scmp.eq.s32.totalorder %s14, 1
      %p117 = por %p115, %p116
      %p118 = scmp.ne.s32.totalorder %s107, %s108
      %p119 = scmp.eq.s32.totalorder %s14, 0
      %p120 = por %p118, %p119
      %p121 = scmp.ne.s32.totalorder %s107, %s108
      %p122 = scmp.eq.s32.totalorder %s15, 1
      %p123 = por %p121, %p122
      %p125 = scmp.ne.s32.totalorder %s108, %s124
      %p126 = scmp.eq.s32.totalorder %s15, 0
      %p127 = por %p125, %p126
      %s128 = ssub.s32 %s16, %s35
      %s129 = ssub.s32 %s17, %s31
      %s130 = sor.u32 %s128, %s129
      %p131 = scmp.eq.s32.totalorder %s130, 0
      %s133 = sadd.s32 %s132, 1
      %s134 = scalar_select %p131, %s132, %s133
      %p137 = pneg %p131
      %p138 = scmp.eq.s32.totalorder %s9, 1
      %p139 = por %p137, %p138
      %p140 = scmp.ne.s32.totalorder %s132, %s135
      %p141 = scmp.eq.s32.totalorder %s9, 0
      %p142 = por %p140, %p141
      %p143 = scmp.ne.s32.totalorder %s132, %s135
      %p144 = scmp.eq.s32.totalorder %s14, 1
      %p145 = por %p143, %p144
      %p146 = scmp.ne.s32.totalorder %s135, %s136
      %p147 = scmp.eq.s32.totalorder %s14, 0
      %p148 = por %p146, %p147
      %p149 = scmp.ne.s32.totalorder %s135, %s136
      %p150 = scmp.eq.s32.totalorder %s15, 1
      %p151 = por %p149, %p150
      %p153 = scmp.ne.s32.totalorder %s136, %s152
      %p154 = scmp.eq.s32.totalorder %s15, 0
      %p155 = por %p153, %p154
      %p156 = scmp.le.s32.totalorder 1, %s9
      %p157 = scmp.lt.s32.totalorder %s9, 3
      %p158 = pnand %p156, %p157
      %p159 = pneg %p158
      // Predicated region
      $region9: #{causal_self_attention.4} parent=5 // pred_check
        _
      $region10: #{causal_self_attention.4} parent=5 // pred_check_branch
        %161 = sbr.rel (%p158) target = $region12
      $region11: #{causal_self_attention.4} parent=5 // pred_region
        %s162 = ssub.s32 %s9, 1
      $region12: #{causal_self_attention.4} parent=5 // pred_fallthru
        _
      %p163 = scmp.lt.s32.totalorder %s9, 2
      // Predicated region
      $region13: #{causal_self_attention.4} parent=5 // pred_check
        %p164 = pneg %p163
      $region14: #{causal_self_attention.4} parent=5 // pred_check_branch
        %166 = sbr.rel (%p164) target = $region16
      $region15: #{causal_self_attention.4} parent=5 // pred_region
        // Predicated region
        $region17: #{causal_self_attention.4} parent=15 // pred_check
          %p167 = pneg %p50
        $region18: #{causal_self_attention.4} parent=15 // pred_check_branch
          %169 = sbr.rel (%p167) target = $region20
        $region19: #{causal_self_attention.4} parent=15 // pred_region
          %s170 = sand.u32 %s40, 1
          %s171 = sand.u32 %s40, 1
          %s172 = smul.addr %s171, 16
          %s173 = scalar_lea.vmem [#allocation5], %s172
          %s174 = smul.u32 2, %s17
          %s175 = smul.addr %s174, 3
          %s176 = smul.addr %s16, 6
          %s177 = sadd.s32 %s175, %s176
          %s178 = smul.addr %s177, 8
          %s179 = scalar_lea.vmem %s0, %s178
          // Predicated region
          $region21: #{causal_self_attention.4} parent=19 // pred_check
            _
          $region22: #{causal_self_attention.4} parent=19 // pred_check_branch
            %181 = sbr.rel (0) target = $region24
          $region23: #{causal_self_attention.4} parent=19 // pred_region
            // Predicated region
            $region25: #{causal_self_attention.4} parent=23 // pred_check
              _
            $region26: #{causal_self_attention.4} parent=23 // pred_check_branch
              %183 = sbr.rel (0) target = $region28
            $region27: #{causal_self_attention.4} parent=23 // pred_region
              // Predicated region
              $region40: #{causal_self_attention.4} parent=27 // pred_check
                _
              $region41: #{causal_self_attention.4} parent=27 // pred_check_branch
                %200 = sbr.rel (0) target = $region43
              $region42: #{causal_self_attention.4} parent=27 // pred_region
                loop: start=0, step=1, limit=1
                $region44: #{causal_self_attention.4} parent=42 // loop_pre_header
                  _
                $region45: #{causal_self_attention.4} parent=42 // loop_header
                  %s202 = sphi 0, %s206
                  %p203 = scmp.ge.s32.totalorder %s202, 1
                  %s207 = sphi %s179, %s179
                  %s208 = sphi %s173, %s173
                $region46: #{causal_self_attention.4} parent=42 // loop_header_branch
                  %205 = sbr.rel (%p203) target = $region50
                $region47: #{causal_self_attention.4} parent=42 // loop_body
                  %v209 = vld [vmem:[%s207] sm:$0xff]
                  %210 = vst [vmem:[%s208] sm:$0xff] %v209
                  %v211 = vld [vmem:[%s207 + $0x18] sm:$0xff]
                  %212 = vst [vmem:[%s208 + $0x8] sm:$0xff] %v211
                $region48: #{causal_self_attention.4} parent=42 // loop_footer
                  %s206 = sadd.s32 1, %s202
                $region49: #{causal_self_attention.4} parent=42 // loop_footer_branch
                  %201 = sbr.rel target = $region45
                $region50: #{causal_self_attention.4} parent=42 // loop_exit
                  _
              $region43: #{causal_self_attention.4} parent=27 // pred_fallthru
                _
              // Predicated region
              $region51: #{causal_self_attention.4} parent=27 // pred_check
                _
              $region52: #{causal_self_attention.4} parent=27 // pred_check_branch
                %214 = sbr.rel target = $region54
              $region53: #{causal_self_attention.4} parent=27 // pred_region
                _
              $region54: #{causal_self_attention.4} parent=27 // pred_fallthru
                _
            $region28: #{causal_self_attention.4} parent=23 // pred_fallthru
              _
            // Predicated region
            $region29: #{causal_self_attention.4} parent=23 // pred_check
              _
            $region30: #{causal_self_attention.4} parent=23 // pred_check_branch
              %185 = sbr.rel target = $region32
            $region31: #{causal_self_attention.4} parent=23 // pred_region
              loop: start=0, step=1, limit=1
              $region33: #{causal_self_attention.4} parent=31 // loop_pre_header
                _
              $region34: #{causal_self_attention.4} parent=31 // loop_header
                %s188 = sphi 0, %s192
                %p189 = scmp.ge.s32.totalorder %s188, 1
                %s193 = sphi %s179, %s179
                %s194 = sphi %s173, %s173
              $region35: #{causal_self_attention.4} parent=31 // loop_header_branch
                %191 = sbr.rel (%p189) target = $region39
              $region36: #{causal_self_attention.4} parent=31 // loop_body
                %v195 = vld [vmem:[%s193] sm:$0xff]
                %196 = vst [vmem:[%s194] sm:$0xff] %v195
                %v197 = vld [vmem:[%s193 + $0x18] sm:$0xff]
                %198 = vst [vmem:[%s194 + $0x8] sm:$0xff] %v197
              $region37: #{causal_self_attention.4} parent=31 // loop_footer
                %s192 = sadd.s32 1, %s188
              $region38: #{causal_self_attention.4} parent=31 // loop_footer_branch
                %187 = sbr.rel target = $region34
              $region39: #{causal_self_attention.4} parent=31 // loop_exit
                _
            $region32: #{causal_self_attention.4} parent=23 // pred_fallthru
              _
          $region24: #{causal_self_attention.4} parent=19 // pred_fallthru
            _
          %215 = vnop
        $region20: #{causal_self_attention.4} parent=15 // pred_fallthru
          _
        // Predicated region
        $region55: #{causal_self_attention.4} parent=15 // pred_check
          %p216 = pneg %p82
        $region56: #{causal_self_attention.4} parent=15 // pred_check_branch
          %218 = sbr.rel (%p216) target = $region58
        $region57: #{causal_self_attention.4} parent=15 // pred_region
          %s219 = sand.u32 %s72, 1
          %s220 = sand.u32 %s72, 1
          %s221 = smul.addr %s220, 16
          %s222 = scalar_lea.vmem [#allocation6], %s221
          %p223 = scmp.lt.s32.totalorder %s18, %s17
          %s224 = scalar_select %p223, %s18, %s17
          %s225 = smul.u32 2, %s224
          %s226 = smul.addr %s225, 3
          %s227 = sadd.s32 1, %s226
          %s228 = smul.addr %s16, 6
          %s229 = sadd.s32 %s227, %s228
          %s230 = smul.addr %s229, 8
          %s231 = scalar_lea.vmem %s1, %s230
          // Predicated region
          $region59: #{causal_self_attention.4} parent=57 // pred_check
            _
          $region60: #{causal_self_attention.4} parent=57 // pred_check_branch
            %233 = sbr.rel (0) target = $region62
          $region61: #{causal_self_attention.4} parent=57 // pred_region
            // Predicated region
            $region63: #{causal_self_attention.4} parent=61 // pred_check
              _
            $region64: #{causal_self_attention.4} parent=61 // pred_check_branch
              %235 = sbr.rel (0) target = $region66
            $region65: #{causal_self_attention.4} parent=61 // pred_region
              // Predicated region
              $region78: #{causal_self_attention.4} parent=65 // pred_check
                _
              $region79: #{causal_self_attention.4} parent=65 // pred_check_branch
                %252 = sbr.rel (0) target = $region81
              $region80: #{causal_self_attention.4} parent=65 // pred_region
                loop: start=0, step=1, limit=1
                $region82: #{causal_self_attention.4} parent=80 // loop_pre_header
                  _
                $region83: #{causal_self_attention.4} parent=80 // loop_header
                  %s254 = sphi 0, %s258
                  %p255 = scmp.ge.s32.totalorder %s254, 1
                  %s259 = sphi %s231, %s231
                  %s260 = sphi %s222, %s222
                $region84: #{causal_self_attention.4} parent=80 // loop_header_branch
                  %257 = sbr.rel (%p255) target = $region88
                $region85: #{causal_self_attention.4} parent=80 // loop_body
                  %v261 = vld [vmem:[%s259] sm:$0xff]
                  %262 = vst [vmem:[%s260] sm:$0xff] %v261
                  %v263 = vld [vmem:[%s259 + $0x18] sm:$0xff]
                  %264 = vst [vmem:[%s260 + $0x8] sm:$0xff] %v263
                $region86: #{causal_self_attention.4} parent=80 // loop_footer
                  %s258 = sadd.s32 1, %s254
                $region87: #{causal_self_attention.4} parent=80 // loop_footer_branch
                  %253 = sbr.rel target = $region83
                $region88: #{causal_self_attention.4} parent=80 // loop_exit
                  _
              $region81: #{causal_self_attention.4} parent=65 // pred_fallthru
                _
              // Predicated region
              $region89: #{causal_self_attention.4} parent=65 // pred_check
                _
              $region90: #{causal_self_attention.4} parent=65 // pred_check_branch
                %266 = sbr.rel target = $region92
              $region91: #{causal_self_attention.4} parent=65 // pred_region
                _
              $region92: #{causal_self_attention.4} parent=65 // pred_fallthru
                _
            $region66: #{causal_self_attention.4} parent=61 // pred_fallthru
              _
            // Predicated region
            $region67: #{causal_self_attention.4} parent=61 // pred_check
              _
            $region68: #{causal_self_attention.4} parent=61 // pred_check_branch
              %237 = sbr.rel target = $region70
            $region69: #{causal_self_attention.4} parent=61 // pred_region
              loop: start=0, step=1, limit=1
              $region71: #{causal_self_attention.4} parent=69 // loop_pre_header
                _
              $region72: #{causal_self_attention.4} parent=69 // loop_header
                %s240 = sphi 0, %s244
                %p241 = scmp.ge.s32.totalorder %s240, 1
                %s245 = sphi %s231, %s231
                %s246 = sphi %s222, %s222
              $region73: #{causal_self_attention.4} parent=69 // loop_header_branch
                %243 = sbr.rel (%p241) target = $region77
              $region74: #{causal_self_attention.4} parent=69 // loop_body
                %v247 = vld [vmem:[%s245] sm:$0xff]
                %248 = vst [vmem:[%s246] sm:$0xff] %v247
                %v249 = vld [vmem:[%s245 + $0x18] sm:$0xff]
                %250 = vst [vmem:[%s246 + $0x8] sm:$0xff] %v249
              $region75: #{causal_self_attention.4} parent=69 // loop_footer
                %s244 = sadd.s32 1, %s240
              $region76: #{causal_self_attention.4} parent=69 // loop_footer_branch
                %239 = sbr.rel target = $region72
              $region77: #{causal_self_attention.4} parent=69 // loop_exit
                _
            $region70: #{causal_self_attention.4} parent=61 // pred_fallthru
              _
          $region62: #{causal_self_attention.4} parent=57 // pred_fallthru
            _
          %267 = vnop
        $region58: #{causal_self_attention.4} parent=15 // pred_fallthru
          _
        // Predicated region
        $region93: #{causal_self_attention.4} parent=15 // pred_check
          %p268 = pneg %p114
        $region94: #{causal_self_attention.4} parent=15 // pred_check_branch
          %270 = sbr.rel (%p268) target = $region96
        $region95: #{causal_self_attention.4} parent=15 // pred_region
          %s271 = sand.u32 %s104, 1
          %s272 = sand.u32 %s104, 1
          %s273 = smul.addr %s272, 16
          %s274 = scalar_lea.vmem [#allocation7], %s273
          %p275 = scmp.lt.s32.totalorder %s18, %s17
          %s276 = scalar_select %p275, %s18, %s17
          %s277 = smul.u32 2, %s276
          %s278 = smul.addr %s277, 3
          %s279 = sadd.s32 2, %s278
          %s280 = smul.addr %s16, 6
          %s281 = sadd.s32 %s279, %s280
          %s282 = smul.addr %s281, 8
          %s283 = scalar_lea.vmem %s2, %s282
          // Predicated region
          $region97: #{causal_self_attention.4} parent=95 // pred_check
            _
          $region98: #{causal_self_attention.4} parent=95 // pred_check_branch
            %285 = sbr.rel (0) target = $region100
          $region99: #{causal_self_attention.4} parent=95 // pred_region
            // Predicated region
            $region101: #{causal_self_attention.4} parent=99 // pred_check
              _
            $region102: #{causal_self_attention.4} parent=99 // pred_check_branch
              %287 = sbr.rel (0) target = $region104
            $region103: #{causal_self_attention.4} parent=99 // pred_region
              // Predicated region
              $region116: #{causal_self_attention.4} parent=103 // pred_check
                _
              $region117: #{causal_self_attention.4} parent=103 // pred_check_branch
                %304 = sbr.rel (0) target = $region119
              $region118: #{causal_self_attention.4} parent=103 // pred_region
                loop: start=0, step=1, limit=1
                $region120: #{causal_self_attention.4} parent=118 // loop_pre_header
                  _
                $region121: #{causal_self_attention.4} parent=118 // loop_header
                  %s306 = sphi 0, %s310
                  %p307 = scmp.ge.s32.totalorder %s306, 1
                  %s311 = sphi %s283, %s283
                  %s312 = sphi %s274, %s274
                $region122: #{causal_self_attention.4} parent=118 // loop_header_branch
                  %309 = sbr.rel (%p307) target = $region126
                $region123: #{causal_self_attention.4} parent=118 // loop_body
                  %v313 = vld [vmem:[%s311] sm:$0xff]
                  %314 = vst [vmem:[%s312] sm:$0xff] %v313
                  %v315 = vld [vmem:[%s311 + $0x18] sm:$0xff]
                  %316 = vst [vmem:[%s312 + $0x8] sm:$0xff] %v315
                $region124: #{causal_self_attention.4} parent=118 // loop_footer
                  %s310 = sadd.s32 1, %s306
                $region125: #{causal_self_attention.4} parent=118 // loop_footer_branch
                  %305 = sbr.rel target = $region121
                $region126: #{causal_self_attention.4} parent=118 // loop_exit
                  _
              $region119: #{causal_self_attention.4} parent=103 // pred_fallthru
                _
              // Predicated region
              $region127: #{causal_self_attention.4} parent=103 // pred_check
                _
              $region128: #{causal_self_attention.4} parent=103 // pred_check_branch
                %318 = sbr.rel target = $region130
              $region129: #{causal_self_attention.4} parent=103 // pred_region
                _
              $region130: #{causal_self_attention.4} parent=103 // pred_fallthru
                _
            $region104: #{causal_self_attention.4} parent=99 // pred_fallthru
              _
            // Predicated region
            $region105: #{causal_self_attention.4} parent=99 // pred_check
              _
            $region106: #{causal_self_attention.4} parent=99 // pred_check_branch
              %289 = sbr.rel target = $region108
            $region107: #{causal_self_attention.4} parent=99 // pred_region
              loop: start=0, step=1, limit=1
              $region109: #{causal_self_attention.4} parent=107 // loop_pre_header
                _
              $region110: #{causal_self_attention.4} parent=107 // loop_header
                %s292 = sphi 0, %s296
                %p293 = scmp.ge.s32.totalorder %s292, 1
                %s297 = sphi %s283, %s283
                %s298 = sphi %s274, %s274
              $region111: #{causal_self_attention.4} parent=107 // loop_header_branch
                %295 = sbr.rel (%p293) target = $region115
              $region112: #{causal_self_attention.4} parent=107 // loop_body
                %v299 = vld [vmem:[%s297] sm:$0xff]
                %300 = vst [vmem:[%s298] sm:$0xff] %v299
                %v301 = vld [vmem:[%s297 + $0x18] sm:$0xff]
                %302 = vst [vmem:[%s298 + $0x8] sm:$0xff] %v301
              $region113: #{causal_self_attention.4} parent=107 // loop_footer
                %s296 = sadd.s32 1, %s292
              $region114: #{causal_self_attention.4} parent=107 // loop_footer_branch
                %291 = sbr.rel target = $region110
              $region115: #{causal_self_attention.4} parent=107 // loop_exit
                _
            $region108: #{causal_self_attention.4} parent=99 // pred_fallthru
              _
          $region100: #{causal_self_attention.4} parent=95 // pred_fallthru
            _
          %319 = vnop
        $region96: #{causal_self_attention.4} parent=15 // pred_fallthru
          _
      $region16: #{causal_self_attention.4} parent=5 // pred_fallthru
        _
      %p320 = scmp.le.s32.totalorder 1, %s9
      %p321 = scmp.lt.s32.totalorder %s9, 3
      %p322 = pnand %p320, %p321
      %p323 = pneg %p322
      // Predicated region
      $region131: #{causal_self_attention.4} parent=5 // pred_check
        _
      $region132: #{causal_self_attention.4} parent=5 // pred_check_branch
        %325 = sbr.rel (%p322) target = $region134
      $region133: #{causal_self_attention.4} parent=5 // pred_region
        %s326 = ssub.s32 %s9, 1
        %s327 = sand.u32 %s43, 1
        %s328 = sand.u32 %s43, 1
        %s329 = smul.addr %s328, 16
        %s330 = scalar_lea.vmem [#allocation5], %s329
        // Predicated region
        $region135: #{causal_self_attention.4} parent=133 // pred_check
          %p331 = pneg %p56
        $region136: #{causal_self_attention.4} parent=133 // pred_check_branch
          %333 = sbr.rel (%p331) target = $region138
        $region137: #{causal_self_attention.4} parent=133 // pred_region
          _
        $region138: #{causal_self_attention.4} parent=133 // pred_fallthru
          _
        %s334 = sand.u32 %s75, 1
        %s335 = sand.u32 %s75, 1
        %s336 = smul.addr %s335, 16
        %s337 = scalar_lea.vmem [#allocation6], %s336
        // Predicated region
        $region139: #{causal_self_attention.4} parent=133 // pred_check
          %p338 = pneg %p88
        $region140: #{causal_self_attention.4} parent=133 // pred_check_branch
          %340 = sbr.rel (%p338) target = $region142
        $region141: #{causal_self_attention.4} parent=133 // pred_region
          _
        $region142: #{causal_self_attention.4} parent=133 // pred_fallthru
          _
        %s341 = sand.u32 %s107, 1
        %s342 = sand.u32 %s107, 1
        %s343 = smul.addr %s342, 16
        %s344 = scalar_lea.vmem [#allocation7], %s343
        // Predicated region
        $region143: #{causal_self_attention.4} parent=133 // pred_check
          %p345 = pneg %p120
        $region144: #{causal_self_attention.4} parent=133 // pred_check_branch
          %347 = sbr.rel (%p345) target = $region146
        $region145: #{causal_self_attention.4} parent=133 // pred_region
          _
        $region146: #{causal_self_attention.4} parent=133 // pred_fallthru
          _
        %s348 = sand.u32 %s43, 1
        %s349 = sand.u32 %s43, 1
        %s350 = smul.addr %s349, 16
        %s351 = scalar_lea.vmem [#allocation5], %s350
        %p352 = pneg %p56
        %p353 = pneg %p53
        %s354 = sand.u32 %s75, 1
        %s355 = sand.u32 %s75, 1
        %s356 = smul.addr %s355, 16
        %s357 = scalar_lea.vmem [#allocation6], %s356
        %p358 = pneg %p88
        %p359 = pneg %p85
        %s360 = sand.u32 %s107, 1
        %s361 = sand.u32 %s107, 1
        %s362 = smul.addr %s361, 16
        %s363 = scalar_lea.vmem [#allocation7], %s362
        %p364 = pneg %p120
        %p365 = pneg %p117
        %p366 = pneg %p148
        %p367 = pneg %p145
        %s368 = smul.u32 2, %s20
        %p369 = scmp.lt.s32.totalorder %s19, 1
        %s370 = scalar_select %p369, %s19, 1
        %p371 = scmp.lt.s32.totalorder %s368, 1
        %s372 = scalar_select %p371, %s368, 1
        %s373 = smul.addr %s370, 2
        %s374 = sadd.s32 %s372, %s373
        %s375 = smul.addr %s374, 8
        %s376 = scalar_lea.vmem %s3, %s375
        %s377 = smul.u32 2, %s20
        %p378 = scmp.lt.s32.totalorder %s21, %s20
        %s379 = scalar_select %p378, %s21, %s20
        %s380 = smul.u32 2, %s379
        %p381 = scmp.lt.s32.totalorder %s21, %s20
        %s382 = scalar_select %p381, %s21, %s20
        %s383 = smul.u32 2, %s382
        %s384 = smul.u32 2, %s20
        %p385 = scmp.lt.s32.totalorder %s19, 1
        %s386 = scalar_select %p385, %s19, 1
        %p387 = scmp.lt.s32.totalorder %s384, 1
        %s388 = scalar_select %p387, %s384, 1
        %s389 = smul.addr %s386, 2
        %s390 = sadd.s32 %s388, %s389
        %s391 = smul.addr %s390, 8
        %s392 = scalar_lea.vmem %s3, %s391
        %s393 = smul.u32 2, %s20
        %p394 = scmp.eq.s32.totalorder %s21, 0
        // Predicated region
        $region147: #{causal_self_attention.4} parent=133 // pred_check
          %p395 = pneg %p394
        $region148: #{causal_self_attention.4} parent=133 // pred_check_branch
          %397 = sbr.rel (%p395) target = $region150
        $region149: #{causal_self_attention.4} parent=133 // pred_region
          %vm398 = vcmask 31744
          %399 = vst.msk [vmem:[#allocation2] sm:$0xff] %vm398, -inf
          %400 = vst.msk [vmem:[#allocation2 + $0x8] sm:$0xff] %vm398, -inf
          %401 = vst.msk [vmem:[#allocation3] sm:$0xff] %vm398, 0.0
          %402 = vst.msk [vmem:[#allocation3 + $0x8] sm:$0xff] %vm398, 0.0
          %403 = vst [vmem:[#allocation4] sm:$0xff] 0.0
          %404 = vst [vmem:[#allocation4 + $0x8] sm:$0xff] 0.0
        $region150: #{causal_self_attention.4} parent=133 // pred_fallthru
          _
        %p405 = scmp.lt.s32.totalorder %s21, %s20
        // Predicated region
        $region151: #{causal_self_attention.4} parent=133 // pred_check
          %p406 = pneg %p405
        $region152: #{causal_self_attention.4} parent=133 // pred_check_branch
          %408 = sbr.rel (%p406) target = $region154
        $region153: #{causal_self_attention.4} parent=133 // pred_region
          %v409 = vld [vmem:[%s330] sm:$0xff]
          %v410 = vld [vmem:[%s330 + $0x8] sm:$0xff]
          %v411 = vld [vmem:[%s337] sm:$0xff]
          %v412 = vld [vmem:[%s337 + $0x8] sm:$0xff]
          %v413 = vld [vmem:[%s344] sm:$0xff]
          %v414 = vld [vmem:[%s344 + $0x8] sm:$0xff]
          %v415 = vld [vmem:[#allocation2] sm:$0xff]
          %v416 = vld [vmem:[#allocation2 + $0x8] sm:$0xff]
          %v417 = vld [vmem:[#allocation3] sm:$0xff]
          %v418 = vld [vmem:[#allocation3 + $0x8] sm:$0xff]
          %v419 = vld [vmem:[#allocation4] sm:$0xff]
          %v420 = vld [vmem:[#allocation4 + $0x8] sm:$0xff]
          %vm421 = vcmask 261120
          %v423 = vsel %vm421, %v409, 0
          %v426 = vsel %vm421, %v410, 0
          %v429 = vsel %vm421, %v411, 0
          %v432 = vsel %vm421, %v412, 0
          %434 = vmatprep.subr.mxu0 0.0
          %435 = vmatpush1.xpose.msra.mxu0 %v429
          %436 = vmatprep.subr.mxu0 0.0
          %437 = vmatpush1.xpose.msra.mxu0 %v432
          %438 = vmatprep.subr.mxu0 0.0
          %439 = vmatpush1.xpose.msra.mxu0 0.0
          %440 = vmatprep.subr.mxu0 0.0
          %441 = vmatpush1.xpose.msra.mxu0 0.0
          %442 = vmatprep.subr.mxu0 0.0
          %443 = vmatpush1.xpose.msra.mxu0 0.0
          %444 = vmatprep.subr.mxu0 0.0
          %445 = vmatpush1.xpose.msra.mxu0 0.0
          %446 = vmatprep.subr.mxu0 0.0
          %447 = vmatpush1.xpose.msra.mxu0 0.0
          %448 = vmatprep.subr.mxu0 0.0
          %449 = vmatpush1.xpose.msra.mxu0 0.0
          %450 = vmatprep.subr.mxu0 0.0
          %451 = vmatpush1.xpose.msra.mxu0 0.0
          %452 = vmatprep.subr.mxu0 0.0
          %453 = vmatpush1.xpose.msra.mxu0 0.0
          %454 = vmatprep.subr.mxu0 0.0
          %455 = vmatpush1.xpose.msra.mxu0 0.0
          %456 = vmatprep.subr.mxu0 0.0
          %457 = vmatpush1.xpose.msra.mxu0 0.0
          %458 = vmatprep.subr.mxu0 0.0
          %459 = vmatpush1.xpose.msra.mxu0 0.0
          %460 = vmatprep.subr.mxu0 0.0
          %461 = vmatpush1.xpose.msra.mxu0 0.0
          %462 = vmatprep.subr.mxu0 0.0
          %463 = vmatpush1.xpose.msra.mxu0 0.0
          %464 = vmatprep.subr.mxu0 0.0
          %465 = vmatpush1.xpose.msra.mxu0 0.0
          %466 = vmatprep.subr.mxu0 0.0
          %467 = vmatpush1.xpose.msra.mxu0 0.0
          %468 = vmatprep.subr.mxu0 0.0
          %469 = vmatpush1.xpose.msra.mxu0 0.0
          %470 = vmatprep.subr.mxu0 0.0
          %471 = vmatpush1.xpose.msra.mxu0 0.0
          %472 = vmatprep.subr.mxu0 0.0
          %473 = vmatpush1.xpose.msra.mxu0 0.0
          %474 = vmatprep.subr.mxu0 0.0
          %475 = vmatpush1.xpose.msra.mxu0 0.0
          %476 = vmatprep.subr.mxu0 0.0
          %477 = vmatpush1.xpose.msra.mxu0 0.0
          %478 = vmatprep.subr.mxu0 0.0
          %479 = vmatpush1.xpose.msra.mxu0 0.0
          %480 = vmatprep.subr.mxu0 0.0
          %481 = vmatpush1.xpose.msra.mxu0 0.0
          %482 = vmatprep.subr.mxu0 0.0
          %483 = vmatpush1.xpose.msra.mxu0 0.0
          %484 = vmatprep.subr.mxu0 0.0
          %485 = vmatpush1.xpose.msra.mxu0 0.0
          %486 = vmatprep.subr.mxu0 0.0
          %487 = vmatpush1.xpose.msra.mxu0 0.0
          %488 = vmatprep.subr.mxu0 0.0
          %489 = vmatpush1.xpose.msra.mxu0 0.0
          %490 = vmatprep.subr.mxu0 0.0
          %491 = vmatpush1.xpose.msra.mxu0 0.0
          %492 = vmatprep.subr.mxu0 0.0
          %493 = vmatpush1.xpose.msra.mxu0 0.0
          %494 = vmatprep.subr.mxu0 0.0
          %495 = vmatpush1.xpose.msra.mxu0 0.0
          %496 = vmatprep.subr.mxu0 0.0
          %497 = vmatpush1.xpose.msra.mxu0 0.0
          %498 = vmatprep.mubr.f32.mxu0 0.0
          %499 = vmatmul.mubr.f32.gmra.mrb[0].mxu0 %v423
          %v500 = vpop.f32.mrb[0].mxu0
          %v501 = vadd.f32 0.0, %v500
          %v502 = vpop.f32.mrb[0].mxu0
          %503 = vmatprep.mubr.f32.mxu0 0.0
          %504 = vmatmul.mubr.f32.gmra.mrb[0].mxu0 %v426
          %v505 = vpop.f32.mrb[0].mxu0
          %v506 = vadd.f32 0.0, %v505
          %v507 = vpop.f32.mrb[0].mxu0
          %508 = vdwg.mxu0
          %vm509 = vcmask 130048
          %v510 = vsel %vm509, %v501, -inf
          %511 = vmax.xlane.f32.xlu0 %v510
          %v512 = vpop.xlane.xlu0 %511
          %v513 = vsel %vm509, %v506, -inf
          %514 = vmax.xlane.f32.xlu0 %v513
          %v515 = vpop.xlane.xlu0 %514
          %v516 = vmax.f32 %v415, %v512
          %v517 = vmax.f32 %v416, %v515
          %v518 = vsub.f32 %v415, %v516
          %v519 = vsub.f32 %v416, %v517
          %v520 = vmul.f32 %v518, 1.442695
          %v521 = vpow.pop %v520
          %v522 = vmul.f32 %v519, 1.442695
          %v523 = vpow.pop %v522
          %525 = vset.pattern.permute.xlu0 0
          %526 = vperm.xlu0 %525, %v516
          %v527 = vpop.permute.xlu0 %526
          %530 = vset.pattern.permute.xlu0 0
          %531 = vperm.xlu0 %530, %v517
          %v532 = vpop.permute.xlu0 %531
          %v534 = vsub.f32 %v501, %v527
          %v535 = vsub.f32 %v506, %v532
          %v536 = vmul.f32 %v534, 1.442695
          %v537 = vpow.pop %v536
          %v538 = vmul.f32 %v535, 1.442695
          %v539 = vpow.pop %v538
          %v540 = vmul.f32 %v521, %v417
          %v541 = vmul.f32 %v523, %v418
          %v542 = vsel %vm509, %v537, 0.0
          %543 = vadd.xlane.f32.xlu0 %v542
          %v544 = vpop.xlane.xlu0 %543
          %v545 = vsel %vm509, %v539, 0.0
          %546 = vadd.xlane.f32.xlu0 %v545
          %v547 = vpop.xlane.xlu0 %546
          %v548 = vadd.f32 %v540, %v544
          %v549 = vadd.f32 %v541, %v547
          %v551 = vsel %vm509, %v537, 0
          %v554 = vsel %vm509, %v539, 0
          %556 = vmatprep.subr.mxu0 0.0
          %557 = vmatpush1.msra.mxu0 %v413
          %558 = vmatprep.subr.mxu0 0.0
          %559 = vmatpush1.msra.mxu0 %v414
          %560 = vmatprep.subr.mxu0 0.0
          %561 = vmatpush1.msra.mxu0 0.0
          %562 = vmatprep.subr.mxu0 0.0
          %563 = vmatpush1.msra.mxu0 0.0
          %564 = vmatprep.subr.mxu0 0.0
          %565 = vmatpush1.msra.mxu0 0.0
          %566 = vmatprep.subr.mxu0 0.0
          %567 = vmatpush1.msra.mxu0 0.0
          %568 = vmatprep.subr.mxu0 0.0
          %569 = vmatpush1.msra.mxu0 0.0
          %570 = vmatprep.subr.mxu0 0.0
          %571 = vmatpush1.msra.mxu0 0.0
          %572 = vmatprep.subr.mxu0 0.0
          %573 = vmatpush1.msra.mxu0 0.0
          %574 = vmatprep.subr.mxu0 0.0
          %575 = vmatpush1.msra.mxu0 0.0
          %576 = vmatprep.subr.mxu0 0.0
          %577 = vmatpush1.msra.mxu0 0.0
          %578 = vmatprep.subr.mxu0 0.0
          %579 = vmatpush1.msra.mxu0 0.0
          %580 = vmatprep.subr.mxu0 0.0
          %581 = vmatpush1.msra.mxu0 0.0
          %582 = vmatprep.subr.mxu0 0.0
          %583 = vmatpush1.msra.mxu0 0.0
          %584 = vmatprep.subr.mxu0 0.0
          %585 = vmatpush1.msra.mxu0 0.0
          %586 = vmatprep.subr.mxu0 0.0
          %587 = vmatpush1.msra.mxu0 0.0
          %588 = vmatprep.subr.mxu0 0.0
          %589 = vmatpush1.msra.mxu0 0.0
          %590 = vmatprep.subr.mxu0 0.0
          %591 = vmatpush1.msra.mxu0 0.0
          %592 = vmatprep.subr.mxu0 0.0
          %593 = vmatpush1.msra.mxu0 0.0
          %594 = vmatprep.subr.mxu0 0.0
          %595 = vmatpush1.msra.mxu0 0.0
          %596 = vmatprep.subr.mxu0 0.0
          %597 = vmatpush1.msra.mxu0 0.0
          %598 = vmatprep.subr.mxu0 0.0
          %599 = vmatpush1.msra.mxu0 0.0
          %600 = vmatprep.subr.mxu0 0.0
          %601 = vmatpush1.msra.mxu0 0.0
          %602 = vmatprep.subr.mxu0 0.0
          %603 = vmatpush1.msra.mxu0 0.0
          %604 = vmatprep.subr.mxu0 0.0
          %605 = vmatpush1.msra.mxu0 0.0
          %606 = vmatprep.subr.mxu0 0.0
          %607 = vmatpush1.msra.mxu0 0.0
          %608 = vmatprep.subr.mxu0 0.0
          %609 = vmatpush1.msra.mxu0 0.0
          %610 = vmatprep.subr.mxu0 0.0
          %611 = vmatpush1.msra.mxu0 0.0
          %612 = vmatprep.subr.mxu0 0.0
          %613 = vmatpush1.msra.mxu0 0.0
          %614 = vmatprep.subr.mxu0 0.0
          %615 = vmatpush1.msra.mxu0 0.0
          %616 = vmatprep.subr.mxu0 0.0
          %617 = vmatpush1.msra.mxu0 0.0
          %618 = vmatprep.subr.mxu0 0.0
          %619 = vmatpush1.msra.mxu0 0.0
          %620 = vmatprep.mubr.f32.mxu0 0.0
          %621 = vmatmul.mubr.f32.gmra.mrb[0].mxu0 %v551
          %v622 = vpop.f32.mrb[0].mxu0
          %v623 = vadd.f32 0.0, %v622
          %v624 = vpop.f32.mrb[0].mxu0
          %625 = vmatprep.mubr.f32.mxu0 0.0
          %626 = vmatmul.mubr.f32.gmra.mrb[0].mxu0 %v554
          %v627 = vpop.f32.mrb[0].mxu0
          %v628 = vadd.f32 0.0, %v627
          %v629 = vpop.f32.mrb[0].mxu0
          %630 = vdwg.mxu0
          %632 = vset.pattern.permute.xlu0 0
          %633 = vperm.xlu0 %632, %v521
          %v634 = vpop.permute.xlu0 %633
          %637 = vset.pattern.permute.xlu0 0
          %638 = vperm.xlu0 %637, %v523
          %v639 = vpop.permute.xlu0 %638
          %v641 = vmul.f32 %v634, %v419
          %v642 = vmul.f32 %v639, %v420
          %v643 = vadd.f32 %v641, %v623
          %v644 = vadd.f32 %v642, %v628
          %vm645 = vcmask 7168
          %646 = vst.msk [vmem:[#allocation2] sm:$0xff] %vm645, %v516
          %647 = vst.msk [vmem:[#allocation2 + $0x8] sm:$0xff] %vm645, %v517
          %648 = vst.msk [vmem:[#allocation3] sm:$0xff] %vm645, %v548
          %649 = vst.msk [vmem:[#allocation3 + $0x8] sm:$0xff] %vm645, %v549
          %650 = vrot.lane.b32.xlu0 %v409, 96
          %v651 = vpop.permute.xlu0 %650
          %652 = vrot.lane.b32.xlu0 %v410, 96
          %v653 = vpop.permute.xlu0 %652
          %654 = vrot.lane.b32.xlu0 %v411, 96
          %v655 = vpop.permute.xlu0 %654
          %656 = vrot.lane.b32.xlu0 %v412, 96
          %v657 = vpop.permute.xlu0 %656
          %v658 = vsel %vm421, %v651, 0
          %v660 = vsel %vm421, %v653, 0
          %v662 = vsel %vm421, %v655, 0
          %v664 = vsel %vm421, %v657, 0
          %666 = vmatprep.subr.mxu0 0.0
          %667 = vmatpush1.xpose.msra.mxu0 %v662
          %668 = vmatprep.subr.mxu0 0.0
          %669 = vmatpush1.xpose.msra.mxu0 %v664
          %670 = vmatprep.subr.mxu0 0.0
          %671 = vmatpush1.xpose.msra.mxu0 0.0
          %672 = vmatprep.subr.mxu0 0.0
          %673 = vmatpush1.xpose.msra.mxu0 0.0
          %674 = vmatprep.subr.mxu0 0.0
          %675 = vmatpush1.xpose.msra.mxu0 0.0
          %676 = vmatprep.subr.mxu0 0.0
          %677 = vmatpush1.xpose.msra.mxu0 0.0
          %678 = vmatprep.subr.mxu0 0.0
          %679 = vmatpush1.xpose.msra.mxu0 0.0
          %680 = vmatprep.subr.mxu0 0.0
          %681 = vmatpush1.xpose.msra.mxu0 0.0
          %682 = vmatprep.subr.mxu0 0.0
          %683 = vmatpush1.xpose.msra.mxu0 0.0
          %684 = vmatprep.subr.mxu0 0.0
          %685 = vmatpush1.xpose.msra.mxu0 0.0
          %686 = vmatprep.subr.mxu0 0.0
          %687 = vmatpush1.xpose.msra.mxu0 0.0
          %688 = vmatprep.subr.mxu0 0.0
          %689 = vmatpush1.xpose.msra.mxu0 0.0
          %690 = vmatprep.subr.mxu0 0.0
          %691 = vmatpush1.xpose.msra.mxu0 0.0
          %692 = vmatprep.subr.mxu0 0.0
          %693 = vmatpush1.xpose.msra.mxu0 0.0
          %694 = vmatprep.subr.mxu0 0.0
          %695 = vmatpush1.xpose.msra.mxu0 0.0
          %696 = vmatprep.subr.mxu0 0.0
          %697 = vmatpush1.xpose.msra.mxu0 0.0
          %698 = vmatprep.subr.mxu0 0.0
          %699 = vmatpush1.xpose.msra.mxu0 0.0
          %700 = vmatprep.subr.mxu0 0.0
          %701 = vmatpush1.xpose.msra.mxu0 0.0
          %702 = vmatprep.subr.mxu0 0.0
          %703 = vmatpush1.xpose.msra.mxu0 0.0
          %704 = vmatprep.subr.mxu0 0.0
          %705 = vmatpush1.xpose.msra.mxu0 0.0
          %706 = vmatprep.subr.mxu0 0.0
          %707 = vmatpush1.xpose.msra.mxu0 0.0
          %708 = vmatprep.subr.mxu0 0.0
          %709 = vmatpush1.xpose.msra.mxu0 0.0
          %710 = vmatprep.subr.mxu0 0.0
          %711 = vmatpush1.xpose.msra.mxu0 0.0
          %712 = vmatprep.subr.mxu0 0.0
          %713 = vmatpush1.xpose.msra.mxu0 0.0
          %714 = vmatprep.subr.mxu0 0.0
          %715 = vmatpush1.xpose.msra.mxu0 0.0
          %716 = vmatprep.subr.mxu0 0.0
          %717 = vmatpush1.xpose.msra.mxu0 0.0
          %718 = vmatprep.subr.mxu0 0.0
          %719 = vmatpush1.xpose.msra.mxu0 0.0
          %720 = vmatprep.subr.mxu0 0.0
          %721 = vmatpush1.xpose.msra.mxu0 0.0
          %722 = vmatprep.subr.mxu0 0.0
          %723 = vmatpush1.xpose.msra.mxu0 0.0
          %724 = vmatprep.subr.mxu0 0.0
          %725 = vmatpush1.xpose.msra.mxu0 0.0
          %726 = vmatprep.subr.mxu0 0.0
          %727 = vmatpush1.xpose.msra.mxu0 0.0
          %728 = vmatprep.subr.mxu0 0.0
          %729 = vmatpush1.xpose.msra.mxu0 0.0
          %730 = vmatprep.mubr.f32.mxu0 0.0
          %731 = vmatmul.mubr.f32.gmra.mrb[0].mxu0 %v658
          %v732 = vpop.f32.mrb[0].mxu0
          %v733 = vadd.f32 0.0, %v732
          %v734 = vpop.f32.mrb[0].mxu0
          %735 = vmatprep.mubr.f32.mxu0 0.0
          %736 = vmatmul.mubr.f32.gmra.mrb[0].mxu0 %v660
          %v737 = vpop.f32.mrb[0].mxu0
          %v738 = vadd.f32 0.0, %v737
          %v739 = vpop.f32.mrb[0].mxu0
          %740 = vdwg.mxu0
          %v741 = vsel %vm509, %v733, -inf
          %742 = vmax.xlane.f32.xlu0 %v741
          %v743 = vpop.xlane.xlu0 %742
          %v744 = vsel %vm509, %v738, -inf
          %745 = vmax.xlane.f32.xlu0 %v744
          %v746 = vpop.xlane.xlu0 %745
          %v747 = vmax.f32 %v415, %v743
          %v748 = vmax.f32 %v416, %v746
          %v749 = vsub.f32 %v415, %v747
          %v750 = vsub.f32 %v416, %v748
          %v751 = vmul.f32 %v749, 1.442695
          %v752 = vpow.pop %v751
          %v753 = vmul.f32 %v750, 1.442695
          %v754 = vpow.pop %v753
          %756 = vset.pattern.permute.xlu0 1
          %757 = vperm.xlu0 %756, %v747
          %v758 = vpop.permute.xlu0 %757
          %761 = vset.pattern.permute.xlu0 1
          %762 = vperm.xlu0 %761, %v748
          %v763 = vpop.permute.xlu0 %762
          %v765 = vsub.f32 %v733, %v758
          %v766 = vsub.f32 %v738, %v763
          %v767 = vmul.f32 %v765, 1.442695
          %v768 = vpow.pop %v767
          %v769 = vmul.f32 %v766, 1.442695
          %v770 = vpow.pop %v769
          %v771 = vmul.f32 %v752, %v417
          %v772 = vmul.f32 %v754, %v418
          %v773 = vsel %vm509, %v768, 0.0
          %774 = vadd.xlane.f32.xlu0 %v773
          %v775 = vpop.xlane.xlu0 %774
          %v776 = vsel %vm509, %v770, 0.0
          %777 = vadd.xlane.f32.xlu0 %v776
          %v778 = vpop.xlane.xlu0 %777
          %v779 = vadd.f32 %v771, %v775
          %v780 = vadd.f32 %v772, %v778
          %783 = vrot.lane.b32.xlu0 %v413, 96
          %v784 = vpop.permute.xlu0 %783
          %785 = vrot.lane.b32.xlu0 %v414, 96
          %v786 = vpop.permute.xlu0 %785
          %v790 = vsel %vm509, %v768, 0
          %v793 = vsel %vm509, %v770, 0
          %795 = vmatprep.subr.mxu0 0.0
          %796 = vmatpush1.msra.mxu0 %v784
          %797 = vmatprep.subr.mxu0 0.0
          %798 = vmatpush1.msra.mxu0 %v786
          %799 = vmatprep.subr.mxu0 0.0
          %800 = vmatpush1.msra.mxu0 0.0
          %801 = vmatprep.subr.mxu0 0.0
          %802 = vmatpush1.msra.mxu0 0.0
          %803 = vmatprep.subr.mxu0 0.0
          %804 = vmatpush1.msra.mxu0 0.0
          %805 = vmatprep.subr.mxu0 0.0
          %806 = vmatpush1.msra.mxu0 0.0
          %807 = vmatprep.subr.mxu0 0.0
          %808 = vmatpush1.msra.mxu0 0.0
          %809 = vmatprep.subr.mxu0 0.0
          %810 = vmatpush1.msra.mxu0 0.0
          %811 = vmatprep.subr.mxu0 0.0
          %812 = vmatpush1.msra.mxu0 0.0
          %813 = vmatprep.subr.mxu0 0.0
          %814 = vmatpush1.msra.mxu0 0.0
          %815 = vmatprep.subr.mxu0 0.0
          %816 = vmatpush1.msra.mxu0 0.0
          %817 = vmatprep.subr.mxu0 0.0
          %818 = vmatpush1.msra.mxu0 0.0
          %819 = vmatprep.subr.mxu0 0.0
          %820 = vmatpush1.msra.mxu0 0.0
          %821 = vmatprep.subr.mxu0 0.0
          %822 = vmatpush1.msra.mxu0 0.0
          %823 = vmatprep.subr.mxu0 0.0
          %824 = vmatpush1.msra.mxu0 0.0
          %825 = vmatprep.subr.mxu0 0.0
          %826 = vmatpush1.msra.mxu0 0.0
          %827 = vmatprep.subr.mxu0 0.0
          %828 = vmatpush1.msra.mxu0 0.0
          %829 = vmatprep.subr.mxu0 0.0
          %830 = vmatpush1.msra.mxu0 0.0
          %831 = vmatprep.subr.mxu0 0.0
          %832 = vmatpush1.msra.mxu0 0.0
          %833 = vmatprep.subr.mxu0 0.0
          %834 = vmatpush1.msra.mxu0 0.0
          %835 = vmatprep.subr.mxu0 0.0
          %836 = vmatpush1.msra.mxu0 0.0
          %837 = vmatprep.subr.mxu0 0.0
          %838 = vmatpush1.msra.mxu0 0.0
          %839 = vmatprep.subr.mxu0 0.0
          %840 = vmatpush1.msra.mxu0 0.0
          %841 = vmatprep.subr.mxu0 0.0
          %842 = vmatpush1.msra.mxu0 0.0
          %843 = vmatprep.subr.mxu0 0.0
          %844 = vmatpush1.msra.mxu0 0.0
          %845 = vmatprep.subr.mxu0 0.0
          %846 = vmatpush1.msra.mxu0 0.0
          %847 = vmatprep.subr.mxu0 0.0
          %848 = vmatpush1.msra.mxu0 0.0
          %849 = vmatprep.subr.mxu0 0.0
          %850 = vmatpush1.msra.mxu0 0.0
          %851 = vmatprep.subr.mxu0 0.0
          %852 = vmatpush1.msra.mxu0 0.0
          %853 = vmatprep.subr.mxu0 0.0
          %854 = vmatpush1.msra.mxu0 0.0
          %855 = vmatprep.subr.mxu0 0.0
          %856 = vmatpush1.msra.mxu0 0.0
          %857 = vmatprep.subr.mxu0 0.0
          %858 = vmatpush1.msra.mxu0 0.0
          %859 = vmatprep.mubr.f32.mxu0 0.0
          %860 = vmatmul.mubr.f32.gmra.mrb[0].mxu0 %v790
          %v861 = vpop.f32.mrb[0].mxu0
          %v862 = vadd.f32 0.0, %v861
          %v863 = vpop.f32.mrb[0].mxu0
          %864 = vmatprep.mubr.f32.mxu0 0.0
          %865 = vmatmul.mubr.f32.gmra.mrb[0].mxu0 %v793
          %v866 = vpop.f32.mrb[0].mxu0
          %v867 = vadd.f32 0.0, %v866
          %v868 = vpop.f32.mrb[0].mxu0
          %869 = vdwg.mxu0
          %871 = vset.pattern.permute.xlu0 1
          %872 = vperm.xlu0 %871, %v752
          %v873 = vpop.permute.xlu0 %872
          %876 = vset.pattern.permute.xlu0 1
          %877 = vperm.xlu0 %876, %v754
          %v878 = vpop.permute.xlu0 %877
          %v880 = vmul.f32 %v873, %v419
          %v881 = vmul.f32 %v878, %v420
          %884 = vrot.lane.b32.xlu0 %v862, 32
          %v885 = vpop.permute.xlu0 %884
          %886 = vrot.lane.b32.xlu0 %v867, 32
          %v887 = vpop.permute.xlu0 %886
          %v890 = vadd.f32 %v880, %v885
          %v891 = vadd.f32 %v881, %v887
          %vm892 = vcmask 15368
          %893 = vst.msk [vmem:[#allocation2] sm:$0xff] %vm892, %v747
          %894 = vst.msk [vmem:[#allocation2 + $0x8] sm:$0xff] %vm892, %v748
          %895 = vst.msk [vmem:[#allocation3] sm:$0xff] %vm892, %v779
          %896 = vst.msk [vmem:[#allocation3 + $0x8] sm:$0xff] %vm892, %v780
          %897 = vrot.lane.b32.xlu0 %v409, 64
          %v898 = vpop.permute.xlu0 %897
          %899 = vrot.lane.b32.xlu0 %v410, 64
          %v900 = vpop.permute.xlu0 %899
          %901 = vrot.lane.b32.xlu0 %v411, 64
          %v902 = vpop.permute.xlu0 %901
          %903 = vrot.lane.b32.xlu0 %v412, 64
          %v904 = vpop.permute.xlu0 %903
          %v905 = vsel %vm421, %v898, 0
          %v907 = vsel %vm421, %v900, 0
          %v909 = vsel %vm421, %v902, 0
          %v911 = vsel %vm421, %v904, 0
          %913 = vmatprep.subr.mxu0 0.0
          %914 = vmatpush1.xpose.msra.mxu0 %v909
          %915 = vmatprep.subr.mxu0 0.0
          %916 = vmatpush1.xpose.msra.mxu0 %v911
          %917 = vmatprep.subr.mxu0 0.0
          %918 = vmatpush1.xpose.msra.mxu0 0.0
          %919 = vmatprep.subr.mxu0 0.0
          %920 = vmatpush1.xpose.msra.mxu0 0.0
          %921 = vmatprep.subr.mxu0 0.0
          %922 = vmatpush1.xpose.msra.mxu0 0.0
          %923 = vmatprep.subr.mxu0 0.0
          %924 = vmatpush1.xpose.msra.mxu0 0.0
          %925 = vmatprep.subr.mxu0 0.0
          %926 = vmatpush1.xpose.msra.mxu0 0.0
          %927 = vmatprep.subr.mxu0 0.0
          %928 = vmatpush1.xpose.msra.mxu0 0.0
          %929 = vmatprep.subr.mxu0 0.0
          %930 = vmatpush1.xpose.msra.mxu0 0.0
          %931 = vmatprep.subr.mxu0 0.0
          %932 = vmatpush1.xpose.msra.mxu0 0.0
          %933 = vmatprep.subr.mxu0 0.0
          %934 = vmatpush1.xpose.msra.mxu0 0.0
          %935 = vmatprep.subr.mxu0 0.0
          %936 = vmatpush1.xpose.msra.mxu0 0.0
          %937 = vmatprep.subr.mxu0 0.0
          %938 = vmatpush1.xpose.msra.mxu0 0.0
          %939 = vmatprep.subr.mxu0 0.0
          %940 = vmatpush1.xpose.msra.mxu0 0.0
          %941 = vmatprep.subr.mxu0 0.0
          %942 = vmatpush1.xpose.msra.mxu0 0.0
          %943 = vmatprep.subr.mxu0 0.0
          %944 = vmatpush1.xpose.msra.mxu0 0.0
          %945 = vmatprep.subr.mxu0 0.0
          %946 = vmatpush1.xpose.msra.mxu0 0.0
          %947 = vmatprep.subr.mxu0 0.0
          %948 = vmatpush1.xpose.msra.mxu0 0.0
          %949 = vmatprep.subr.mxu0 0.0
          %950 = vmatpush1.xpose.msra.mxu0 0.0
          %951 = vmatprep.subr.mxu0 0.0
          %952 = vmatpush1.xpose.msra.mxu0 0.0
          %953 = vmatprep.subr.mxu0 0.0
          %954 = vmatpush1.xpose.msra.mxu0 0.0
          %955 = vmatprep.subr.mxu0 0.0
          %956 = vmatpush1.xpose.msra.mxu0 0.0
          %957 = vmatprep.subr.mxu0 0.0
          %958 = vmatpush1.xpose.msra.mxu0 0.0
          %959 = vmatprep.subr.mxu0 0.0
          %960 = vmatpush1.xpose.msra.mxu0 0.0
          %961 = vmatprep.subr.mxu0 0.0
          %962 = vmatpush1.xpose.msra.mxu0 0.0
          %963 = vmatprep.subr.mxu0 0.0
          %964 = vmatpush1.xpose.msra.mxu0 0.0
          %965 = vmatprep.subr.mxu0 0.0
          %966 = vmatpush1.xpose.msra.mxu0 0.0
          %967 = vmatprep.subr.mxu0 0.0
          %968 = vmatpush1.xpose.msra.mxu0 0.0
          %969 = vmatprep.subr.mxu0 0.0
          %970 = vmatpush1.xpose.msra.mxu0 0.0
          %971 = vmatprep.subr.mxu0 0.0
          %972 = vmatpush1.xpose.msra.mxu0 0.0
          %973 = vmatprep.subr.mxu0 0.0
          %974 = vmatpush1.xpose.msra.mxu0 0.0
          %975 = vmatprep.subr.mxu0 0.0
          %976 = vmatpush1.xpose.msra.mxu0 0.0
          %977 = vmatprep.mubr.f32.mxu0 0.0
          %978 = vmatmul.mubr.f32.gmra.mrb[0].mxu0 %v905
          %v979 = vpop.f32.mrb[0].mxu0
          %v980 = vadd.f32 0.0, %v979
          %v981 = vpop.f32.mrb[0].mxu0
          %982 = vmatprep.mubr.f32.mxu0 0.0
          %983 = vmatmul.mubr.f32.gmra.mrb[0].mxu0 %v907
          %v984 = vpop.f32.mrb[0].mxu0
          %v985 = vadd.f32 0.0, %v984
          %v986 = vpop.f32.mrb[0].mxu0
          %987 = vdwg.mxu0
          %v988 = vsel %vm509, %v980, -inf
          %989 = vmax.xlane.f32.xlu0 %v988
          %v990 = vpop.xlane.xlu0 %989
          %v991 = vsel %vm509, %v985, -inf
          %992 = vmax.xlane.f32.xlu0 %v991
          %v993 = vpop.xlane.xlu0 %992
          %v994 = vmax.f32 %v415, %v990
          %v995 = vmax.f32 %v416, %v993
          %v996 = vsub.f32 %v415, %v994
          %v997 = vsub.f32 %v416, %v995
          %v998 = vmul.f32 %v996, 1.442695
          %v999 = vpow.pop %v998
          %v1000 = vmul.f32 %v997, 1.442695
          %v1001 = vpow.pop %v1000
          %1003 = vset.pattern.permute.xlu0 2
          %1004 = vperm.xlu0 %1003, %v994
          %v1005 = vpop.permute.xlu0 %1004
          %1008 = vset.pattern.permute.xlu0 2
          %1009 = vperm.xlu0 %1008, %v995
          %v1010 = vpop.permute.xlu0 %1009
          %v1012 = vsub.f32 %v980, %v1005
          %v1013 = vsub.f32 %v985, %v1010
          %v1014 = vmul.f32 %v1012, 1.442695
          %v1015 = vpow.pop %v1014
          %v1016 = vmul.f32 %v1013, 1.442695
          %v1017 = vpow.pop %v1016
          %v1018 = vmul.f32 %v999, %v417
          %v1019 = vmul.f32 %v1001, %v418
          %v1020 = vsel %vm509, %v1015, 0.0
          %1021 = vadd.xlane.f32.xlu0 %v1020
          %v1022 = vpop.xlane.xlu0 %1021
          %v1023 = vsel %vm509, %v1017, 0.0
          %1024 = vadd.xlane.f32.xlu0 %v1023
          %v1025 = vpop.xlane.xlu0 %1024
          %v1026 = vadd.f32 %v1018, %v1022
          %v1027 = vadd.f32 %v1019, %v1025
          %1028 = vrot.lane.b32.xlu0 %v413, 64
          %v1029 = vpop.permute.xlu0 %1028
          %1030 = vrot.lane.b32.xlu0 %v414, 64
          %v1031 = vpop.permute.xlu0 %1030
          %v1035 = vsel %vm509, %v1015, 0
          %v1038 = vsel %vm509, %v1017, 0
          %1040 = vmatprep.subr.mxu0 0.0
          %1041 = vmatpush1.msra.mxu0 %v1029
          %1042 = vmatprep.subr.mxu0 0.0
          %1043 = vmatpush1.msra.mxu0 %v1031
          %1044 = vmatprep.subr.mxu0 0.0
          %1045 = vmatpush1.msra.mxu0 0.0
          %1046 = vmatprep.subr.mxu0 0.0
          %1047 = vmatpush1.msra.mxu0 0.0
          %1048 = vmatprep.subr.mxu0 0.0
          %1049 = vmatpush1.msra.mxu0 0.0
          %1050 = vmatprep.subr.mxu0 0.0
          %1051 = vmatpush1.msra.mxu0 0.0
          %1052 = vmatprep.subr.mxu0 0.0
          %1053 = vmatpush1.msra.mxu0 0.0
          %1054 = vmatprep.subr.mxu0 0.0
          %1055 = vmatpush1.msra.mxu0 0.0
          %1056 = vmatprep.subr.mxu0 0.0
          %1057 = vmatpush1.msra.mxu0 0.0
          %1058 = vmatprep.subr.mxu0 0.0
          %1059 = vmatpush1.msra.mxu0 0.0
          %1060 = vmatprep.subr.mxu0 0.0
          %1061 = vmatpush1.msra.mxu0 0.0
          %1062 = vmatprep.subr.mxu0 0.0
          %1063 = vmatpush1.msra.mxu0 0.0
          %1064 = vmatprep.subr.mxu0 0.0
          %1065 = vmatpush1.msra.mxu0 0.0
          %1066 = vmatprep.subr.mxu0 0.0
          %1067 = vmatpush1.msra.mxu0 0.0
          %1068 = vmatprep.subr.mxu0 0.0
          %1069 = vmatpush1.msra.mxu0 0.0
          %1070 = vmatprep.subr.mxu0 0.0
          %1071 = vmatpush1.msra.mxu0 0.0
          %1072 = vmatprep.subr.mxu0 0.0
          %1073 = vmatpush1.msra.mxu0 0.0
          %1074 = vmatprep.subr.mxu0 0.0
          %1075 = vmatpush1.msra.mxu0 0.0
          %1076 = vmatprep.subr.mxu0 0.0
          %1077 = vmatpush1.msra.mxu0 0.0
          %1078 = vmatprep.subr.mxu0 0.0
          %1079 = vmatpush1.msra.mxu0 0.0
          %1080 = vmatprep.subr.mxu0 0.0
          %1081 = vmatpush1.msra.mxu0 0.0
          %1082 = vmatprep.subr.mxu0 0.0
          %1083 = vmatpush1.msra.mxu0 0.0
          %1084 = vmatprep.subr.mxu0 0.0
          %1085 = vmatpush1.msra.mxu0 0.0
          %1086 = vmatprep.subr.mxu0 0.0
          %1087 = vmatpush1.msra.mxu0 0.0
          %1088 = vmatprep.subr.mxu0 0.0
          %1089 = vmatpush1.msra.mxu0 0.0
          %1090 = vmatprep.subr.mxu0 0.0
          %1091 = vmatpush1.msra.mxu0 0.0
          %1092 = vmatprep.subr.mxu0 0.0
          %1093 = vmatpush1.msra.mxu0 0.0
          %1094 = vmatprep.subr.mxu0 0.0
          %1095 = vmatpush1.msra.mxu0 0.0
          %1096 = vmatprep.subr.mxu0 0.0
          %1097 = vmatpush1.msra.mxu0 0.0
          %1098 = vmatprep.subr.mxu0 0.0
          %1099 = vmatpush1.msra.mxu0 0.0
          %1100 = vmatprep.subr.mxu0 0.0
          %1101 = vmatpush1.msra.mxu0 0.0
          %1102 = vmatprep.subr.mxu0 0.0
          %1103 = vmatpush1.msra.mxu0 0.0
          %1104 = vmatprep.mubr.f32.mxu0 0.0
          %1105 = vmatmul.mubr.f32.gmra.mrb[0].mxu0 %v1035
          %v1106 = vpop.f32.mrb[0].mxu0
          %v1107 = vadd.f32 0.0, %v1106
          %v1108 = vpop.f32.mrb[0].mxu0
          %1109 = vmatprep.mubr.f32.mxu0 0.0
          %1110 = vmatmul.mubr.f32.gmra.mrb[0].mxu0 %v1038
          %v1111 = vpop.f32.mrb[0].mxu0
          %v1112 = vadd.f32 0.0, %v1111
          %v1113 = vpop.f32.mrb[0].mxu0
          %1114 = vdwg.mxu0
          %1116 = vset.pattern.permute.xlu0 2
          %1117 = vperm.xlu0 %1116, %v999
          %v1118 = vpop.permute.xlu0 %1117
          %1121 = vset.pattern.permute.xlu0 2
          %1122 = vperm.xlu0 %1121, %v1001
          %v1123 = vpop.permute.xlu0 %1122
          %v1125 = vmul.f32 %v1118, %v419
          %v1126 = vmul.f32 %v1123, %v420
          %1129 = vrot.lane.b32.xlu0 %v1107, 64
          %v1130 = vpop.permute.xlu0 %1129
          %1131 = vrot.lane.b32.xlu0 %v1112, 64
          %v1132 = vpop.permute.xlu0 %1131
          %v1135 = vadd.f32 %v1125, %v1130
          %v1136 = vadd.f32 %v1126, %v1132
          %vm1137 = vcmask 23568
          %1138 = vst.msk [vmem:[#allocation2] sm:$0xff] %vm1137, %v994
          %1139 = vst.msk [vmem:[#allocation2 + $0x8] sm:$0xff] %vm1137, %v995
          %1140 = vst.msk [vmem:[#allocation3] sm:$0xff] %vm1137, %v1026
          %1141 = vst.msk [vmem:[#allocation3 + $0x8] sm:$0xff] %vm1137, %v1027
          %1142 = vrot.lane.b32.xlu0 %v409, 32
          %v1143 = vpop.permute.xlu0 %1142
          %1144 = vrot.lane.b32.xlu0 %v410, 32
          %v1145 = vpop.permute.xlu0 %1144
          %1146 = vrot.lane.b32.xlu0 %v411, 32
          %v1147 = vpop.permute.xlu0 %1146
          %1148 = vrot.lane.b32.xlu0 %v412, 32
          %v1149 = vpop.permute.xlu0 %1148
          %v1150 = vsel %vm421, %v1143, 0
          %v1152 = vsel %vm421, %v1145, 0
          %v1154 = vsel %vm421, %v1147, 0
          %v1156 = vsel %vm421, %v1149, 0
          %1158 = vmatprep.subr.mxu0 0.0
          %1159 = vmatpush1.xpose.msra.mxu0 %v1154
          %1160 = vmatprep.subr.mxu0 0.0
          %1161 = vmatpush1.xpose.msra.mxu0 %v1156
          %1162 = vmatprep.subr.mxu0 0.0
          %1163 = vmatpush1.xpose.msra.mxu0 0.0
          %1164 = vmatprep.subr.mxu0 0.0
          %1165 = vmatpush1.xpose.msra.mxu0 0.0
          %1166 = vmatprep.subr.mxu0 0.0
          %1167 = vmatpush1.xpose.msra.mxu0 0.0
          %1168 = vmatprep.subr.mxu0 0.0
          %1169 = vmatpush1.xpose.msra.mxu0 0.0
          %1170 = vmatprep.subr.mxu0 0.0
          %1171 = vmatpush1.xpose.msra.mxu0 0.0
          %1172 = vmatprep.subr.mxu0 0.0
          %1173 = vmatpush1.xpose.msra.mxu0 0.0
          %1174 = vmatprep.subr.mxu0 0.0
          %1175 = vmatpush1.xpose.msra.mxu0 0.0
          %1176 = vmatprep.subr.mxu0 0.0
          %1177 = vmatpush1.xpose.msra.mxu0 0.0
          %1178 = vmatprep.subr.mxu0 0.0
          %1179 = vmatpush1.xpose.msra.mxu0 0.0
          %1180 = vmatprep.subr.mxu0 0.0
          %1181 = vmatpush1.xpose.msra.mxu0 0.0
          %1182 = vmatprep.subr.mxu0 0.0
          %1183 = vmatpush1.xpose.msra.mxu0 0.0
          %1184 = vmatprep.subr.mxu0 0.0
          %1185 = vmatpush1.xpose.msra.mxu0 0.0
          %1186 = vmatprep.subr.mxu0 0.0
          %1187 = vmatpush1.xpose.msra.mxu0 0.0
          %1188 = vmatprep.subr.mxu0 0.0
          %1189 = vmatpush1.xpose.msra.mxu0 0.0
          %1190 = vmatprep.subr.mxu0 0.0
          %1191 = vmatpush1.xpose.msra.mxu0 0.0
          %1192 = vmatprep.subr.mxu0 0.0
          %1193 = vmatpush1.xpose.msra.mxu0 0.0
          %1194 = vmatprep.subr.mxu0 0.0
          %1195 = vmatpush1.xpose.msra.mxu0 0.0
          %1196 = vmatprep.subr.mxu0 0.0
          %1197 = vmatpush1.xpose.msra.mxu0 0.0
          %1198 = vmatprep.subr.mxu0 0.0
          %1199 = vmatpush1.xpose.msra.mxu0 0.0
          %1200 = vmatprep.subr.mxu0 0.0
          %1201 = vmatpush1.xpose.msra.mxu0 0.0
          %1202 = vmatprep.subr.mxu0 0.0
          %1203 = vmatpush1.xpose.msra.mxu0 0.0
          %1204 = vmatprep.subr.mxu0 0.0
          %1205 = vmatpush1.xpose.msra.mxu0 0.0
          %1206 = vmatprep.subr.mxu0 0.0
          %1207 = vmatpush1.xpose.msra.mxu0 0.0
          %1208 = vmatprep.subr.mxu0 0.0
          %1209 = vmatpush1.xpose.msra.mxu0 0.0
          %1210 = vmatprep.subr.mxu0 0.0
          %1211 = vmatpush1.xpose.msra.mxu0 0.0
          %1212 = vmatprep.subr.mxu0 0.0
          %1213 = vmatpush1.xpose.msra.mxu0 0.0
          %1214 = vmatprep.subr.mxu0 0.0
          %1215 = vmatpush1.xpose.msra.mxu0 0.0
          %1216 = vmatprep.subr.mxu0 0.0
          %1217 = vmatpush1.xpose.msra.mxu0 0.0
          %1218 = vmatprep.subr.mxu0 0.0
          %1219 = vmatpush1.xpose.msra.mxu0 0.0
          %1220 = vmatprep.subr.mxu0 0.0
          %1221 = vmatpush1.xpose.msra.mxu0 0.0
          %1222 = vmatprep.mubr.f32.mxu0 0.0
          %1223 = vmatmul.mubr.f32.gmra.mrb[0].mxu0 %v1150
          %v1224 = vpop.f32.mrb[0].mxu0
          %v1225 = vadd.f32 0.0, %v1224
          %v1226 = vpop.f32.mrb[0].mxu0
          %1227 = vmatprep.mubr.f32.mxu0 0.0
          %1228 = vmatmul.mubr.f32.gmra.mrb[0].mxu0 %v1152
          %v1229 = vpop.f32.mrb[0].mxu0
          %v1230 = vadd.f32 0.0, %v1229
          %v1231 = vpop.f32.mrb[0].mxu0
          %1232 = vdwg.mxu0
          %v1233 = vsel %vm509, %v1225, -inf
          %1234 = vmax.xlane.f32.xlu0 %v1233
          %v1235 = vpop.xlane.xlu0 %1234
          %v1236 = vsel %vm509, %v1230, -inf
          %1237 = vmax.xlane.f32.xlu0 %v1236
          %v1238 = vpop.xlane.xlu0 %1237
          %v1239 = vmax.f32 %v415, %v1235
          %v1240 = vmax.f32 %v416, %v1238
          %v1241 = vsub.f32 %v415, %v1239
          %v1242 = vsub.f32 %v416, %v1240
          %v1243 = vmul.f32 %v1241, 1.442695
          %v1244 = vpow.pop %v1243
          %v1245 = vmul.f32 %v1242, 1.442695
          %v1246 = vpow.pop %v1245
          %1248 = vset.pattern.permute.xlu0 3
          %1249 = vperm.xlu0 %1248, %v1239
          %v1250 = vpop.permute.xlu0 %1249
          %1253 = vset.pattern.permute.xlu0 3
          %1254 = vperm.xlu0 %1253, %v1240
          %v1255 = vpop.permute.xlu0 %1254
          %v1257 = vsub.f32 %v1225, %v1250
          %v1258 = vsub.f32 %v1230, %v1255
          %v1259 = vmul.f32 %v1257, 1.442695
          %v1260 = vpow.pop %v1259
          %v1261 = vmul.f32 %v1258, 1.442695
          %v1262 = vpow.pop %v1261
          %v1263 = vmul.f32 %v1244, %v417
          %v1264 = vmul.f32 %v1246, %v418
          %v1265 = vsel %vm509, %v1260, 0.0
          %1266 = vadd.xlane.f32.xlu0 %v1265
          %v1267 = vpop.xlane.xlu0 %1266
          %v1268 = vsel %vm509, %v1262, 0.0
          %1269 = vadd.xlane.f32.xlu0 %v1268
          %v1270 = vpop.xlane.xlu0 %1269
          %v1271 = vadd.f32 %v1263, %v1267
          %v1272 = vadd.f32 %v1264, %v1270
          %1273 = vrot.lane.b32.xlu0 %v413, 32
          %v1274 = vpop.permute.xlu0 %1273
          %1275 = vrot.lane.b32.xlu0 %v414, 32
          %v1276 = vpop.permute.xlu0 %1275
          %v1280 = vsel %vm509, %v1260, 0
          %v1283 = vsel %vm509, %v1262, 0
          %1285 = vmatprep.subr.mxu0 0.0
          %1286 = vmatpush1.msra.mxu0 %v1274
          %1287 = vmatprep.subr.mxu0 0.0
          %1288 = vmatpush1.msra.mxu0 %v1276
          %1289 = vmatprep.subr.mxu0 0.0
          %1290 = vmatpush1.msra.mxu0 0.0
          %1291 = vmatprep.subr.mxu0 0.0
          %1292 = vmatpush1.msra.mxu0 0.0
          %1293 = vmatprep.subr.mxu0 0.0
          %1294 = vmatpush1.msra.mxu0 0.0
          %1295 = vmatprep.subr.mxu0 0.0
          %1296 = vmatpush1.msra.mxu0 0.0
          %1297 = vmatprep.subr.mxu0 0.0
          %1298 = vmatpush1.msra.mxu0 0.0
          %1299 = vmatprep.subr.mxu0 0.0
          %1300 = vmatpush1.msra.mxu0 0.0
          %1301 = vmatprep.subr.mxu0 0.0
          %1302 = vmatpush1.msra.mxu0 0.0
          %1303 = vmatprep.subr.mxu0 0.0
          %1304 = vmatpush1.msra.mxu0 0.0
          %1305 = vmatprep.subr.mxu0 0.0
          %1306 = vmatpush1.msra.mxu0 0.0
          %1307 = vmatprep.subr.mxu0 0.0
          %1308 = vmatpush1.msra.mxu0 0.0
          %1309 = vmatprep.subr.mxu0 0.0
          %1310 = vmatpush1.msra.mxu0 0.0
          %1311 = vmatprep.subr.mxu0 0.0
          %1312 = vmatpush1.msra.mxu0 0.0
          %1313 = vmatprep.subr.mxu0 0.0
          %1314 = vmatpush1.msra.mxu0 0.0
          %1315 = vmatprep.subr.mxu0 0.0
          %1316 = vmatpush1.msra.mxu0 0.0
          %1317 = vmatprep.subr.mxu0 0.0
          %1318 = vmatpush1.msra.mxu0 0.0
          %1319 = vmatprep.subr.mxu0 0.0
          %1320 = vmatpush1.msra.mxu0 0.0
          %1321 = vmatprep.subr.mxu0 0.0
          %1322 = vmatpush1.msra.mxu0 0.0
          %1323 = vmatprep.subr.mxu0 0.0
          %1324 = vmatpush1.msra.mxu0 0.0
          %1325 = vmatprep.subr.mxu0 0.0
          %1326 = vmatpush1.msra.mxu0 0.0
          %1327 = vmatprep.subr.mxu0 0.0
          %1328 = vmatpush1.msra.mxu0 0.0
          %1329 = vmatprep.subr.mxu0 0.0
          %1330 = vmatpush1.msra.mxu0 0.0
          %1331 = vmatprep.subr.mxu0 0.0
          %1332 = vmatpush1.msra.mxu0 0.0
          %1333 = vmatprep.subr.mxu0 0.0
          %1334 = vmatpush1.msra.mxu0 0.0
          %1335 = vmatprep.subr.mxu0 0.0
          %1336 = vmatpush1.msra.mxu0 0.0
          %1337 = vmatprep.subr.mxu0 0.0
          %1338 = vmatpush1.msra.mxu0 0.0
          %1339 = vmatprep.subr.mxu0 0.0
          %1340 = vmatpush1.msra.mxu0 0.0
          %1341 = vmatprep.subr.mxu0 0.0
          %1342 = vmatpush1.msra.mxu0 0.0
          %1343 = vmatprep.subr.mxu0 0.0
          %1344 = vmatpush1.msra.mxu0 0.0
          %1345 = vmatprep.subr.mxu0 0.0
          %1346 = vmatpush1.msra.mxu0 0.0
          %1347 = vmatprep.subr.mxu0 0.0
          %1348 = vmatpush1.msra.mxu0 0.0
          %1349 = vmatprep.mubr.f32.mxu0 0.0
          %1350 = vmatmul.mubr.f32.gmra.mrb[0].mxu0 %v1280
          %v1351 = vpop.f32.mrb[0].mxu0
          %v1352 = vadd.f32 0.0, %v1351
          %v1353 = vpop.f32.mrb[0].mxu0
          %1354 = vmatprep.mubr.f32.mxu0 0.0
          %1355 = vmatmul.mubr.f32.gmra.mrb[0].mxu0 %v1283
          %v1356 = vpop.f32.mrb[0].mxu0
          %v1357 = vadd.f32 0.0, %v1356
          %v1358 = vpop.f32.mrb[0].mxu0
          %1359 = vdwg.mxu0
          %1361 = vset.pattern.permute.xlu0 3
          %1362 = vperm.xlu0 %1361, %v1244
          %v1363 = vpop.permute.xlu0 %1362
          %1366 = vset.pattern.permute.xlu0 3
          %1367 = vperm.xlu0 %1366, %v1246
          %v1368 = vpop.permute.xlu0 %1367
          %v1370 = vmul.f32 %v1363, %v419
          %v1371 = vmul.f32 %v1368, %v420
          %1374 = vrot.lane.b32.xlu0 %v1352, 96
          %v1375 = vpop.permute.xlu0 %1374
          %1376 = vrot.lane.b32.xlu0 %v1357, 96
          %v1377 = vpop.permute.xlu0 %1376
          %v1380 = vadd.f32 %v1370, %v1375
          %v1381 = vadd.f32 %v1371, %v1377
          %vm1382 = vcmask 31768
          %1383 = vst.msk [vmem:[#allocation2] sm:$0xff] %vm1382, %v1239
          %1384 = vst.msk [vmem:[#allocation2 + $0x8] sm:$0xff] %vm1382, %v1240
          %1385 = vst.msk [vmem:[#allocation3] sm:$0xff] %vm1382, %v1271
          %1386 = vst.msk [vmem:[#allocation3 + $0x8] sm:$0xff] %vm1382, %v1272
          %v1387 = vsel %vm421, %v643, %v890
          %v1388 = vsel %vm421, %v644, %v891
          %vm1389 = vcmask 523264
          %v1390 = vsel %vm1389, %v1387, %v1135
          %v1391 = vsel %vm1389, %v1388, %v1136
          %vm1392 = vcmask 785408
          %v1393 = vsel %vm1392, %v1390, %v1380
          %v1394 = vsel %vm1392, %v1391, %v1381
          %1395 = vst [vmem:[#allocation4] sm:$0xff] %v1393
          %1396 = vst [vmem:[#allocation4 + $0x8] sm:$0xff] %v1394
        $region154: #{causal_self_attention.4} parent=133 // pred_fallthru
          _
        %p1397 = scmp.eq.s32.totalorder %s21, %s20
        // Predicated region
        $region155: #{causal_self_attention.4} parent=133 // pred_check
          %p1398 = pneg %p1397
        $region156: #{causal_self_attention.4} parent=133 // pred_check_branch
          %1400 = sbr.rel (%p1398) target = $region158
        $region157: #{causal_self_attention.4} parent=133 // pred_region
          %v1401 = vld [vmem:[%s330] sm:$0xff]
          %v1402 = vld [vmem:[%s330 + $0x8] sm:$0xff]
          %v1403 = vld [vmem:[%s337] sm:$0xff]
          %v1404 = vld [vmem:[%s337 + $0x8] sm:$0xff]
          %v1405 = vld [vmem:[%s344] sm:$0xff]
          %v1406 = vld [vmem:[%s344 + $0x8] sm:$0xff]
          %v1407 = vld [vmem:[#allocation2] sm:$0xff]
          %v1408 = vld [vmem:[#allocation2 + $0x8] sm:$0xff]
          %v1409 = vld [vmem:[#allocation3] sm:$0xff]
          %v1410 = vld [vmem:[#allocation3 + $0x8] sm:$0xff]
          %v1411 = vld [vmem:[#allocation4] sm:$0xff]
          %v1412 = vld [vmem:[#allocation4 + $0x8] sm:$0xff]
          %v1413 = vlaneseq
          %v1414 = vshrl.u32 %v1413, 7
          %v1415 = vadd.s32 %v1414, 8
          %v1416 = vlaneseq
          %v1417 = vand.u32 %v1416, 127
          %vm1418 = vcmp.le.s32.totalorder %v1417, %v1414
          %vm1419 = vcmp.le.s32.totalorder %v1417, %v1415
          %vm1420 = vcmask 261120
          %v1422 = vsel %vm1420, %v1401, 0
          %v1425 = vsel %vm1420, %v1402, 0
          %v1428 = vsel %vm1420, %v1403, 0
          %v1431 = vsel %vm1420, %v1404, 0
          %1433 = vmatprep.subr.mxu0 0.0
          %1434 = vmatpush1.xpose.msra.mxu0 %v1428
          %1435 = vmatprep.subr.mxu0 0.0
          %1436 = vmatpush1.xpose.msra.mxu0 %v1431
          %1437 = vmatprep.subr.mxu0 0.0
          %1438 = vmatpush1.xpose.msra.mxu0 0.0
          %1439 = vmatprep.subr.mxu0 0.0
          %1440 = vmatpush1.xpose.msra.mxu0 0.0
          %1441 = vmatprep.subr.mxu0 0.0
          %1442 = vmatpush1.xpose.msra.mxu0 0.0
          %1443 = vmatprep.subr.mxu0 0.0
          %1444 = vmatpush1.xpose.msra.mxu0 0.0
          %1445 = vmatprep.subr.mxu0 0.0
          %1446 = vmatpush1.xpose.msra.mxu0 0.0
          %1447 = vmatprep.subr.mxu0 0.0
          %1448 = vmatpush1.xpose.msra.mxu0 0.0
          %1449 = vmatprep.subr.mxu0 0.0
          %1450 = vmatpush1.xpose.msra.mxu0 0.0
          %1451 = vmatprep.subr.mxu0 0.0
          %1452 = vmatpush1.xpose.msra.mxu0 0.0
          %1453 = vmatprep.subr.mxu0 0.0
          %1454 = vmatpush1.xpose.msra.mxu0 0.0
          %1455 = vmatprep.subr.mxu0 0.0
          %1456 = vmatpush1.xpose.msra.mxu0 0.0
          %1457 = vmatprep.subr.mxu0 0.0
          %1458 = vmatpush1.xpose.msra.mxu0 0.0
          %1459 = vmatprep.subr.mxu0 0.0
          %1460 = vmatpush1.xpose.msra.mxu0 0.0
          %1461 = vmatprep.subr.mxu0 0.0
          %1462 = vmatpush1.xpose.msra.mxu0 0.0
          %1463 = vmatprep.subr.mxu0 0.0
          %1464 = vmatpush1.xpose.msra.mxu0 0.0
          %1465 = vmatprep.subr.mxu0 0.0
          %1466 = vmatpush1.xpose.msra.mxu0 0.0
          %1467 = vmatprep.subr.mxu0 0.0
          %1468 = vmatpush1.xpose.msra.mxu0 0.0
          %1469 = vmatprep.subr.mxu0 0.0
          %1470 = vmatpush1.xpose.msra.mxu0 0.0
          %1471 = vmatprep.subr.mxu0 0.0
          %1472 = vmatpush1.xpose.msra.mxu0 0.0
          %1473 = vmatprep.subr.mxu0 0.0
          %1474 = vmatpush1.xpose.msra.mxu0 0.0
          %1475 = vmatprep.subr.mxu0 0.0
          %1476 = vmatpush1.xpose.msra.mxu0 0.0
          %1477 = vmatprep.subr.mxu0 0.0
          %1478 = vmatpush1.xpose.msra.mxu0 0.0
          %1479 = vmatprep.subr.mxu0 0.0
          %1480 = vmatpush1.xpose.msra.mxu0 0.0
          %1481 = vmatprep.subr.mxu0 0.0
          %1482 = vmatpush1.xpose.msra.mxu0 0.0
          %1483 = vmatprep.subr.mxu0 0.0
          %1484 = vmatpush1.xpose.msra.mxu0 0.0
          %1485 = vmatprep.subr.mxu0 0.0
          %1486 = vmatpush1.xpose.msra.mxu0 0.0
          %1487 = vmatprep.subr.mxu0 0.0
          %1488 = vmatpush1.xpose.msra.mxu0 0.0
          %1489 = vmatprep.subr.mxu0 0.0
          %1490 = vmatpush1.xpose.msra.mxu0 0.0
          %1491 = vmatprep.subr.mxu0 0.0
          %1492 = vmatpush1.xpose.msra.mxu0 0.0
          %1493 = vmatprep.subr.mxu0 0.0
          %1494 = vmatpush1.xpose.msra.mxu0 0.0
          %1495 = vmatprep.subr.mxu0 0.0
          %1496 = vmatpush1.xpose.msra.mxu0 0.0
          %1497 = vmatprep.mubr.f32.mxu0 0.0
          %1498 = vmatmul.mubr.f32.gmra.mrb[0].mxu0 %v1422
          %v1499 = vpop.f32.mrb[0].mxu0
          %v1500 = vadd.f32 0.0, %v1499
          %v1501 = vpop.f32.mrb[0].mxu0
          %1502 = vmatprep.mubr.f32.mxu0 0.0
          %1503 = vmatmul.mubr.f32.gmra.mrb[0].mxu0 %v1425
          %v1504 = vpop.f32.mrb[0].mxu0
          %v1505 = vadd.f32 0.0, %v1504
          %v1506 = vpop.f32.mrb[0].mxu0
          %1507 = vdwg.mxu0
          %v1508 = vsel %vm1418, %v1500, -inf
          %v1509 = vsel %vm1419, %v1505, -inf
          %vm1510 = vcmask 130048
          %v1511 = vsel %vm1510, %v1508, -inf
          %1512 = vmax.xlane.f32.xlu0 %v1511
          %v1513 = vpop.xlane.xlu0 %1512
          %v1514 = vsel %vm1510, %v1509, -inf
          %1515 = vmax.xlane.f32.xlu0 %v1514
          %v1516 = vpop.xlane.xlu0 %1515
          %v1517 = vmax.f32 %v1407, %v1513
          %v1518 = vmax.f32 %v1408, %v1516
          %v1519 = vsub.f32 %v1407, %v1517
          %v1520 = vsub.f32 %v1408, %v1518
          %v1521 = vmul.f32 %v1519, 1.442695
          %v1522 = vpow.pop %v1521
          %v1523 = vmul.f32 %v1520, 1.442695
          %v1524 = vpow.pop %v1523
          %1526 = vset.pattern.permute.xlu0 0
          %1527 = vperm.xlu0 %1526, %v1517
          %v1528 = vpop.permute.xlu0 %1527
          %1531 = vset.pattern.permute.xlu0 0
          %1532 = vperm.xlu0 %1531, %v1518
          %v1533 = vpop.permute.xlu0 %1532
          %v1535 = vsub.f32 %v1508, %v1528
          %v1536 = vsub.f32 %v1509, %v1533
          %v1537 = vmul.f32 %v1535, 1.442695
          %v1538 = vpow.pop %v1537
          %v1539 = vmul.f32 %v1536, 1.442695
          %v1540 = vpow.pop %v1539
          %v1541 = vmul.f32 %v1522, %v1409
          %v1542 = vmul.f32 %v1524, %v1410
          %v1543 = vsel %vm1510, %v1538, 0.0
          %1544 = vadd.xlane.f32.xlu0 %v1543
          %v1545 = vpop.xlane.xlu0 %1544
          %v1546 = vsel %vm1510, %v1540, 0.0
          %1547 = vadd.xlane.f32.xlu0 %v1546
          %v1548 = vpop.xlane.xlu0 %1547
          %v1549 = vadd.f32 %v1541, %v1545
          %v1550 = vadd.f32 %v1542, %v1548
          %v1552 = vsel %vm1510, %v1538, 0
          %v1555 = vsel %vm1510, %v1540, 0
          %1557 = vmatprep.subr.mxu0 0.0
          %1558 = vmatpush1.msra.mxu0 %v1405
          %1559 = vmatprep.subr.mxu0 0.0
          %1560 = vmatpush1.msra.mxu0 %v1406
          %1561 = vmatprep.subr.mxu0 0.0
          %1562 = vmatpush1.msra.mxu0 0.0
          %1563 = vmatprep.subr.mxu0 0.0
          %1564 = vmatpush1.msra.mxu0 0.0
          %1565 = vmatprep.subr.mxu0 0.0
          %1566 = vmatpush1.msra.mxu0 0.0
          %1567 = vmatprep.subr.mxu0 0.0
          %1568 = vmatpush1.msra.mxu0 0.0
          %1569 = vmatprep.subr.mxu0 0.0
          %1570 = vmatpush1.msra.mxu0 0.0
          %1571 = vmatprep.subr.mxu0 0.0
          %1572 = vmatpush1.msra.mxu0 0.0
          %1573 = vmatprep.subr.mxu0 0.0
          %1574 = vmatpush1.msra.mxu0 0.0
          %1575 = vmatprep.subr.mxu0 0.0
          %1576 = vmatpush1.msra.mxu0 0.0
          %1577 = vmatprep.subr.mxu0 0.0
          %1578 = vmatpush1.msra.mxu0 0.0
          %1579 = vmatprep.subr.mxu0 0.0
          %1580 = vmatpush1.msra.mxu0 0.0
          %1581 = vmatprep.subr.mxu0 0.0
          %1582 = vmatpush1.msra.mxu0 0.0
          %1583 = vmatprep.subr.mxu0 0.0
          %1584 = vmatpush1.msra.mxu0 0.0
          %1585 = vmatprep.subr.mxu0 0.0
          %1586 = vmatpush1.msra.mxu0 0.0
          %1587 = vmatprep.subr.mxu0 0.0
          %1588 = vmatpush1.msra.mxu0 0.0
          %1589 = vmatprep.subr.mxu0 0.0
          %1590 = vmatpush1.msra.mxu0 0.0
          %1591 = vmatprep.subr.mxu0 0.0
          %1592 = vmatpush1.msra.mxu0 0.0
          %1593 = vmatprep.subr.mxu0 0.0
          %1594 = vmatpush1.msra.mxu0 0.0
          %1595 = vmatprep.subr.mxu0 0.0
          %1596 = vmatpush1.msra.mxu0 0.0
          %1597 = vmatprep.subr.mxu0 0.0
          %1598 = vmatpush1.msra.mxu0 0.0
          %1599 = vmatprep.subr.mxu0 0.0
          %1600 = vmatpush1.msra.mxu0 0.0
          %1601 = vmatprep.subr.mxu0 0.0
          %1602 = vmatpush1.msra.mxu0 0.0
          %1603 = vmatprep.subr.mxu0 0.0
          %1604 = vmatpush1.msra.mxu0 0.0
          %1605 = vmatprep.subr.mxu0 0.0
          %1606 = vmatpush1.msra.mxu0 0.0
          %1607 = vmatprep.subr.mxu0 0.0
          %1608 = vmatpush1.msra.mxu0 0.0
          %1609 = vmatprep.subr.mxu0 0.0
          %1610 = vmatpush1.msra.mxu0 0.0
          %1611 = vmatprep.subr.mxu0 0.0
          %1612 = vmatpush1.msra.mxu0 0.0
          %1613 = vmatprep.subr.mxu0 0.0
          %1614 = vmatpush1.msra.mxu0 0.0
          %1615 = vmatprep.subr.mxu0 0.0
          %1616 = vmatpush1.msra.mxu0 0.0
          %1617 = vmatprep.subr.mxu0 0.0
          %1618 = vmatpush1.msra.mxu0 0.0
          %1619 = vmatprep.subr.mxu0 0.0
          %1620 = vmatpush1.msra.mxu0 0.0
          %1621 = vmatprep.mubr.f32.mxu0 0.0
          %1622 = vmatmul.mubr.f32.gmra.mrb[0].mxu0 %v1552
          %v1623 = vpop.f32.mrb[0].mxu0
          %v1624 = vadd.f32 0.0, %v1623
          %v1625 = vpop.f32.mrb[0].mxu0
          %1626 = vmatprep.mubr.f32.mxu0 0.0
          %1627 = vmatmul.mubr.f32.gmra.mrb[0].mxu0 %v1555
          %v1628 = vpop.f32.mrb[0].mxu0
          %v1629 = vadd.f32 0.0, %v1628
          %v1630 = vpop.f32.mrb[0].mxu0
          %1631 = vdwg.mxu0
          %1633 = vset.pattern.permute.xlu0 0
          %1634 = vperm.xlu0 %1633, %v1522
          %v1635 = vpop.permute.xlu0 %1634
          %1638 = vset.pattern.permute.xlu0 0
          %1639 = vperm.xlu0 %1638, %v1524
          %v1640 = vpop.permute.xlu0 %1639
          %v1642 = vmul.f32 %v1635, %v1411
          %v1643 = vmul.f32 %v1640, %v1412
          %v1644 = vadd.f32 %v1642, %v1624
          %v1645 = vadd.f32 %v1643, %v1629
          %vm1646 = vcmask 7168
          %1647 = vst.msk [vmem:[#allocation2] sm:$0xff] %vm1646, %v1517
          %1648 = vst.msk [vmem:[#allocation2 + $0x8] sm:$0xff] %vm1646, %v1518
          %1649 = vst.msk [vmem:[#allocation3] sm:$0xff] %vm1646, %v1549
          %1650 = vst.msk [vmem:[#allocation3 + $0x8] sm:$0xff] %vm1646, %v1550
          %1651 = vrot.lane.b32.xlu0 %v1401, 96
          %v1652 = vpop.permute.xlu0 %1651
          %1653 = vrot.lane.b32.xlu0 %v1402, 96
          %v1654 = vpop.permute.xlu0 %1653
          %1655 = vrot.lane.b32.xlu0 %v1403, 96
          %v1656 = vpop.permute.xlu0 %1655
          %1657 = vrot.lane.b32.xlu0 %v1404, 96
          %v1658 = vpop.permute.xlu0 %1657
          %v1659 = vsel %vm1420, %v1652, 0
          %v1661 = vsel %vm1420, %v1654, 0
          %v1663 = vsel %vm1420, %v1656, 0
          %v1665 = vsel %vm1420, %v1658, 0
          %1667 = vmatprep.subr.mxu0 0.0
          %1668 = vmatpush1.xpose.msra.mxu0 %v1663
          %1669 = vmatprep.subr.mxu0 0.0
          %1670 = vmatpush1.xpose.msra.mxu0 %v1665
          %1671 = vmatprep.subr.mxu0 0.0
          %1672 = vmatpush1.xpose.msra.mxu0 0.0
          %1673 = vmatprep.subr.mxu0 0.0
          %1674 = vmatpush1.xpose.msra.mxu0 0.0
          %1675 = vmatprep.subr.mxu0 0.0
          %1676 = vmatpush1.xpose.msra.mxu0 0.0
          %1677 = vmatprep.subr.mxu0 0.0
          %1678 = vmatpush1.xpose.msra.mxu0 0.0
          %1679 = vmatprep.subr.mxu0 0.0
          %1680 = vmatpush1.xpose.msra.mxu0 0.0
          %1681 = vmatprep.subr.mxu0 0.0
          %1682 = vmatpush1.xpose.msra.mxu0 0.0
          %1683 = vmatprep.subr.mxu0 0.0
          %1684 = vmatpush1.xpose.msra.mxu0 0.0
          %1685 = vmatprep.subr.mxu0 0.0
          %1686 = vmatpush1.xpose.msra.mxu0 0.0
          %1687 = vmatprep.subr.mxu0 0.0
          %1688 = vmatpush1.xpose.msra.mxu0 0.0
          %1689 = vmatprep.subr.mxu0 0.0
          %1690 = vmatpush1.xpose.msra.mxu0 0.0
          %1691 = vmatprep.subr.mxu0 0.0
          %1692 = vmatpush1.xpose.msra.mxu0 0.0
          %1693 = vmatprep.subr.mxu0 0.0
          %1694 = vmatpush1.xpose.msra.mxu0 0.0
          %1695 = vmatprep.subr.mxu0 0.0
          %1696 = vmatpush1.xpose.msra.mxu0 0.0
          %1697 = vmatprep.subr.mxu0 0.0
          %1698 = vmatpush1.xpose.msra.mxu0 0.0
          %1699 = vmatprep.subr.mxu0 0.0
          %1700 = vmatpush1.xpose.msra.mxu0 0.0
          %1701 = vmatprep.subr.mxu0 0.0
          %1702 = vmatpush1.xpose.msra.mxu0 0.0
          %1703 = vmatprep.subr.mxu0 0.0
          %1704 = vmatpush1.xpose.msra.mxu0 0.0
          %1705 = vmatprep.subr.mxu0 0.0
          %1706 = vmatpush1.xpose.msra.mxu0 0.0
          %1707 = vmatprep.subr.mxu0 0.0
          %1708 = vmatpush1.xpose.msra.mxu0 0.0
          %1709 = vmatprep.subr.mxu0 0.0
          %1710 = vmatpush1.xpose.msra.mxu0 0.0
          %1711 = vmatprep.subr.mxu0 0.0
          %1712 = vmatpush1.xpose.msra.mxu0 0.0
          %1713 = vmatprep.subr.mxu0 0.0
          %1714 = vmatpush1.xpose.msra.mxu0 0.0
          %1715 = vmatprep.subr.mxu0 0.0
          %1716 = vmatpush1.xpose.msra.mxu0 0.0
          %1717 = vmatprep.subr.mxu0 0.0
          %1718 = vmatpush1.xpose.msra.mxu0 0.0
          %1719 = vmatprep.subr.mxu0 0.0
          %1720 = vmatpush1.xpose.msra.mxu0 0.0
          %1721 = vmatprep.subr.mxu0 0.0
          %1722 = vmatpush1.xpose.msra.mxu0 0.0
          %1723 = vmatprep.subr.mxu0 0.0
          %1724 = vmatpush1.xpose.msra.mxu0 0.0
          %1725 = vmatprep.subr.mxu0 0.0
          %1726 = vmatpush1.xpose.msra.mxu0 0.0
          %1727 = vmatprep.subr.mxu0 0.0
          %1728 = vmatpush1.xpose.msra.mxu0 0.0
          %1729 = vmatprep.subr.mxu0 0.0
          %1730 = vmatpush1.xpose.msra.mxu0 0.0
          %1731 = vmatprep.mubr.f32.mxu0 0.0
          %1732 = vmatmul.mubr.f32.gmra.mrb[0].mxu0 %v1659
          %v1733 = vpop.f32.mrb[0].mxu0
          %v1734 = vadd.f32 0.0, %v1733
          %v1735 = vpop.f32.mrb[0].mxu0
          %1736 = vmatprep.mubr.f32.mxu0 0.0
          %1737 = vmatmul.mubr.f32.gmra.mrb[0].mxu0 %v1661
          %v1738 = vpop.f32.mrb[0].mxu0
          %v1739 = vadd.f32 0.0, %v1738
          %v1740 = vpop.f32.mrb[0].mxu0
          %1741 = vdwg.mxu0
          %v1742 = vsel %vm1418, %v1734, -inf
          %v1743 = vsel %vm1419, %v1739, -inf
          %v1744 = vsel %vm1510, %v1742, -inf
          %1745 = vmax.xlane.f32.xlu0 %v1744
          %v1746 = vpop.xlane.xlu0 %1745
          %v1747 = vsel %vm1510, %v1743, -inf
          %1748 = vmax.xlane.f32.xlu0 %v1747
          %v1749 = vpop.xlane.xlu0 %1748
          %v1750 = vmax.f32 %v1407, %v1746
          %v1751 = vmax.f32 %v1408, %v1749
          %v1752 = vsub.f32 %v1407, %v1750
          %v1753 = vsub.f32 %v1408, %v1751
          %v1754 = vmul.f32 %v1752, 1.442695
          %v1755 = vpow.pop %v1754
          %v1756 = vmul.f32 %v1753, 1.442695
          %v1757 = vpow.pop %v1756
          %1759 = vset.pattern.permute.xlu0 1
          %1760 = vperm.xlu0 %1759, %v1750
          %v1761 = vpop.permute.xlu0 %1760
          %1764 = vset.pattern.permute.xlu0 1
          %1765 = vperm.xlu0 %1764, %v1751
          %v1766 = vpop.permute.xlu0 %1765
          %v1768 = vsub.f32 %v1742, %v1761
          %v1769 = vsub.f32 %v1743, %v1766
          %v1770 = vmul.f32 %v1768, 1.442695
          %v1771 = vpow.pop %v1770
          %v1772 = vmul.f32 %v1769, 1.442695
          %v1773 = vpow.pop %v1772
          %v1774 = vmul.f32 %v1755, %v1409
          %v1775 = vmul.f32 %v1757, %v1410
          %v1776 = vsel %vm1510, %v1771, 0.0
          %1777 = vadd.xlane.f32.xlu0 %v1776
          %v1778 = vpop.xlane.xlu0 %1777
          %v1779 = vsel %vm1510, %v1773, 0.0
          %1780 = vadd.xlane.f32.xlu0 %v1779
          %v1781 = vpop.xlane.xlu0 %1780
          %v1782 = vadd.f32 %v1774, %v1778
          %v1783 = vadd.f32 %v1775, %v1781
          %1786 = vrot.lane.b32.xlu0 %v1405, 96
          %v1787 = vpop.permute.xlu0 %1786
          %1788 = vrot.lane.b32.xlu0 %v1406, 96
          %v1789 = vpop.permute.xlu0 %1788
          %v1793 = vsel %vm1510, %v1771, 0
          %v1796 = vsel %vm1510, %v1773, 0
          %1798 = vmatprep.subr.mxu0 0.0
          %1799 = vmatpush1.msra.mxu0 %v1787
          %1800 = vmatprep.subr.mxu0 0.0
          %1801 = vmatpush1.msra.mxu0 %v1789
          %1802 = vmatprep.subr.mxu0 0.0
          %1803 = vmatpush1.msra.mxu0 0.0
          %1804 = vmatprep.subr.mxu0 0.0
          %1805 = vmatpush1.msra.mxu0 0.0
          %1806 = vmatprep.subr.mxu0 0.0
          %1807 = vmatpush1.msra.mxu0 0.0
          %1808 = vmatprep.subr.mxu0 0.0
          %1809 = vmatpush1.msra.mxu0 0.0
          %1810 = vmatprep.subr.mxu0 0.0
          %1811 = vmatpush1.msra.mxu0 0.0
          %1812 = vmatprep.subr.mxu0 0.0
          %1813 = vmatpush1.msra.mxu0 0.0
          %1814 = vmatprep.subr.mxu0 0.0
          %1815 = vmatpush1.msra.mxu0 0.0
          %1816 = vmatprep.subr.mxu0 0.0
          %1817 = vmatpush1.msra.mxu0 0.0
          %1818 = vmatprep.subr.mxu0 0.0
          %1819 = vmatpush1.msra.mxu0 0.0
          %1820 = vmatprep.subr.mxu0 0.0
          %1821 = vmatpush1.msra.mxu0 0.0
          %1822 = vmatprep.subr.mxu0 0.0
          %1823 = vmatpush1.msra.mxu0 0.0
          %1824 = vmatprep.subr.mxu0 0.0
          %1825 = vmatpush1.msra.mxu0 0.0
          %1826 = vmatprep.subr.mxu0 0.0
          %1827 = vmatpush1.msra.mxu0 0.0
          %1828 = vmatprep.subr.mxu0 0.0
          %1829 = vmatpush1.msra.mxu0 0.0
          %1830 = vmatprep.subr.mxu0 0.0
          %1831 = vmatpush1.msra.mxu0 0.0
          %1832 = vmatprep.subr.mxu0 0.0
          %1833 = vmatpush1.msra.mxu0 0.0
          %1834 = vmatprep.subr.mxu0 0.0
          %1835 = vmatpush1.msra.mxu0 0.0
          %1836 = vmatprep.subr.mxu0 0.0
          %1837 = vmatpush1.msra.mxu0 0.0
          %1838 = vmatprep.subr.mxu0 0.0
          %1839 = vmatpush1.msra.mxu0 0.0
          %1840 = vmatprep.subr.mxu0 0.0
          %1841 = vmatpush1.msra.mxu0 0.0
          %1842 = vmatprep.subr.mxu0 0.0
          %1843 = vmatpush1.msra.mxu0 0.0
          %1844 = vmatprep.subr.mxu0 0.0
          %1845 = vmatpush1.msra.mxu0 0.0
          %1846 = vmatprep.subr.mxu0 0.0
          %1847 = vmatpush1.msra.mxu0 0.0
          %1848 = vmatprep.subr.mxu0 0.0
          %1849 = vmatpush1.msra.mxu0 0.0
          %1850 = vmatprep.subr.mxu0 0.0
          %1851 = vmatpush1.msra.mxu0 0.0
          %1852 = vmatprep.subr.mxu0 0.0
          %1853 = vmatpush1.msra.mxu0 0.0
          %1854 = vmatprep.subr.mxu0 0.0
          %1855 = vmatpush1.msra.mxu0 0.0
          %1856 = vmatprep.subr.mxu0 0.0
          %1857 = vmatpush1.msra.mxu0 0.0
          %1858 = vmatprep.subr.mxu0 0.0
          %1859 = vmatpush1.msra.mxu0 0.0
          %1860 = vmatprep.subr.mxu0 0.0
          %1861 = vmatpush1.msra.mxu0 0.0
          %1862 = vmatprep.mubr.f32.mxu0 0.0
          %1863 = vmatmul.mubr.f32.gmra.mrb[0].mxu0 %v1793
          %v1864 = vpop.f32.mrb[0].mxu0
          %v1865 = vadd.f32 0.0, %v1864
          %v1866 = vpop.f32.mrb[0].mxu0
          %1867 = vmatprep.mubr.f32.mxu0 0.0
          %1868 = vmatmul.mubr.f32.gmra.mrb[0].mxu0 %v1796
          %v1869 = vpop.f32.mrb[0].mxu0
          %v1870 = vadd.f32 0.0, %v1869
          %v1871 = vpop.f32.mrb[0].mxu0
          %1872 = vdwg.mxu0
          %1874 = vset.pattern.permute.xlu0 1
          %1875 = vperm.xlu0 %1874, %v1755
          %v1876 = vpop.permute.xlu0 %1875
          %1879 = vset.pattern.permute.xlu0 1
          %1880 = vperm.xlu0 %1879, %v1757
          %v1881 = vpop.permute.xlu0 %1880
          %v1883 = vmul.f32 %v1876, %v1411
          %v1884 = vmul.f32 %v1881, %v1412
          %1887 = vrot.lane.b32.xlu0 %v1865, 32
          %v1888 = vpop.permute.xlu0 %1887
          %1889 = vrot.lane.b32.xlu0 %v1870, 32
          %v1890 = vpop.permute.xlu0 %1889
          %v1893 = vadd.f32 %v1883, %v1888
          %v1894 = vadd.f32 %v1884, %v1890
          %vm1895 = vcmask 15368
          %1896 = vst.msk [vmem:[#allocation2] sm:$0xff] %vm1895, %v1750
          %1897 = vst.msk [vmem:[#allocation2 + $0x8] sm:$0xff] %vm1895, %v1751
          %1898 = vst.msk [vmem:[#allocation3] sm:$0xff] %vm1895, %v1782
          %1899 = vst.msk [vmem:[#allocation3 + $0x8] sm:$0xff] %vm1895, %v1783
          %1900 = vrot.lane.b32.xlu0 %v1401, 64
          %v1901 = vpop.permute.xlu0 %1900
          %1902 = vrot.lane.b32.xlu0 %v1402, 64
          %v1903 = vpop.permute.xlu0 %1902
          %1904 = vrot.lane.b32.xlu0 %v1403, 64
          %v1905 = vpop.permute.xlu0 %1904
          %1906 = vrot.lane.b32.xlu0 %v1404, 64
          %v1907 = vpop.permute.xlu0 %1906
          %v1908 = vsel %vm1420, %v1901, 0
          %v1910 = vsel %vm1420, %v1903, 0
          %v1912 = vsel %vm1420, %v1905, 0
          %v1914 = vsel %vm1420, %v1907, 0
          %1916 = vmatprep.subr.mxu0 0.0
          %1917 = vmatpush1.xpose.msra.mxu0 %v1912
          %1918 = vmatprep.subr.mxu0 0.0
          %1919 = vmatpush1.xpose.msra.mxu0 %v1914
          %1920 = vmatprep.subr.mxu0 0.0
          %1921 = vmatpush1.xpose.msra.mxu0 0.0
          %1922 = vmatprep.subr.mxu0 0.0
          %1923 = vmatpush1.xpose.msra.mxu0 0.0
          %1924 = vmatprep.subr.mxu0 0.0
          %1925 = vmatpush1.xpose.msra.mxu0 0.0
          %1926 = vmatprep.subr.mxu0 0.0
          %1927 = vmatpush1.xpose.msra.mxu0 0.0
          %1928 = vmatprep.subr.mxu0 0.0
          %1929 = vmatpush1.xpose.msra.mxu0 0.0
          %1930 = vmatprep.subr.mxu0 0.0
          %1931 = vmatpush1.xpose.msra.mxu0 0.0
          %1932 = vmatprep.subr.mxu0 0.0
          %1933 = vmatpush1.xpose.msra.mxu0 0.0
          %1934 = vmatprep.subr.mxu0 0.0
          %1935 = vmatpush1.xpose.msra.mxu0 0.0
          %1936 = vmatprep.subr.mxu0 0.0
          %1937 = vmatpush1.xpose.msra.mxu0 0.0
          %1938 = vmatprep.subr.mxu0 0.0
          %1939 = vmatpush1.xpose.msra.mxu0 0.0
          %1940 = vmatprep.subr.mxu0 0.0
          %1941 = vmatpush1.xpose.msra.mxu0 0.0
          %1942 = vmatprep.subr.mxu0 0.0
          %1943 = vmatpush1.xpose.msra.mxu0 0.0
          %1944 = vmatprep.subr.mxu0 0.0
          %1945 = vmatpush1.xpose.msra.mxu0 0.0
          %1946 = vmatprep.subr.mxu0 0.0
          %1947 = vmatpush1.xpose.msra.mxu0 0.0
          %1948 = vmatprep.subr.mxu0 0.0
          %1949 = vmatpush1.xpose.msra.mxu0 0.0
          %1950 = vmatprep.subr.mxu0 0.0
          %1951 = vmatpush1.xpose.msra.mxu0 0.0
          %1952 = vmatprep.subr.mxu0 0.0
          %1953 = vmatpush1.xpose.msra.mxu0 0.0
          %1954 = vmatprep.subr.mxu0 0.0
          %1955 = vmatpush1.xpose.msra.mxu0 0.0
          %1956 = vmatprep.subr.mxu0 0.0
          %1957 = vmatpush1.xpose.msra.mxu0 0.0
          %1958 = vmatprep.subr.mxu0 0.0
          %1959 = vmatpush1.xpose.msra.mxu0 0.0
          %1960 = vmatprep.subr.mxu0 0.0
          %1961 = vmatpush1.xpose.msra.mxu0 0.0
          %1962 = vmatprep.subr.mxu0 0.0
          %1963 = vmatpush1.xpose.msra.mxu0 0.0
          %1964 = vmatprep.subr.mxu0 0.0
          %1965 = vmatpush1.xpose.msra.mxu0 0.0
          %1966 = vmatprep.subr.mxu0 0.0
          %1967 = vmatpush1.xpose.msra.mxu0 0.0
          %1968 = vmatprep.subr.mxu0 0.0
          %1969 = vmatpush1.xpose.msra.mxu0 0.0
          %1970 = vmatprep.subr.mxu0 0.0
          %1971 = vmatpush1.xpose.msra.mxu0 0.0
          %1972 = vmatprep.subr.mxu0 0.0
          %1973 = vmatpush1.xpose.msra.mxu0 0.0
          %1974 = vmatprep.subr.mxu0 0.0
          %1975 = vmatpush1.xpose.msra.mxu0 0.0
          %1976 = vmatprep.subr.mxu0 0.0
          %1977 = vmatpush1.xpose.msra.mxu0 0.0
          %1978 = vmatprep.subr.mxu0 0.0
          %1979 = vmatpush1.xpose.msra.mxu0 0.0
          %1980 = vmatprep.mubr.f32.mxu0 0.0
          %1981 = vmatmul.mubr.f32.gmra.mrb[0].mxu0 %v1908
          %v1982 = vpop.f32.mrb[0].mxu0
          %v1983 = vadd.f32 0.0, %v1982
          %v1984 = vpop.f32.mrb[0].mxu0
          %1985 = vmatprep.mubr.f32.mxu0 0.0
          %1986 = vmatmul.mubr.f32.gmra.mrb[0].mxu0 %v1910
          %v1987 = vpop.f32.mrb[0].mxu0
          %v1988 = vadd.f32 0.0, %v1987
          %v1989 = vpop.f32.mrb[0].mxu0
          %1990 = vdwg.mxu0
          %v1991 = vsel %vm1418, %v1983, -inf
          %v1992 = vsel %vm1419, %v1988, -inf
          %v1993 = vsel %vm1510, %v1991, -inf
          %1994 = vmax.xlane.f32.xlu0 %v1993
          %v1995 = vpop.xlane.xlu0 %1994
          %v1996 = vsel %vm1510, %v1992, -inf
          %1997 = vmax.xlane.f32.xlu0 %v1996
          %v1998 = vpop.xlane.xlu0 %1997
          %v1999 = vmax.f32 %v1407, %v1995
          %v2000 = vmax.f32 %v1408, %v1998
          %v2001 = vsub.f32 %v1407, %v1999
          %v2002 = vsub.f32 %v1408, %v2000
          %v2003 = vmul.f32 %v2001, 1.442695
          %v2004 = vpow.pop %v2003
          %v2005 = vmul.f32 %v2002, 1.442695
          %v2006 = vpow.pop %v2005
          %2008 = vset.pattern.permute.xlu0 2
          %2009 = vperm.xlu0 %2008, %v1999
          %v2010 = vpop.permute.xlu0 %2009
          %2013 = vset.pattern.permute.xlu0 2
          %2014 = vperm.xlu0 %2013, %v2000
          %v2015 = vpop.permute.xlu0 %2014
          %v2017 = vsub.f32 %v1991, %v2010
          %v2018 = vsub.f32 %v1992, %v2015
          %v2019 = vmul.f32 %v2017, 1.442695
          %v2020 = vpow.pop %v2019
          %v2021 = vmul.f32 %v2018, 1.442695
          %v2022 = vpow.pop %v2021
          %v2023 = vmul.f32 %v2004, %v1409
          %v2024 = vmul.f32 %v2006, %v1410
          %v2025 = vsel %vm1510, %v2020, 0.0
          %2026 = vadd.xlane.f32.xlu0 %v2025
          %v2027 = vpop.xlane.xlu0 %2026
          %v2028 = vsel %vm1510, %v2022, 0.0
          %2029 = vadd.xlane.f32.xlu0 %v2028
          %v2030 = vpop.xlane.xlu0 %2029
          %v2031 = vadd.f32 %v2023, %v2027
          %v2032 = vadd.f32 %v2024, %v2030
          %2033 = vrot.lane.b32.xlu0 %v1405, 64
          %v2034 = vpop.permute.xlu0 %2033
          %2035 = vrot.lane.b32.xlu0 %v1406, 64
          %v2036 = vpop.permute.xlu0 %2035
          %v2040 = vsel %vm1510, %v2020, 0
          %v2043 = vsel %vm1510, %v2022, 0
          %2045 = vmatprep.subr.mxu0 0.0
          %2046 = vmatpush1.msra.mxu0 %v2034
          %2047 = vmatprep.subr.mxu0 0.0
          %2048 = vmatpush1.msra.mxu0 %v2036
          %2049 = vmatprep.subr.mxu0 0.0
          %2050 = vmatpush1.msra.mxu0 0.0
          %2051 = vmatprep.subr.mxu0 0.0
          %2052 = vmatpush1.msra.mxu0 0.0
          %2053 = vmatprep.subr.mxu0 0.0
          %2054 = vmatpush1.msra.mxu0 0.0
          %2055 = vmatprep.subr.mxu0 0.0
          %2056 = vmatpush1.msra.mxu0 0.0
          %2057 = vmatprep.subr.mxu0 0.0
          %2058 = vmatpush1.msra.mxu0 0.0
          %2059 = vmatprep.subr.mxu0 0.0
          %2060 = vmatpush1.msra.mxu0 0.0
          %2061 = vmatprep.subr.mxu0 0.0
          %2062 = vmatpush1.msra.mxu0 0.0
          %2063 = vmatprep.subr.mxu0 0.0
          %2064 = vmatpush1.msra.mxu0 0.0
          %2065 = vmatprep.subr.mxu0 0.0
          %2066 = vmatpush1.msra.mxu0 0.0
          %2067 = vmatprep.subr.mxu0 0.0
          %2068 = vmatpush1.msra.mxu0 0.0
          %2069 = vmatprep.subr.mxu0 0.0
          %2070 = vmatpush1.msra.mxu0 0.0
          %2071 = vmatprep.subr.mxu0 0.0
          %2072 = vmatpush1.msra.mxu0 0.0
          %2073 = vmatprep.subr.mxu0 0.0
          %2074 = vmatpush1.msra.mxu0 0.0
          %2075 = vmatprep.subr.mxu0 0.0
          %2076 = vmatpush1.msra.mxu0 0.0
          %2077 = vmatprep.subr.mxu0 0.0
          %2078 = vmatpush1.msra.mxu0 0.0
          %2079 = vmatprep.subr.mxu0 0.0
          %2080 = vmatpush1.msra.mxu0 0.0
          %2081 = vmatprep.subr.mxu0 0.0
          %2082 = vmatpush1.msra.mxu0 0.0
          %2083 = vmatprep.subr.mxu0 0.0
          %2084 = vmatpush1.msra.mxu0 0.0
          %2085 = vmatprep.subr.mxu0 0.0
          %2086 = vmatpush1.msra.mxu0 0.0
          %2087 = vmatprep.subr.mxu0 0.0
          %2088 = vmatpush1.msra.mxu0 0.0
          %2089 = vmatprep.subr.mxu0 0.0
          %2090 = vmatpush1.msra.mxu0 0.0
          %2091 = vmatprep.subr.mxu0 0.0
          %2092 = vmatpush1.msra.mxu0 0.0
          %2093 = vmatprep.subr.mxu0 0.0
          %2094 = vmatpush1.msra.mxu0 0.0
          %2095 = vmatprep.subr.mxu0 0.0
          %2096 = vmatpush1.msra.mxu0 0.0
          %2097 = vmatprep.subr.mxu0 0.0
          %2098 = vmatpush1.msra.mxu0 0.0
          %2099 = vmatprep.subr.mxu0 0.0
          %2100 = vmatpush1.msra.mxu0 0.0
          %2101 = vmatprep.subr.mxu0 0.0
          %2102 = vmatpush1.msra.mxu0 0.0
          %2103 = vmatprep.subr.mxu0 0.0
          %2104 = vmatpush1.msra.mxu0 0.0
          %2105 = vmatprep.subr.mxu0 0.0
          %2106 = vmatpush1.msra.mxu0 0.0
          %2107 = vmatprep.subr.mxu0 0.0
          %2108 = vmatpush1.msra.mxu0 0.0
          %2109 = vmatprep.mubr.f32.mxu0 0.0
          %2110 = vmatmul.mubr.f32.gmra.mrb[0].mxu0 %v2040
          %v2111 = vpop.f32.mrb[0].mxu0
          %v2112 = vadd.f32 0.0, %v2111
          %v2113 = vpop.f32.mrb[0].mxu0
          %2114 = vmatprep.mubr.f32.mxu0 0.0
          %2115 = vmatmul.mubr.f32.gmra.mrb[0].mxu0 %v2043
          %v2116 = vpop.f32.mrb[0].mxu0
          %v2117 = vadd.f32 0.0, %v2116
          %v2118 = vpop.f32.mrb[0].mxu0
          %2119 = vdwg.mxu0
          %2121 = vset.pattern.permute.xlu0 2
          %2122 = vperm.xlu0 %2121, %v2004
          %v2123 = vpop.permute.xlu0 %2122
          %2126 = vset.pattern.permute.xlu0 2
          %2127 = vperm.xlu0 %2126, %v2006
          %v2128 = vpop.permute.xlu0 %2127
          %v2130 = vmul.f32 %v2123, %v1411
          %v2131 = vmul.f32 %v2128, %v1412
          %2134 = vrot.lane.b32.xlu0 %v2112, 64
          %v2135 = vpop.permute.xlu0 %2134
          %2136 = vrot.lane.b32.xlu0 %v2117, 64
          %v2137 = vpop.permute.xlu0 %2136
          %v2140 = vadd.f32 %v2130, %v2135
          %v2141 = vadd.f32 %v2131, %v2137
          %vm2142 = vcmask 23568
          %2143 = vst.msk [vmem:[#allocation2] sm:$0xff] %vm2142, %v1999
          %2144 = vst.msk [vmem:[#allocation2 + $0x8] sm:$0xff] %vm2142, %v2000
          %2145 = vst.msk [vmem:[#allocation3] sm:$0xff] %vm2142, %v2031
          %2146 = vst.msk [vmem:[#allocation3 + $0x8] sm:$0xff] %vm2142, %v2032
          %2147 = vrot.lane.b32.xlu0 %v1401, 32
          %v2148 = vpop.permute.xlu0 %2147
          %2149 = vrot.lane.b32.xlu0 %v1402, 32
          %v2150 = vpop.permute.xlu0 %2149
          %2151 = vrot.lane.b32.xlu0 %v1403, 32
          %v2152 = vpop.permute.xlu0 %2151
          %2153 = vrot.lane.b32.xlu0 %v1404, 32
          %v2154 = vpop.permute.xlu0 %2153
          %v2155 = vsel %vm1420, %v2148, 0
          %v2157 = vsel %vm1420, %v2150, 0
          %v2159 = vsel %vm1420, %v2152, 0
          %v2161 = vsel %vm1420, %v2154, 0
          %2163 = vmatprep.subr.mxu0 0.0
          %2164 = vmatpush1.xpose.msra.mxu0 %v2159
          %2165 = vmatprep.subr.mxu0 0.0
          %2166 = vmatpush1.xpose.msra.mxu0 %v2161
          %2167 = vmatprep.subr.mxu0 0.0
          %2168 = vmatpush1.xpose.msra.mxu0 0.0
          %2169 = vmatprep.subr.mxu0 0.0
          %2170 = vmatpush1.xpose.msra.mxu0 0.0
          %2171 = vmatprep.subr.mxu0 0.0
          %2172 = vmatpush1.xpose.msra.mxu0 0.0
          %2173 = vmatprep.subr.mxu0 0.0
          %2174 = vmatpush1.xpose.msra.mxu0 0.0
          %2175 = vmatprep.subr.mxu0 0.0
          %2176 = vmatpush1.xpose.msra.mxu0 0.0
          %2177 = vmatprep.subr.mxu0 0.0
          %2178 = vmatpush1.xpose.msra.mxu0 0.0
          %2179 = vmatprep.subr.mxu0 0.0
          %2180 = vmatpush1.xpose.msra.mxu0 0.0
          %2181 = vmatprep.subr.mxu0 0.0
          %2182 = vmatpush1.xpose.msra.mxu0 0.0
          %2183 = vmatprep.subr.mxu0 0.0
          %2184 = vmatpush1.xpose.msra.mxu0 0.0
          %2185 = vmatprep.subr.mxu0 0.0
          %2186 = vmatpush1.xpose.msra.mxu0 0.0
          %2187 = vmatprep.subr.mxu0 0.0
          %2188 = vmatpush1.xpose.msra.mxu0 0.0
          %2189 = vmatprep.subr.mxu0 0.0
          %2190 = vmatpush1.xpose.msra.mxu0 0.0
          %2191 = vmatprep.subr.mxu0 0.0
          %2192 = vmatpush1.xpose.msra.mxu0 0.0
          %2193 = vmatprep.subr.mxu0 0.0
          %2194 = vmatpush1.xpose.msra.mxu0 0.0
          %2195 = vmatprep.subr.mxu0 0.0
          %2196 = vmatpush1.xpose.msra.mxu0 0.0
          %2197 = vmatprep.subr.mxu0 0.0
          %2198 = vmatpush1.xpose.msra.mxu0 0.0
          %2199 = vmatprep.subr.mxu0 0.0
          %2200 = vmatpush1.xpose.msra.mxu0 0.0
          %2201 = vmatprep.subr.mxu0 0.0
          %2202 = vmatpush1.xpose.msra.mxu0 0.0
          %2203 = vmatprep.subr.mxu0 0.0
          %2204 = vmatpush1.xpose.msra.mxu0 0.0
          %2205 = vmatprep.subr.mxu0 0.0
          %2206 = vmatpush1.xpose.msra.mxu0 0.0
          %2207 = vmatprep.subr.mxu0 0.0
          %2208 = vmatpush1.xpose.msra.mxu0 0.0
          %2209 = vmatprep.subr.mxu0 0.0
          %2210 = vmatpush1.xpose.msra.mxu0 0.0
          %2211 = vmatprep.subr.mxu0 0.0
          %2212 = vmatpush1.xpose.msra.mxu0 0.0
          %2213 = vmatprep.subr.mxu0 0.0
          %2214 = vmatpush1.xpose.msra.mxu0 0.0
          %2215 = vmatprep.subr.mxu0 0.0
          %2216 = vmatpush1.xpose.msra.mxu0 0.0
          %2217 = vmatprep.subr.mxu0 0.0
          %2218 = vmatpush1.xpose.msra.mxu0 0.0
          %2219 = vmatprep.subr.mxu0 0.0
          %2220 = vmatpush1.xpose.msra.mxu0 0.0
          %2221 = vmatprep.subr.mxu0 0.0
          %2222 = vmatpush1.xpose.msra.mxu0 0.0
          %2223 = vmatprep.subr.mxu0 0.0
          %2224 = vmatpush1.xpose.msra.mxu0 0.0
          %2225 = vmatprep.subr.mxu0 0.0
          %2226 = vmatpush1.xpose.msra.mxu0 0.0
          %2227 = vmatprep.mubr.f32.mxu0 0.0
          %2228 = vmatmul.mubr.f32.gmra.mrb[0].mxu0 %v2155
          %v2229 = vpop.f32.mrb[0].mxu0
          %v2230 = vadd.f32 0.0, %v2229
          %v2231 = vpop.f32.mrb[0].mxu0
          %2232 = vmatprep.mubr.f32.mxu0 0.0
          %2233 = vmatmul.mubr.f32.gmra.mrb[0].mxu0 %v2157
          %v2234 = vpop.f32.mrb[0].mxu0
          %v2235 = vadd.f32 0.0, %v2234
          %v2236 = vpop.f32.mrb[0].mxu0
          %2237 = vdwg.mxu0
          %v2238 = vsel %vm1418, %v2230, -inf
          %v2239 = vsel %vm1419, %v2235, -inf
          %v2240 = vsel %vm1510, %v2238, -inf
          %2241 = vmax.xlane.f32.xlu0 %v2240
          %v2242 = vpop.xlane.xlu0 %2241
          %v2243 = vsel %vm1510, %v2239, -inf
          %2244 = vmax.xlane.f32.xlu0 %v2243
          %v2245 = vpop.xlane.xlu0 %2244
          %v2246 = vmax.f32 %v1407, %v2242
          %v2247 = vmax.f32 %v1408, %v2245
          %v2248 = vsub.f32 %v1407, %v2246
          %v2249 = vsub.f32 %v1408, %v2247
          %v2250 = vmul.f32 %v2248, 1.442695
          %v2251 = vpow.pop %v2250
          %v2252 = vmul.f32 %v2249, 1.442695
          %v2253 = vpow.pop %v2252
          %2255 = vset.pattern.permute.xlu0 3
          %2256 = vperm.xlu0 %2255, %v2246
          %v2257 = vpop.permute.xlu0 %2256
          %2260 = vset.pattern.permute.xlu0 3
          %2261 = vperm.xlu0 %2260, %v2247
          %v2262 = vpop.permute.xlu0 %2261
          %v2264 = vsub.f32 %v2238, %v2257
          %v2265 = vsub.f32 %v2239, %v2262
          %v2266 = vmul.f32 %v2264, 1.442695
          %v2267 = vpow.pop %v2266
          %v2268 = vmul.f32 %v2265, 1.442695
          %v2269 = vpow.pop %v2268
          %v2270 = vmul.f32 %v2251, %v1409
          %v2271 = vmul.f32 %v2253, %v1410
          %v2272 = vsel %vm1510, %v2267, 0.0
          %2273 = vadd.xlane.f32.xlu0 %v2272
          %v2274 = vpop.xlane.xlu0 %2273
          %v2275 = vsel %vm1510, %v2269, 0.0
          %2276 = vadd.xlane.f32.xlu0 %v2275
          %v2277 = vpop.xlane.xlu0 %2276
          %v2278 = vadd.f32 %v2270, %v2274
          %v2279 = vadd.f32 %v2271, %v2277
          %2280 = vrot.lane.b32.xlu0 %v1405, 32
          %v2281 = vpop.permute.xlu0 %2280
          %2282 = vrot.lane.b32.xlu0 %v1406, 32
          %v2283 = vpop.permute.xlu0 %2282
          %v2287 = vsel %vm1510, %v2267, 0
          %v2290 = vsel %vm1510, %v2269, 0
          %2292 = vmatprep.subr.mxu0 0.0
          %2293 = vmatpush1.msra.mxu0 %v2281
          %2294 = vmatprep.subr.mxu0 0.0
          %2295 = vmatpush1.msra.mxu0 %v2283
          %2296 = vmatprep.subr.mxu0 0.0
          %2297 = vmatpush1.msra.mxu0 0.0
          %2298 = vmatprep.subr.mxu0 0.0
          %2299 = vmatpush1.msra.mxu0 0.0
          %2300 = vmatprep.subr.mxu0 0.0
          %2301 = vmatpush1.msra.mxu0 0.0
          %2302 = vmatprep.subr.mxu0 0.0
          %2303 = vmatpush1.msra.mxu0 0.0
          %2304 = vmatprep.subr.mxu0 0.0
          %2305 = vmatpush1.msra.mxu0 0.0
          %2306 = vmatprep.subr.mxu0 0.0
          %2307 = vmatpush1.msra.mxu0 0.0
          %2308 = vmatprep.subr.mxu0 0.0
          %2309 = vmatpush1.msra.mxu0 0.0
          %2310 = vmatprep.subr.mxu0 0.0
          %2311 = vmatpush1.msra.mxu0 0.0
          %2312 = vmatprep.subr.mxu0 0.0
          %2313 = vmatpush1.msra.mxu0 0.0
          %2314 = vmatprep.subr.mxu0 0.0
          %2315 = vmatpush1.msra.mxu0 0.0
          %2316 = vmatprep.subr.mxu0 0.0
          %2317 = vmatpush1.msra.mxu0 0.0
          %2318 = vmatprep.subr.mxu0 0.0
          %2319 = vmatpush1.msra.mxu0 0.0
          %2320 = vmatprep.subr.mxu0 0.0
          %2321 = vmatpush1.msra.mxu0 0.0
          %2322 = vmatprep.subr.mxu0 0.0
          %2323 = vmatpush1.msra.mxu0 0.0
          %2324 = vmatprep.subr.mxu0 0.0
          %2325 = vmatpush1.msra.mxu0 0.0
          %2326 = vmatprep.subr.mxu0 0.0
          %2327 = vmatpush1.msra.mxu0 0.0
          %2328 = vmatprep.subr.mxu0 0.0
          %2329 = vmatpush1.msra.mxu0 0.0
          %2330 = vmatprep.subr.mxu0 0.0
          %2331 = vmatpush1.msra.mxu0 0.0
          %2332 = vmatprep.subr.mxu0 0.0
          %2333 = vmatpush1.msra.mxu0 0.0
          %2334 = vmatprep.subr.mxu0 0.0
          %2335 = vmatpush1.msra.mxu0 0.0
          %2336 = vmatprep.subr.mxu0 0.0
          %2337 = vmatpush1.msra.mxu0 0.0
          %2338 = vmatprep.subr.mxu0 0.0
          %2339 = vmatpush1.msra.mxu0 0.0
          %2340 = vmatprep.subr.mxu0 0.0
          %2341 = vmatpush1.msra.mxu0 0.0
          %2342 = vmatprep.subr.mxu0 0.0
          %2343 = vmatpush1.msra.mxu0 0.0
          %2344 = vmatprep.subr.mxu0 0.0
          %2345 = vmatpush1.msra.mxu0 0.0
          %2346 = vmatprep.subr.mxu0 0.0
          %2347 = vmatpush1.msra.mxu0 0.0
          %2348 = vmatprep.subr.mxu0 0.0
          %2349 = vmatpush1.msra.mxu0 0.0
          %2350 = vmatprep.subr.mxu0 0.0
          %2351 = vmatpush1.msra.mxu0 0.0
          %2352 = vmatprep.subr.mxu0 0.0
          %2353 = vmatpush1.msra.mxu0 0.0
          %2354 = vmatprep.subr.mxu0 0.0
          %2355 = vmatpush1.msra.mxu0 0.0
          %2356 = vmatprep.mubr.f32.mxu0 0.0
          %2357 = vmatmul.mubr.f32.gmra.mrb[0].mxu0 %v2287
          %v2358 = vpop.f32.mrb[0].mxu0
          %v2359 = vadd.f32 0.0, %v2358
          %v2360 = vpop.f32.mrb[0].mxu0
          %2361 = vmatprep.mubr.f32.mxu0 0.0
          %2362 = vmatmul.mubr.f32.gmra.mrb[0].mxu0 %v2290
          %v2363 = vpop.f32.mrb[0].mxu0
          %v2364 = vadd.f32 0.0, %v2363
          %v2365 = vpop.f32.mrb[0].mxu0
          %2366 = vdwg.mxu0
          %2368 = vset.pattern.permute.xlu0 3
          %2369 = vperm.xlu0 %2368, %v2251
          %v2370 = vpop.permute.xlu0 %2369
          %2373 = vset.pattern.permute.xlu0 3
          %2374 = vperm.xlu0 %2373, %v2253
          %v2375 = vpop.permute.xlu0 %2374
          %v2377 = vmul.f32 %v2370, %v1411
          %v2378 = vmul.f32 %v2375, %v1412
          %2381 = vrot.lane.b32.xlu0 %v2359, 96
          %v2382 = vpop.permute.xlu0 %2381
          %2383 = vrot.lane.b32.xlu0 %v2364, 96
          %v2384 = vpop.permute.xlu0 %2383
          %v2387 = vadd.f32 %v2377, %v2382
          %v2388 = vadd.f32 %v2378, %v2384
          %vm2389 = vcmask 31768
          %2390 = vst.msk [vmem:[#allocation2] sm:$0xff] %vm2389, %v2246
          %2391 = vst.msk [vmem:[#allocation2 + $0x8] sm:$0xff] %vm2389, %v2247
          %2392 = vst.msk [vmem:[#allocation3] sm:$0xff] %vm2389, %v2278
          %2393 = vst.msk [vmem:[#allocation3 + $0x8] sm:$0xff] %vm2389, %v2279
          %v2394 = vsel %vm1420, %v1644, %v1893
          %v2395 = vsel %vm1420, %v1645, %v1894
          %vm2396 = vcmask 523264
          %v2397 = vsel %vm2396, %v2394, %v2140
          %v2398 = vsel %vm2396, %v2395, %v2141
          %vm2399 = vcmask 785408
          %v2400 = vsel %vm2399, %v2397, %v2387
          %v2401 = vsel %vm2399, %v2398, %v2388
          %2402 = vst [vmem:[#allocation4] sm:$0xff] %v2400
          %2403 = vst [vmem:[#allocation4 + $0x8] sm:$0xff] %v2401
        $region158: #{causal_self_attention.4} parent=133 // pred_fallthru
          _
        // Predicated region
        $region159: #{causal_self_attention.4} parent=133 // pred_check
          %p2404 = pneg %p394
        $region160: #{causal_self_attention.4} parent=133 // pred_check_branch
          %2406 = sbr.rel (%p2404) target = $region162
        $region161: #{causal_self_attention.4} parent=133 // pred_region
          %v2407 = vld [vmem:[#allocation4] sm:$0xff]
          %v2408 = vld [vmem:[#allocation4 + $0x8] sm:$0xff]
          %v2409 = vld [vmem:[#allocation3] sm:$0xff]
          %v2410 = vld [vmem:[#allocation3 + $0x8] sm:$0xff]
          %v2411 = vrcp.pop %v2409
          %v2412 = vrcp.pop %v2410
          %2414 = vset.pattern.permute.xlu0 0
          %2415 = vperm.xlu0 %2414, %v2411
          %v2416 = vpop.permute.xlu0 %2415
          %2419 = vset.pattern.permute.xlu0 0
          %2420 = vperm.xlu0 %2419, %v2412
          %v2421 = vpop.permute.xlu0 %2420
          %v2423 = vmul.f32 %v2407, %v2416
          %v2424 = vmul.f32 %v2408, %v2421
          %2425 = vset.pattern.permute.xlu0 1
          %2426 = vperm.xlu0 %2425, %v2411
          %v2427 = vpop.permute.xlu0 %2426
          %2429 = vset.pattern.permute.xlu0 1
          %2430 = vperm.xlu0 %2429, %v2412
          %v2431 = vpop.permute.xlu0 %2430
          %v2433 = vmul.f32 %v2407, %v2427
          %v2434 = vmul.f32 %v2408, %v2431
          %2435 = vset.pattern.permute.xlu0 2
          %2436 = vperm.xlu0 %2435, %v2411
          %v2437 = vpop.permute.xlu0 %2436
          %2439 = vset.pattern.permute.xlu0 2
          %2440 = vperm.xlu0 %2439, %v2412
          %v2441 = vpop.permute.xlu0 %2440
          %v2443 = vmul.f32 %v2407, %v2437
          %v2444 = vmul.f32 %v2408, %v2441
          %2445 = vset.pattern.permute.xlu0 3
          %2446 = vperm.xlu0 %2445, %v2411
          %v2447 = vpop.permute.xlu0 %2446
          %2449 = vset.pattern.permute.xlu0 3
          %2450 = vperm.xlu0 %2449, %v2412
          %v2451 = vpop.permute.xlu0 %2450
          %v2453 = vmul.f32 %v2407, %v2447
          %v2454 = vmul.f32 %v2408, %v2451
          %vm2455 = vcmask 261120
          %v2456 = vsel %vm2455, %v2423, %v2433
          %v2457 = vsel %vm2455, %v2424, %v2434
          %vm2458 = vcmask 523264
          %v2459 = vsel %vm2458, %v2456, %v2443
          %v2460 = vsel %vm2458, %v2457, %v2444
          %vm2461 = vcmask 785408
          %v2462 = vsel %vm2461, %v2459, %v2453
          %v2463 = vsel %vm2461, %v2460, %v2454
          %2464 = vst [vmem:[%s392] sm:$0xff] %v2462
          %2465 = vst [vmem:[%s392 + $0x8] sm:$0xff] %v2463
        $region162: #{causal_self_attention.4} parent=133 // pred_fallthru
          _
        %s2466 = smul.u32 2, %s20
        %p2467 = scmp.lt.s32.totalorder %s19, 1
        %s2468 = scalar_select %p2467, %s19, 1
        %p2469 = scmp.lt.s32.totalorder %s2466, 1
        %s2470 = scalar_select %p2469, %s2466, 1
        %s2471 = smul.addr %s2468, 2
        %s2472 = sadd.s32 %s2470, %s2471
        %s2473 = smul.addr %s2472, 8
        %s2474 = scalar_lea.vmem %s3, %s2473
        // Predicated region
        $region163: #{causal_self_attention.4} parent=133 // pred_check
          %p2475 = pneg %p145
        $region164: #{causal_self_attention.4} parent=133 // pred_check_branch
          %2477 = sbr.rel (%p2475) target = $region166
        $region165: #{causal_self_attention.4} parent=133 // pred_region
          %s2478 = smul.u32 2, %s20
        $region166: #{causal_self_attention.4} parent=133 // pred_fallthru
          _
      $region134: #{causal_self_attention.4} parent=5 // pred_fallthru
        _
      %p2479 = scmp.le.s32.totalorder 2, %s9
      // Predicated region
      $region167: #{causal_self_attention.4} parent=5 // pred_check
        %p2480 = pneg %p2479
      $region168: #{causal_self_attention.4} parent=5 // pred_check_branch
        %2482 = sbr.rel (%p2480) target = $region170
      $region169: #{causal_self_attention.4} parent=5 // pred_region
        %s2483 = ssub.s32 %s9, 2
        // Predicated region
        $region171: #{causal_self_attention.4} parent=169 // pred_check
          %p2484 = pneg %p151
        $region172: #{causal_self_attention.4} parent=169 // pred_check_branch
          %2486 = sbr.rel (%p2484) target = $region174
        $region173: #{causal_self_attention.4} parent=169 // pred_region
          %s2487 = smul.u32 2, %s23
          %p2488 = scmp.lt.s32.totalorder %s22, 1
          %s2489 = scalar_select %p2488, %s22, 1
          %p2490 = scmp.lt.s32.totalorder %s2487, 1
          %s2491 = scalar_select %p2490, %s2487, 1
          %s2492 = smul.addr %s2489, 2
          %s2493 = sadd.s32 %s2491, %s2492
          %s2494 = smul.addr %s2493, 8
          %s2495 = scalar_lea.vmem %s3, %s2494
        $region174: #{causal_self_attention.4} parent=169 // pred_fallthru
          _
      $region170: #{causal_self_attention.4} parent=5 // pred_fallthru
        _
    $region6: #{causal_self_attention.4} parent=1 // loop_footer
      %s13 = sadd.s32 1, %s9
    $region7: #{causal_self_attention.4} parent=1 // loop_footer_branch
      %8 = sbr.rel target = $region3
    $region8: #{causal_self_attention.4} parent=1 // loop_exit
      _

</llo_original>
